<compile_context>
chip_gen: v7x
topology: tpu7x:2x2x1
jax: 0.10.0
libtpu: 0.0.40
codegen_flags: <defaults>
</compile_context>

<pallas_src>
import functools
import math

import jax
import jax.numpy as jnp
from jax.experimental import pallas as pl
from jax.experimental.pallas import tpu as pltpu


# ----------------------------- in-kernel helpers ---------------------------- #

_GELU_C = math.sqrt(2.0 / math.pi)


def _gelu(y):
    # BERT tanh-approximation GELU, computed in f32.
    return 0.5 * y * (1.0 + jnp.tanh(_GELU_C * (y + 0.044715 * y * y * y)))


def _layernorm(x, g, b):
    # BERT-pytorch LayerNorm: unbiased std, eps added to std (eps = 1e-6).
    h = x.shape[-1]
    mean = jnp.mean(x, axis=-1, keepdims=True)
    var = jnp.sum((x - mean) ** 2, axis=-1, keepdims=True) / (h - 1)
    std = jnp.sqrt(var)
    return g * (x - mean) / (std + 1e-6) + b


# ------------------------------- fused kernel ------------------------------- #

def _fused_bert_kernel(
        x_ref, bias_ref,
        embw_ref, embb_ref, pe_ref,
        ln1g_ref, ln1b_ref,
        wq_ref, bq_ref, wk_ref, bk_ref, wv_ref, bv_ref, wo_ref, bo_ref,
        ln2g_ref, ln2b_ref,
        w1_ref, b1_ref, w2_ref, b2_ref,
        predw_ref, predb_ref,
        pred_ref,
        h_acc, ctx_acc,
        *, nheads, tb, seq):
    """Grid = (batch_block, layer).  The activation lives in `h_acc` (VMEM
    scratch) across the layer axis; HBM sees only x (once) and pred (once)."""
    l = pl.program_id(1)
    n_layers = pl.num_programs(1)

    # -------- input embedding + positional encoding (first layer step) ------ #
    @pl.when(l == 0)
    def _():
        xb = x_ref[...].astype(jnp.bfloat16)                  # (TB*S, F)
        y = jnp.dot(xb, embw_ref[...], preferred_element_type=jnp.float32)
        h_acc[...] = y + embb_ref[...] + pe_ref[...]

    # --------------------- one pre-LN transformer block --------------------- #
    h = h_acc[...]                                            # (TB*S, H) f32
    hidden = h.shape[-1]
    dh = hidden // nheads
    scale = 1.0 / math.sqrt(dh)

    # multi-head self-attention sublayer
    xn = _layernorm(h, ln1g_ref[0], ln1b_ref[0])
    xb = xn.astype(jnp.bfloat16)
    q = jnp.dot(xb, wq_ref[0], preferred_element_type=jnp.float32) + bq_ref[0]
    k = jnp.dot(xb, wk_ref[0], preferred_element_type=jnp.float32) + bk_ref[0]
    v = jnp.dot(xb, wv_ref[0], preferred_element_type=jnp.float32) + bv_ref[0]

    for bi in range(tb):                                      # static unroll
        rs = slice(bi * seq, (bi + 1) * seq)
        qb, vb = q[rs], v[rs]
        kt = k[rs].T                                          # one (S,H)->(H,S) per batch elem
        bias_b = bias_ref[bi]                                 # (1, S) additive mask
        for hd in range(nheads):                              # static unroll
            cs = slice(hd * dh, (hd + 1) * dh)
            qh = qb[:, cs].astype(jnp.bfloat16)               # (S, Dh)
            kh = kt[cs, :].astype(jnp.bfloat16)               # (Dh, S)
            vh = vb[:, cs].astype(jnp.bfloat16)               # (S, Dh)
            s = jnp.dot(qh, kh, preferred_element_type=jnp.float32) * scale
            s = s + bias_b                                    # (1,S) -> (S,S)
            m = jnp.max(s, axis=-1, keepdims=True)
            p = jnp.exp(s - m)
            p = p * pl.reciprocal(jnp.sum(p, axis=-1, keepdims=True), approx=True)
            ctx_acc[rs, cs] = jnp.dot(p.astype(jnp.bfloat16), vh,
                                      preferred_element_type=jnp.float32)

    # single full-depth (K=H) output projection over the packed rows
    attn = jnp.dot(ctx_acc[...].astype(jnp.bfloat16), wo_ref[0],
                   preferred_element_type=jnp.float32) + bo_ref[0]
    h = h + attn                                              # residual (f32)

    # feed-forward sublayer
    xn = _layernorm(h, ln2g_ref[0], ln2b_ref[0])
    y = jnp.dot(xn.astype(jnp.bfloat16), w1_ref[0],
                preferred_element_type=jnp.float32) + b1_ref[0]
    y = _gelu(y)                                              # f32 epilogue
    y = jnp.dot(y.astype(jnp.bfloat16), w2_ref[0],
                preferred_element_type=jnp.float32) + b2_ref[0]
    h = h + y                                                 # residual (f32)
    h_acc[...] = h

    # ------------------- prediction head (last layer step) ------------------ #
    @pl.when(l == n_layers - 1)
    def _():
        hb = h.astype(jnp.bfloat16)
        pred_ref[...] = (jnp.dot(hb, predw_ref[...],
                                 preferred_element_type=jnp.float32)
                         + predb_ref[...])


# ------------------------------ kernel wrapper ------------------------------ #

def tvtsbert_prediction_forward(prep, x, mask, *, nheads, tb):
    """x: (B, S, feature_num) f32, mask: (B, S) in {0,1}.
    Returns (B, S*word_len, 1) matching flatten(start_dim=1).unsqueeze(-1)."""
    B, S, F = x.shape
    H = prep["emb_w"].shape[1]
    FF = prep["w1"].shape[2]
    WL = prep["pred_w"].shape[1]
    L = prep["wq"].shape[0]
    assert H % nheads == 0 and B % tb == 0
    nb = B // tb
    row_block = tb * S

    # flatten batch*seq once in the wrapper (no in-kernel reshapes needed)
    x2 = x.reshape(B * S, F)
    # additive attention bias: 0 where attended, -1e9 where the key is masked
    bias = (-1e9 * (1.0 - mask.astype(jnp.float32))).reshape(B, 1, S)

    def cmat(r, c):                       # constant (non-layer) 2-D operand
        return pl.BlockSpec((r, c), lambda b, l: (0, 0))

    def lmat(r, c):                       # per-layer stacked (L, r, c) weight
        return pl.BlockSpec((1, r, c), lambda b, l: (l, 0, 0))

    def lvec(n):                          # per-layer stacked (L, 1, n) vector
        return pl.BlockSpec((1, 1, n), lambda b, l: (l, 0, 0))

    kern = functools.partial(_fused_bert_kernel, nheads=nheads, tb=tb, seq=S)

    pred = pl.pallas_call(
        kern,
        out_shape=jax.ShapeDtypeStruct((B * S, WL), jnp.float32),
        grid_spec=pltpu.PrefetchScalarGridSpec(
            num_scalar_prefetch=0,
            grid=(nb, L),
            in_specs=[
                pl.BlockSpec((row_block, F), lambda b, l: (b, 0)),      # x
                pl.BlockSpec((tb, 1, S), lambda b, l: (b, 0, 0)),       # attn bias
                cmat(F, H), cmat(1, H), cmat(row_block, H),             # emb_w, emb_b, pe
                lvec(H), lvec(H),                                       # ln1 gamma/beta
                lmat(H, H), lvec(H),                                    # wq, bq
                lmat(H, H), lvec(H),                                    # wk, bk
                lmat(H, H), lvec(H),                                    # wv, bv
                lmat(H, H), lvec(H),                                    # wo, bo
                lvec(H), lvec(H),                                       # ln2 gamma/beta
                lmat(H, FF), lvec(FF),                                  # w1, b1
                lmat(FF, H), lvec(H),                                   # w2, b2
                cmat(H, WL), cmat(1, WL),                               # pred_w, pred_b
            ],
            out_specs=pl.BlockSpec((row_block, WL), lambda b, l: (b, 0)),
            scratch_shapes=[
                pltpu.VMEM((row_block, H), jnp.float32),   # activation carry
                pltpu.VMEM((row_block, H), jnp.float32),   # per-head context
            ],
        ),
        compiler_params=pltpu.CompilerParams(
            dimension_semantics=("parallel", "arbitrary"),
            vmem_limit_bytes=64 * 1024 * 1024),
    )(x2, bias,
      prep["emb_w"], prep["emb_b"], prep["pe"],
      prep["ln1_g"], prep["ln1_b"],
      prep["wq"], prep["bq"], prep["wk"], prep["bk"], prep["wv"], prep["bv"],
      prep["wo"], prep["bo"],
      prep["ln2_g"], prep["ln2_b"],
      prep["w1"], prep["b1"], prep["w2"], prep["b2"],
      prep["pred_w"], prep["pred_b"])

    # torch.flatten(x, start_dim=1).unsqueeze(-1): (B*S, WL) is already the
    # contiguous (B, S*WL) layout.
    return pred.reshape(B, S * WL, 1)


# ------------------------------ model (glue) -------------------------------- #

def sinusoidal_pe(seq_len, hidden):
    pos = jnp.arange(seq_len, dtype=jnp.float32)[:, None]
    i = jnp.arange(0, hidden, 2, dtype=jnp.float32)
    div = jnp.exp(-jnp.log(10000.0) * i / hidden)
    pe = jnp.zeros((seq_len, hidden), jnp.float32)
    pe = pe.at[:, 0::2].set(jnp.sin(pos * div))
    pe = pe.at[:, 1::2].set(jnp.cos(pos * div))
    return pe


def init_params(key, *, feature_num, hidden, n_layers, heads, word_len, max_len):
    ff = 4 * hidden

    def dense(k, fan_in, fan_out):
        return (0.02 * jax.random.normal(k, (fan_in, fan_out), jnp.float32),
                jnp.zeros((fan_out,), jnp.float32))

    keys = jax.random.split(key, 2 + 8 * n_layers)
    it = iter(keys)
    params = {
        "hidden": hidden, "heads": heads, "word_len": word_len,
        "pe": sinusoidal_pe(max_len, hidden),
    }
    params["emb_w"], params["emb_b"] = dense(next(it), feature_num, hidden)
    layers = []
    for _ in range(n_layers):
        layer = {}
        layer["ln1_g"] = jnp.ones((hidden,), jnp.float32)
        layer["ln1_b"] = jnp.zeros((hidden,), jnp.float32)
        layer["wq"], layer["bq"] = dense(next(it), hidden, hidden)
        layer["wk"], layer["bk"] = dense(next(it), hidden, hidden)
        layer["wv"], layer["bv"] = dense(next(it), hidden, hidden)
        layer["wo"], layer["bo"] = dense(next(it), hidden, hidden)
        layer["ln2_g"] = jnp.ones((hidden,), jnp.float32)
        layer["ln2_b"] = jnp.zeros((hidden,), jnp.float32)
        layer["w1"], layer["b1"] = dense(next(it), hidden, ff)
        layer["w2"], layer["b2"] = dense(next(it), ff, hidden)
        layers.append(layer)
    params["layers"] = layers
    params["pred_w"], params["pred_b"] = dense(next(it), hidden, word_len)
    return params


def prepare_params(params, *, seq_len, tb):
    """One-time preparation: cast MXU weights to bf16, stack per-layer tensors
    along a leading L axis, and pre-tile the positional encoding to the packed
    row block.  f32 masters stay in `params`."""
    f32 = jnp.float32
    layers = params["layers"]

    def vec(a):
        return a.reshape(1, -1).astype(f32)

    def stack_mat(name):            # (L, r, c) bf16 MXU operand
        return jnp.stack([lyr[name] for lyr in layers]).astype(jnp.bfloat16)

    def stack_vec(name):            # (L, 1, n) f32 bias / LN vector
        return jnp.stack([lyr[name].reshape(1, -1) for lyr in layers]).astype(f32)

    pe = params["pe"][:seq_len]
    prep = {
        "emb_w": params["emb_w"].astype(jnp.bfloat16),
        "emb_b": vec(params["emb_b"]),
        "pe": jnp.tile(pe, (tb, 1)).astype(f32),          # (TB*S, H)
        "pred_w": params["pred_w"].astype(jnp.bfloat16),
        "pred_b": vec(params["pred_b"]),
    }
    for n in ("wq", "wk", "wv", "wo", "w1", "w2"):
        prep[n] = stack_mat(n)
    for n in ("bq", "bk", "bv", "bo", "b1", "b2",
              "ln1_g", "ln1_b", "ln2_g", "ln2_b"):
        prep[n] = stack_vec(n)
    return prep


def _pick_tb(batch, seq):
    """Pack batch rows per grid step (feed the MXU), keep >=2 batch blocks when
    possible (v7x has 2 TensorCores on the parallel axis), and keep the packed
    row block a multiple of 8 sublanes."""
    limit = batch if batch < 2 else batch // 2
    best = 1
    for tb in range(1, max(limit, 1) + 1):
        rows = tb * seq
        if batch % tb == 0 and rows % 8 == 0 and rows <= 512:
            best = tb
    return best


# ---------------------------------- main ------------------------------------ #

if __name__ == "__main__":
    B, S, F = 2, 8, 4            # batch, seq len, input features (word_len == F)
    HIDDEN, LAYERS, HEADS = 32, 2, 2
    WORD_LEN = F

    key = jax.random.PRNGKey(0)
    k_param, k_x = jax.random.split(key)
    params = init_params(k_param, feature_num=F, hidden=HIDDEN,
                         n_layers=LAYERS, heads=HEADS,
                         word_len=WORD_LEN, max_len=64)

    TB = _pick_tb(B, S)
    prep = prepare_params(params, seq_len=S, tb=TB)

    x = jax.random.normal(k_x, (B, S, F), jnp.float32)
    mask = jnp.ones((B, S), jnp.int32).at[:, -2:].set(0)   # mask last 2 steps

    fwd = jax.jit(functools.partial(tvtsbert_prediction_forward,
                                    nheads=HEADS, tb=TB))
    out = fwd(prep, x, mask)
    jax.block_until_ready(out)
    assert out.shape == (B, S * WORD_LEN, 1)
    assert bool(jnp.all(jnp.isfinite(out)))
    print("KERNEL_OK")
</pallas_src>

<mosaic_0001>
module attributes {stable_mosaic.version = 11 : i64} {
  func.func @_fused_bert_kernel(%arg0: i32, %arg1: i32, %arg2: memref<8x4xf32, #tpu.memory_space<vmem>>, %arg3: memref<1x1x8xf32, #tpu.memory_space<vmem>>, %arg4: memref<4x32xbf16, #tpu.memory_space<vmem>>, %arg5: memref<1x32xf32, #tpu.memory_space<vmem>>, %arg6: memref<8x32xf32, #tpu.memory_space<vmem>>, %arg7: memref<1x1x32xf32, #tpu.memory_space<vmem>>, %arg8: memref<1x1x32xf32, #tpu.memory_space<vmem>>, %arg9: memref<1x32x32xbf16, #tpu.memory_space<vmem>>, %arg10: memref<1x1x32xf32, #tpu.memory_space<vmem>>, %arg11: memref<1x32x32xbf16, #tpu.memory_space<vmem>>, %arg12: memref<1x1x32xf32, #tpu.memory_space<vmem>>, %arg13: memref<1x32x32xbf16, #tpu.memory_space<vmem>>, %arg14: memref<1x1x32xf32, #tpu.memory_space<vmem>>, %arg15: memref<1x32x32xbf16, #tpu.memory_space<vmem>>, %arg16: memref<1x1x32xf32, #tpu.memory_space<vmem>>, %arg17: memref<1x1x32xf32, #tpu.memory_space<vmem>>, %arg18: memref<1x1x32xf32, #tpu.memory_space<vmem>>, %arg19: memref<1x32x128xbf16, #tpu.memory_space<vmem>>, %arg20: memref<1x1x128xf32, #tpu.memory_space<vmem>>, %arg21: memref<1x128x32xbf16, #tpu.memory_space<vmem>>, %arg22: memref<1x1x32xf32, #tpu.memory_space<vmem>>, %arg23: memref<32x4xbf16, #tpu.memory_space<vmem>>, %arg24: memref<1x4xf32, #tpu.memory_space<vmem>>, %arg25: memref<8x4xf32, #tpu.memory_space<vmem>>, %arg26: memref<8x32xf32, #tpu.memory_space<vmem>>, %arg27: memref<8x32xf32, #tpu.memory_space<vmem>>) attributes {dimension_semantics = [#tpu.dimension_semantics<parallel>, #tpu.dimension_semantics<arbitrary>], iteration_bounds = array<i64: 2, 2>, scalar_prefetch = 0 : i64, scratch_operands = 2 : i64, tpu.core_type = #tpu.core_type<tc>, window_params = [{transform_indices = @transform_0, window_bounds = array<i64: 8, 4>}, {transform_indices = @transform_1, window_bounds = array<i64: 1, 1, 8>}, {pipeline_mode = #tpu.pipeline_mode<synchronous>, transform_indices = @transform_2, window_bounds = array<i64: 4, 32>}, {pipeline_mode = #tpu.pipeline_mode<synchronous>, transform_indices = @transform_3, window_bounds = array<i64: 1, 32>}, {pipeline_mode = #tpu.pipeline_mode<synchronous>, transform_indices = @transform_4, window_bounds = array<i64: 8, 32>}, {transform_indices = @transform_5, window_bounds = array<i64: 1, 1, 32>}, {transform_indices = @transform_6, window_bounds = array<i64: 1, 1, 32>}, {transform_indices = @transform_7, window_bounds = array<i64: 1, 32, 32>}, {transform_indices = @transform_8, window_bounds = array<i64: 1, 1, 32>}, {transform_indices = @transform_9, window_bounds = array<i64: 1, 32, 32>}, {transform_indices = @transform_10, window_bounds = array<i64: 1, 1, 32>}, {transform_indices = @transform_11, window_bounds = array<i64: 1, 32, 32>}, {transform_indices = @transform_12, window_bounds = array<i64: 1, 1, 32>}, {transform_indices = @transform_13, window_bounds = array<i64: 1, 32, 32>}, {transform_indices = @transform_14, window_bounds = array<i64: 1, 1, 32>}, {transform_indices = @transform_15, window_bounds = array<i64: 1, 1, 32>}, {transform_indices = @transform_16, window_bounds = array<i64: 1, 1, 32>}, {transform_indices = @transform_17, window_bounds = array<i64: 1, 32, 128>}, {transform_indices = @transform_18, window_bounds = array<i64: 1, 1, 128>}, {transform_indices = @transform_19, window_bounds = array<i64: 1, 128, 32>}, {transform_indices = @transform_20, window_bounds = array<i64: 1, 1, 32>}, {pipeline_mode = #tpu.pipeline_mode<synchronous>, transform_indices = @transform_21, window_bounds = array<i64: 32, 4>}, {pipeline_mode = #tpu.pipeline_mode<synchronous>, transform_indices = @transform_22, window_bounds = array<i64: 1, 4>}, {transform_indices = @transform_23, window_bounds = array<i64: 8, 4>}]} {
    %c0_i32 = arith.constant 0 : i32
    %0 = arith.cmpi eq, %arg1, %c0_i32 : i32
    %1 = arith.extui %0 : i1 to i32
    %c0_i32_0 = arith.constant 0 : i32
    %2 = arith.cmpi ne, %1, %c0_i32_0 : i32
    scf.if %2 {
      %c0_90 = arith.constant 0 : index
      %c0_91 = arith.constant 0 : index
      %173 = vector.load %arg2[%c0_90, %c0_91] : memref<8x4xf32, #tpu.memory_space<vmem>>, vector<8x4xf32>
      %174 = arith.truncf %173 : vector<8x4xf32> to vector<8x4xbf16>
      %c0_92 = arith.constant 0 : index
      %c0_93 = arith.constant 0 : index
      %175 = vector.load %arg4[%c0_92, %c0_93] : memref<4x32xbf16, #tpu.memory_space<vmem>>, vector<4x32xbf16>
      %cst_94 = arith.constant dense<0.000000e+00> : vector<8x32xf32>
      %176 = tpu.matmul %174, %175, %cst_94 {dimension_numbers = #tpu.dot_dimension_numbers<[1], [0], [0], [1], [0, 0, 1, 1], [], []>} : vector<8x4xbf16>, vector<4x32xbf16>, vector<8x32xf32> -> vector<8x32xf32>
      %c0_95 = arith.constant 0 : index
      %c0_96 = arith.constant 0 : index
      %177 = vector.load %arg5[%c0_95, %c0_96] : memref<1x32xf32, #tpu.memory_space<vmem>>, vector<1x32xf32>
      %178 = vector.broadcast %177 : vector<1x32xf32> to vector<8x32xf32>
      %179 = arith.addf %176, %178 : vector<8x32xf32>
      %c0_97 = arith.constant 0 : index
      %c0_98 = arith.constant 0 : index
      %180 = vector.load %arg6[%c0_97, %c0_98] : memref<8x32xf32, #tpu.memory_space<vmem>>, vector<8x32xf32>
      %181 = arith.addf %179, %180 : vector<8x32xf32>
      %c0_99 = arith.constant 0 : index
      %c0_100 = arith.constant 0 : index
      %182 = vector.load %arg26[%c0_99, %c0_100] : memref<8x32xf32, #tpu.memory_space<vmem>>, vector<8x32xf32>
      tpu.vector_store %arg26[%c0_99, %c0_100], %181 {strides = array<i32>} : memref<8x32xf32, #tpu.memory_space<vmem>>, vector<8x32xf32>,
    } else {
    }
    %c0 = arith.constant 0 : index
    %c0_1 = arith.constant 0 : index
    %3 = vector.load %arg26[%c0, %c0_1] : memref<8x32xf32, #tpu.memory_space<vmem>>, vector<8x32xf32>
    %c0_2 = arith.constant 0 : index
    %c0_3 = arith.constant 0 : index
    %c0_4 = arith.constant 0 : index
    %4 = vector.load %arg7[%c0_2, %c0_3, %c0_4] : memref<1x1x32xf32, #tpu.memory_space<vmem>>, vector<1x1x32xf32>
    %5 = vector.shape_cast %4 : vector<1x1x32xf32> to vector<1x32xf32>
    %c0_5 = arith.constant 0 : index
    %c0_6 = arith.constant 0 : index
    %c0_7 = arith.constant 0 : index
    %6 = vector.load %arg8[%c0_5, %c0_6, %c0_7] : memref<1x1x32xf32, #tpu.memory_space<vmem>>, vector<1x1x32xf32>
    %7 = vector.shape_cast %6 : vector<1x1x32xf32> to vector<1x32xf32>
    %cst = arith.constant dense<0.000000e+00> : vector<8xf32>
    %8 = vector.multi_reduction <add>, %3, %cst [1] : vector<8x32xf32> to vector<8xf32>
    %9 = vector.shape_cast %8 : vector<8xf32> to vector<8x1xf32>
    %cst_8 = arith.constant 3.200000e+01 : f32
    %10 = vector.broadcast %cst_8 : f32 to vector<8x1xf32>
    %11 = arith.divf %9, %10 : vector<8x1xf32>
    %12 = vector.broadcast %11 : vector<8x1xf32> to vector<8x32xf32>
    %13 = arith.subf %3, %12 : vector<8x32xf32>
    %14 = arith.mulf %13, %13 : vector<8x32xf32>
    %cst_9 = arith.constant dense<0.000000e+00> : vector<8xf32>
    %15 = vector.multi_reduction <add>, %14, %cst_9 [1] : vector<8x32xf32> to vector<8xf32>
    %16 = vector.shape_cast %15 : vector<8xf32> to vector<8x1xf32>
    %cst_10 = arith.constant 3.100000e+01 : f32
    %17 = vector.broadcast %cst_10 : f32 to vector<8x1xf32>
    %18 = arith.divf %16, %17 : vector<8x1xf32>
    %19 = math.sqrt %18 : vector<8x1xf32>
    %20 = vector.broadcast %11 : vector<8x1xf32> to vector<8x32xf32>
    %21 = arith.subf %3, %20 : vector<8x32xf32>
    %22 = vector.broadcast %5 : vector<1x32xf32> to vector<8x32xf32>
    %23 = arith.mulf %22, %21 : vector<8x32xf32>
    %cst_11 = arith.constant 9.99999997E-7 : f32
    %24 = vector.broadcast %cst_11 : f32 to vector<8x1xf32>
    %25 = arith.addf %19, %24 : vector<8x1xf32>
    %26 = vector.broadcast %25 : vector<8x1xf32> to vector<8x32xf32>
    %27 = arith.divf %23, %26 : vector<8x32xf32>
    %28 = vector.broadcast %7 : vector<1x32xf32> to vector<8x32xf32>
    %29 = arith.addf %27, %28 : vector<8x32xf32>
    %30 = arith.truncf %29 : vector<8x32xf32> to vector<8x32xbf16>
    %c0_12 = arith.constant 0 : index
    %c0_13 = arith.constant 0 : index
    %c0_14 = arith.constant 0 : index
    %31 = vector.load %arg9[%c0_12, %c0_13, %c0_14] : memref<1x32x32xbf16, #tpu.memory_space<vmem>>, vector<1x32x32xbf16>
    %32 = vector.shape_cast %31 : vector<1x32x32xbf16> to vector<32x32xbf16>
    %cst_15 = arith.constant dense<0.000000e+00> : vector<8x32xf32>
    %33 = tpu.matmul %30, %32, %cst_15 {dimension_numbers = #tpu.dot_dimension_numbers<[1], [0], [0], [1], [0, 0, 1, 1], [], []>} : vector<8x32xbf16>, vector<32x32xbf16>, vector<8x32xf32> -> vector<8x32xf32>
    %c0_16 = arith.constant 0 : index
    %c0_17 = arith.constant 0 : index
    %c0_18 = arith.constant 0 : index
    %34 = vector.load %arg10[%c0_16, %c0_17, %c0_18] : memref<1x1x32xf32, #tpu.memory_space<vmem>>, vector<1x1x32xf32>
    %35 = vector.shape_cast %34 : vector<1x1x32xf32> to vector<1x32xf32>
    %36 = vector.broadcast %35 : vector<1x32xf32> to vector<8x32xf32>
    %37 = arith.addf %33, %36 : vector<8x32xf32>
    %c0_19 = arith.constant 0 : index
    %c0_20 = arith.constant 0 : index
    %c0_21 = arith.constant 0 : index
    %38 = vector.load %arg11[%c0_19, %c0_20, %c0_21] : memref<1x32x32xbf16, #tpu.memory_space<vmem>>, vector<1x32x32xbf16>
    %39 = vector.shape_cast %38 : vector<1x32x32xbf16> to vector<32x32xbf16>
    %cst_22 = arith.constant dense<0.000000e+00> : vector<8x32xf32>
    %40 = tpu.matmul %30, %39, %cst_22 {dimension_numbers = #tpu.dot_dimension_numbers<[1], [0], [0], [1], [0, 0, 1, 1], [], []>} : vector<8x32xbf16>, vector<32x32xbf16>, vector<8x32xf32> -> vector<8x32xf32>
    %c0_23 = arith.constant 0 : index
    %c0_24 = arith.constant 0 : index
    %c0_25 = arith.constant 0 : index
    %41 = vector.load %arg12[%c0_23, %c0_24, %c0_25] : memref<1x1x32xf32, #tpu.memory_space<vmem>>, vector<1x1x32xf32>
    %42 = vector.shape_cast %41 : vector<1x1x32xf32> to vector<1x32xf32>
    %43 = vector.broadcast %42 : vector<1x32xf32> to vector<8x32xf32>
    %44 = arith.addf %40, %43 : vector<8x32xf32>
    %c0_26 = arith.constant 0 : index
    %c0_27 = arith.constant 0 : index
    %c0_28 = arith.constant 0 : index
    %45 = vector.load %arg13[%c0_26, %c0_27, %c0_28] : memref<1x32x32xbf16, #tpu.memory_space<vmem>>, vector<1x32x32xbf16>
    %46 = vector.shape_cast %45 : vector<1x32x32xbf16> to vector<32x32xbf16>
    %cst_29 = arith.constant dense<0.000000e+00> : vector<8x32xf32>
    %47 = tpu.matmul %30, %46, %cst_29 {dimension_numbers = #tpu.dot_dimension_numbers<[1], [0], [0], [1], [0, 0, 1, 1], [], []>} : vector<8x32xbf16>, vector<32x32xbf16>, vector<8x32xf32> -> vector<8x32xf32>
    %c0_30 = arith.constant 0 : index
    %c0_31 = arith.constant 0 : index
    %c0_32 = arith.constant 0 : index
    %48 = vector.load %arg14[%c0_30, %c0_31, %c0_32] : memref<1x1x32xf32, #tpu.memory_space<vmem>>, vector<1x1x32xf32>
    %49 = vector.shape_cast %48 : vector<1x1x32xf32> to vector<1x32xf32>
    %50 = vector.broadcast %49 : vector<1x32xf32> to vector<8x32xf32>
    %51 = arith.addf %47, %50 : vector<8x32xf32>
    %52 = tpu.transpose %44, [1, 0] : vector<8x32xf32> -> vector<32x8xf32>
    %c0_33 = arith.constant 0 : index
    %c0_34 = arith.constant 0 : index
    %c0_35 = arith.constant 0 : index
    %53 = vector.load %arg3[%c0_33, %c0_34, %c0_35] : memref<1x1x8xf32, #tpu.memory_space<vmem>>, vector<1x1x8xf32>
    %54 = vector.shape_cast %53 : vector<1x1x8xf32> to vector<1x8xf32>
    %55 = vector.extract_strided_slice %37 {offsets = [0, 0], sizes = [8, 16], strides = [1, 1]} : vector<8x32xf32> to vector<8x16xf32>
    %56 = arith.truncf %55 : vector<8x16xf32> to vector<8x16xbf16>
    %57 = vector.extract_strided_slice %52 {offsets = [0, 0], sizes = [16, 8], strides = [1, 1]} : vector<32x8xf32> to vector<16x8xf32>
    %58 = arith.truncf %57 : vector<16x8xf32> to vector<16x8xbf16>
    %59 = vector.extract_strided_slice %51 {offsets = [0, 0], sizes = [8, 16], strides = [1, 1]} : vector<8x32xf32> to vector<8x16xf32>
    %60 = arith.truncf %59 : vector<8x16xf32> to vector<8x16xbf16>
    %cst_36 = arith.constant dense<0.000000e+00> : vector<8x8xf32>
    %61 = tpu.matmul %56, %58, %cst_36 {dimension_numbers = #tpu.dot_dimension_numbers<[1], [0], [0], [1], [0, 0, 1, 1], [], []>} : vector<8x16xbf16>, vector<16x8xbf16>, vector<8x8xf32> -> vector<8x8xf32>
    %cst_37 = arith.constant 2.500000e-01 : f32
    %62 = vector.broadcast %cst_37 : f32 to vector<8x8xf32>
    %63 = arith.mulf %61, %62 : vector<8x8xf32>
    %64 = vector.broadcast %54 : vector<1x8xf32> to vector<8x8xf32>
    %65 = arith.addf %63, %64 : vector<8x8xf32>
    %cst_38 = arith.constant dense<0xFF800000> : vector<8xf32>
    %66 = vector.multi_reduction <maximumf>, %65, %cst_38 [1] : vector<8x8xf32> to vector<8xf32>
    %67 = vector.shape_cast %66 : vector<8xf32> to vector<8x1xf32>
    %68 = vector.broadcast %67 : vector<8x1xf32> to vector<8x8xf32>
    %69 = arith.subf %65, %68 : vector<8x8xf32>
    %70 = math.exp %69 : vector<8x8xf32>
    %cst_39 = arith.constant dense<0.000000e+00> : vector<8xf32>
    %71 = vector.multi_reduction <add>, %70, %cst_39 [1] : vector<8x8xf32> to vector<8xf32>
    %72 = vector.shape_cast %71 : vector<8xf32> to vector<8x1xf32>
    %73 = tpu.reciprocal %72 {approx = true} : vector<8x1xf32> -> vector<8x1xf32>
    %74 = vector.broadcast %73 : vector<8x1xf32> to vector<8x8xf32>
    %75 = arith.mulf %70, %74 : vector<8x8xf32>
    %76 = arith.truncf %75 : vector<8x8xf32> to vector<8x8xbf16>
    %cst_40 = arith.constant dense<0.000000e+00> : vector<8x16xf32>
    %77 = tpu.matmul %76, %60, %cst_40 {dimension_numbers = #tpu.dot_dimension_numbers<[1], [0], [0], [1], [0, 0, 1, 1], [], []>} : vector<8x8xbf16>, vector<8x16xbf16>, vector<8x16xf32> -> vector<8x16xf32>
    %c0_41 = arith.constant 0 : index
    %c0_42 = arith.constant 0 : index
    %78 = vector.load %arg27[%c0_41, %c0_42] : memref<8x32xf32, #tpu.memory_space<vmem>>, vector<8x16xf32>
    tpu.vector_store %arg27[%c0_41, %c0_42], %77 {strides = array<i32>} : memref<8x32xf32, #tpu.memory_space<vmem>>, vector<8x16xf32>,
    %79 = vector.extract_strided_slice %37 {offsets = [0, 16], sizes = [8, 16], strides = [1, 1]} : vector<8x32xf32> to vector<8x16xf32>
    %80 = arith.truncf %79 : vector<8x16xf32> to vector<8x16xbf16>
    %81 = vector.extract_strided_slice %52 {offsets = [16, 0], sizes = [16, 8], strides = [1, 1]} : vector<32x8xf32> to vector<16x8xf32>
    %82 = arith.truncf %81 : vector<16x8xf32> to vector<16x8xbf16>
    %83 = vector.extract_strided_slice %51 {offsets = [0, 16], sizes = [8, 16], strides = [1, 1]} : vector<8x32xf32> to vector<8x16xf32>
    %84 = arith.truncf %83 : vector<8x16xf32> to vector<8x16xbf16>
    %cst_43 = arith.constant dense<0.000000e+00> : vector<8x8xf32>
    %85 = tpu.matmul %80, %82, %cst_43 {dimension_numbers = #tpu.dot_dimension_numbers<[1], [0], [0], [1], [0, 0, 1, 1], [], []>} : vector<8x16xbf16>, vector<16x8xbf16>, vector<8x8xf32> -> vector<8x8xf32>
    %cst_44 = arith.constant 2.500000e-01 : f32
    %86 = vector.broadcast %cst_44 : f32 to vector<8x8xf32>
    %87 = arith.mulf %85, %86 : vector<8x8xf32>
    %88 = vector.broadcast %54 : vector<1x8xf32> to vector<8x8xf32>
    %89 = arith.addf %87, %88 : vector<8x8xf32>
    %cst_45 = arith.constant dense<0xFF800000> : vector<8xf32>
    %90 = vector.multi_reduction <maximumf>, %89, %cst_45 [1] : vector<8x8xf32> to vector<8xf32>
    %91 = vector.shape_cast %90 : vector<8xf32> to vector<8x1xf32>
    %92 = vector.broadcast %91 : vector<8x1xf32> to vector<8x8xf32>
    %93 = arith.subf %89, %92 : vector<8x8xf32>
    %94 = math.exp %93 : vector<8x8xf32>
    %cst_46 = arith.constant dense<0.000000e+00> : vector<8xf32>
    %95 = vector.multi_reduction <add>, %94, %cst_46 [1] : vector<8x8xf32> to vector<8xf32>
    %96 = vector.shape_cast %95 : vector<8xf32> to vector<8x1xf32>
    %97 = tpu.reciprocal %96 {approx = true} : vector<8x1xf32> -> vector<8x1xf32>
    %98 = vector.broadcast %97 : vector<8x1xf32> to vector<8x8xf32>
    %99 = arith.mulf %94, %98 : vector<8x8xf32>
    %100 = arith.truncf %99 : vector<8x8xf32> to vector<8x8xbf16>
    %cst_47 = arith.constant dense<0.000000e+00> : vector<8x16xf32>
    %101 = tpu.matmul %100, %84, %cst_47 {dimension_numbers = #tpu.dot_dimension_numbers<[1], [0], [0], [1], [0, 0, 1, 1], [], []>} : vector<8x8xbf16>, vector<8x16xbf16>, vector<8x16xf32> -> vector<8x16xf32>
    %c0_48 = arith.constant 0 : index
    %c16 = arith.constant 16 : index
    %102 = vector.load %arg27[%c0_48, %c16] : memref<8x32xf32, #tpu.memory_space<vmem>>, vector<8x16xf32>
    tpu.vector_store %arg27[%c0_48, %c16], %101 {strides = array<i32>} : memref<8x32xf32, #tpu.memory_space<vmem>>, vector<8x16xf32>,
    %c0_49 = arith.constant 0 : index
    %c0_50 = arith.constant 0 : index
    %103 = vector.load %arg27[%c0_49, %c0_50] : memref<8x32xf32, #tpu.memory_space<vmem>>, vector<8x32xf32>
    %104 = arith.truncf %103 : vector<8x32xf32> to vector<8x32xbf16>
    %c0_51 = arith.constant 0 : index
    %c0_52 = arith.constant 0 : index
    %c0_53 = arith.constant 0 : index
    %105 = vector.load %arg15[%c0_51, %c0_52, %c0_53] : memref<1x32x32xbf16, #tpu.memory_space<vmem>>, vector<1x32x32xbf16>
    %106 = vector.shape_cast %105 : vector<1x32x32xbf16> to vector<32x32xbf16>
    %cst_54 = arith.constant dense<0.000000e+00> : vector<8x32xf32>
    %107 = tpu.matmul %104, %106, %cst_54 {dimension_numbers = #tpu.dot_dimension_numbers<[1], [0], [0], [1], [0, 0, 1, 1], [], []>} : vector<8x32xbf16>, vector<32x32xbf16>, vector<8x32xf32> -> vector<8x32xf32>
    %c0_55 = arith.constant 0 : index
    %c0_56 = arith.constant 0 : index
    %c0_57 = arith.constant 0 : index
    %108 = vector.load %arg16[%c0_55, %c0_56, %c0_57] : memref<1x1x32xf32, #tpu.memory_space<vmem>>, vector<1x1x32xf32>
    %109 = vector.shape_cast %108 : vector<1x1x32xf32> to vector<1x32xf32>
    %110 = vector.broadcast %109 : vector<1x32xf32> to vector<8x32xf32>
    %111 = arith.addf %107, %110 : vector<8x32xf32>
    %112 = arith.addf %3, %111 : vector<8x32xf32>
    %c0_58 = arith.constant 0 : index
    %c0_59 = arith.constant 0 : index
    %c0_60 = arith.constant 0 : index
    %113 = vector.load %arg17[%c0_58, %c0_59, %c0_60] : memref<1x1x32xf32, #tpu.memory_space<vmem>>, vector<1x1x32xf32>
    %114 = vector.shape_cast %113 : vector<1x1x32xf32> to vector<1x32xf32>
    %c0_61 = arith.constant 0 : index
    %c0_62 = arith.constant 0 : index
    %c0_63 = arith.constant 0 : index
    %115 = vector.load %arg18[%c0_61, %c0_62, %c0_63] : memref<1x1x32xf32, #tpu.memory_space<vmem>>, vector<1x1x32xf32>
    %116 = vector.shape_cast %115 : vector<1x1x32xf32> to vector<1x32xf32>
    %cst_64 = arith.constant dense<0.000000e+00> : vector<8xf32>
    %117 = vector.multi_reduction <add>, %112, %cst_64 [1] : vector<8x32xf32> to vector<8xf32>
    %118 = vector.shape_cast %117 : vector<8xf32> to vector<8x1xf32>
    %cst_65 = arith.constant 3.200000e+01 : f32
    %119 = vector.broadcast %cst_65 : f32 to vector<8x1xf32>
    %120 = arith.divf %118, %119 : vector<8x1xf32>
    %121 = vector.broadcast %120 : vector<8x1xf32> to vector<8x32xf32>
    %122 = arith.subf %112, %121 : vector<8x32xf32>
    %123 = arith.mulf %122, %122 : vector<8x32xf32>
    %cst_66 = arith.constant dense<0.000000e+00> : vector<8xf32>
    %124 = vector.multi_reduction <add>, %123, %cst_66 [1] : vector<8x32xf32> to vector<8xf32>
    %125 = vector.shape_cast %124 : vector<8xf32> to vector<8x1xf32>
    %cst_67 = arith.constant 3.100000e+01 : f32
    %126 = vector.broadcast %cst_67 : f32 to vector<8x1xf32>
    %127 = arith.divf %125, %126 : vector<8x1xf32>
    %128 = math.sqrt %127 : vector<8x1xf32>
    %129 = vector.broadcast %120 : vector<8x1xf32> to vector<8x32xf32>
    %130 = arith.subf %112, %129 : vector<8x32xf32>
    %131 = vector.broadcast %114 : vector<1x32xf32> to vector<8x32xf32>
    %132 = arith.mulf %131, %130 : vector<8x32xf32>
    %cst_68 = arith.constant 9.99999997E-7 : f32
    %133 = vector.broadcast %cst_68 : f32 to vector<8x1xf32>
    %134 = arith.addf %128, %133 : vector<8x1xf32>
    %135 = vector.broadcast %134 : vector<8x1xf32> to vector<8x32xf32>
    %136 = arith.divf %132, %135 : vector<8x32xf32>
    %137 = vector.broadcast %116 : vector<1x32xf32> to vector<8x32xf32>
    %138 = arith.addf %136, %137 : vector<8x32xf32>
    %139 = arith.truncf %138 : vector<8x32xf32> to vector<8x32xbf16>
    %c0_69 = arith.constant 0 : index
    %c0_70 = arith.constant 0 : index
    %c0_71 = arith.constant 0 : index
    %140 = vector.load %arg19[%c0_69, %c0_70, %c0_71] : memref<1x32x128xbf16, #tpu.memory_space<vmem>>, vector<1x32x128xbf16>
    %141 = vector.shape_cast %140 : vector<1x32x128xbf16> to vector<32x128xbf16>
    %cst_72 = arith.constant dense<0.000000e+00> : vector<8x128xf32>
    %142 = tpu.matmul %139, %141, %cst_72 {dimension_numbers = #tpu.dot_dimension_numbers<[1], [0], [0], [1], [0, 0, 1, 1], [], []>} : vector<8x32xbf16>, vector<32x128xbf16>, vector<8x128xf32> -> vector<8x128xf32>
    %c0_73 = arith.constant 0 : index
    %c0_74 = arith.constant 0 : index
    %c0_75 = arith.constant 0 : index
    %143 = vector.load %arg20[%c0_73, %c0_74, %c0_75] : memref<1x1x128xf32, #tpu.memory_space<vmem>>, vector<1x1x128xf32>
    %144 = vector.shape_cast %143 : vector<1x1x128xf32> to vector<1x128xf32>
    %145 = vector.broadcast %144 : vector<1x128xf32> to vector<8x128xf32>
    %146 = arith.addf %142, %145 : vector<8x128xf32>
    %cst_76 = arith.constant 5.000000e-01 : f32
    %147 = vector.broadcast %cst_76 : f32 to vector<8x128xf32>
    %148 = arith.mulf %147, %146 : vector<8x128xf32>
    %cst_77 = arith.constant 4.471500e-02 : f32
    %149 = vector.broadcast %cst_77 : f32 to vector<8x128xf32>
    %150 = arith.mulf %149, %146 : vector<8x128xf32>
    %151 = arith.mulf %150, %146 : vector<8x128xf32>
    %152 = arith.mulf %151, %146 : vector<8x128xf32>
    %153 = arith.addf %146, %152 : vector<8x128xf32>
    %cst_78 = arith.constant 0.797884583 : f32
    %154 = vector.broadcast %cst_78 : f32 to vector<8x128xf32>
    %155 = arith.mulf %154, %153 : vector<8x128xf32>
    %156 = math.tanh %155 : vector<8x128xf32>
    %cst_79 = arith.constant 1.000000e+00 : f32
    %157 = vector.broadcast %cst_79 : f32 to vector<8x128xf32>
    %158 = arith.addf %157, %156 : vector<8x128xf32>
    %159 = arith.mulf %148, %158 : vector<8x128xf32>
    %160 = arith.truncf %159 : vector<8x128xf32> to vector<8x128xbf16>
    %c0_80 = arith.constant 0 : index
    %c0_81 = arith.constant 0 : index
    %c0_82 = arith.constant 0 : index
    %161 = vector.load %arg21[%c0_80, %c0_81, %c0_82] : memref<1x128x32xbf16, #tpu.memory_space<vmem>>, vector<1x128x32xbf16>
    %162 = vector.shape_cast %161 : vector<1x128x32xbf16> to vector<128x32xbf16>
    %cst_83 = arith.constant dense<0.000000e+00> : vector<8x32xf32>
    %163 = tpu.matmul %160, %162, %cst_83 {dimension_numbers = #tpu.dot_dimension_numbers<[1], [0], [0], [1], [0, 0, 1, 1], [], []>} : vector<8x128xbf16>, vector<128x32xbf16>, vector<8x32xf32> -> vector<8x32xf32>
    %c0_84 = arith.constant 0 : index
    %c0_85 = arith.constant 0 : index
    %c0_86 = arith.constant 0 : index
    %164 = vector.load %arg22[%c0_84, %c0_85, %c0_86] : memref<1x1x32xf32, #tpu.memory_space<vmem>>, vector<1x1x32xf32>
    %165 = vector.shape_cast %164 : vector<1x1x32xf32> to vector<1x32xf32>
    %166 = vector.broadcast %165 : vector<1x32xf32> to vector<8x32xf32>
    %167 = arith.addf %163, %166 : vector<8x32xf32>
    %168 = arith.addf %112, %167 : vector<8x32xf32>
    %c0_87 = arith.constant 0 : index
    %c0_88 = arith.constant 0 : index
    %169 = vector.load %arg26[%c0_87, %c0_88] : memref<8x32xf32, #tpu.memory_space<vmem>>, vector<8x32xf32>
    tpu.vector_store %arg26[%c0_87, %c0_88], %168 {strides = array<i32>} : memref<8x32xf32, #tpu.memory_space<vmem>>, vector<8x32xf32>,
    %c1_i32 = arith.constant 1 : i32
    %170 = arith.cmpi eq, %arg1, %c1_i32 : i32
    %171 = arith.extui %170 : i1 to i32
    %c0_i32_89 = arith.constant 0 : i32
    %172 = arith.cmpi ne, %171, %c0_i32_89 : i32
    scf.if %172 {
      %173 = arith.truncf %168 : vector<8x32xf32> to vector<8x32xbf16>
      %c0_90 = arith.constant 0 : index
      %c0_91 = arith.constant 0 : index
      %174 = vector.load %arg23[%c0_90, %c0_91] : memref<32x4xbf16, #tpu.memory_space<vmem>>, vector<32x4xbf16>
      %cst_92 = arith.constant dense<0.000000e+00> : vector<8x4xf32>
      %175 = tpu.matmul %173, %174, %cst_92 {dimension_numbers = #tpu.dot_dimension_numbers<[1], [0], [0], [1], [0, 0, 1, 1], [], []>} : vector<8x32xbf16>, vector<32x4xbf16>, vector<8x4xf32> -> vector<8x4xf32>
      %c0_93 = arith.constant 0 : index
      %c0_94 = arith.constant 0 : index
      %176 = vector.load %arg24[%c0_93, %c0_94] : memref<1x4xf32, #tpu.memory_space<vmem>>, vector<1x4xf32>
      %177 = vector.broadcast %176 : vector<1x4xf32> to vector<8x4xf32>
      %178 = arith.addf %175, %177 : vector<8x4xf32>
      %c0_95 = arith.constant 0 : index
      %c0_96 = arith.constant 0 : index
      %179 = vector.load %arg25[%c0_95, %c0_96] : memref<8x4xf32, #tpu.memory_space<vmem>>, vector<8x4xf32>
      tpu.vector_store %arg25[%c0_95, %c0_96], %178 {strides = array<i32>} : memref<8x4xf32, #tpu.memory_space<vmem>>, vector<8x4xf32>,
    } else {
    }
    return
  }
  func.func @transform_0(%arg0: i32, %arg1: i32) -> (i32, i32) {
    %c0_i32 = arith.constant 0 : i32
    %c0_i32_0 = arith.constant 0 : i32
    return %arg0, %c0_i32 : i32, i32
  }
  func.func @transform_1(%arg0: i32, %arg1: i32) -> (i32, i32, i32) {
    %c0_i32 = arith.constant 0 : i32
    %c0_i32_0 = arith.constant 0 : i32
    %c0_i32_1 = arith.constant 0 : i32
    return %arg0, %c0_i32, %c0_i32_0 : i32, i32, i32
  }
  func.func @transform_2(%arg0: i32, %arg1: i32) -> (i32, i32) {
    %c0_i32 = arith.constant 0 : i32
    %c0_i32_0 = arith.constant 0 : i32
    %c0_i32_1 = arith.constant 0 : i32
    return %c0_i32, %c0_i32_0 : i32, i32
  }
  func.func @transform_3(%arg0: i32, %arg1: i32) -> (i32, i32) {
    %c0_i32 = arith.constant 0 : i32
    %c0_i32_0 = arith.constant 0 : i32
    %c0_i32_1 = arith.constant 0 : i32
    return %c0_i32, %c0_i32_0 : i32, i32
  }
  func.func @transform_4(%arg0: i32, %arg1: i32) -> (i32, i32) {
    %c0_i32 = arith.constant 0 : i32
    %c0_i32_0 = arith.constant 0 : i32
    %c0_i32_1 = arith.constant 0 : i32
    return %c0_i32, %c0_i32_0 : i32, i32
  }
  func.func @transform_5(%arg0: i32, %arg1: i32) -> (i32, i32, i32) {
    %c0_i32 = arith.constant 0 : i32
    %c0_i32_0 = arith.constant 0 : i32
    %c0_i32_1 = arith.constant 0 : i32
    return %arg1, %c0_i32, %c0_i32_0 : i32, i32, i32
  }
  func.func @transform_6(%arg0: i32, %arg1: i32) -> (i32, i32, i32) {
    %c0_i32 = arith.constant 0 : i32
    %c0_i32_0 = arith.constant 0 : i32
    %c0_i32_1 = arith.constant 0 : i32
    return %arg1, %c0_i32, %c0_i32_0 : i32, i32, i32
  }
  func.func @transform_7(%arg0: i32, %arg1: i32) -> (i32, i32, i32) {
    %c0_i32 = arith.constant 0 : i32
    %c0_i32_0 = arith.constant 0 : i32
    %c0_i32_1 = arith.constant 0 : i32
    return %arg1, %c0_i32, %c0_i32_0 : i32, i32, i32
  }
  func.func @transform_8(%arg0: i32, %arg1: i32) -> (i32, i32, i32) {
    %c0_i32 = arith.constant 0 : i32
    %c0_i32_0 = arith.constant 0 : i32
    %c0_i32_1 = arith.constant 0 : i32
    return %arg1, %c0_i32, %c0_i32_0 : i32, i32, i32
  }
  func.func @transform_9(%arg0: i32, %arg1: i32) -> (i32, i32, i32) {
    %c0_i32 = arith.constant 0 : i32
    %c0_i32_0 = arith.constant 0 : i32
    %c0_i32_1 = arith.constant 0 : i32
    return %arg1, %c0_i32, %c0_i32_0 : i32, i32, i32
  }
  func.func @transform_10(%arg0: i32, %arg1: i32) -> (i32, i32, i32) {
    %c0_i32 = arith.constant 0 : i32
    %c0_i32_0 = arith.constant 0 : i32
    %c0_i32_1 = arith.constant 0 : i32
    return %arg1, %c0_i32, %c0_i32_0 : i32, i32, i32
  }
  func.func @transform_11(%arg0: i32, %arg1: i32) -> (i32, i32, i32) {
    %c0_i32 = arith.constant 0 : i32
    %c0_i32_0 = arith.constant 0 : i32
    %c0_i32_1 = arith.constant 0 : i32
    return %arg1, %c0_i32, %c0_i32_0 : i32, i32, i32
  }
  func.func @transform_12(%arg0: i32, %arg1: i32) -> (i32, i32, i32) {
    %c0_i32 = arith.constant 0 : i32
    %c0_i32_0 = arith.constant 0 : i32
    %c0_i32_1 = arith.constant 0 : i32
    return %arg1, %c0_i32, %c0_i32_0 : i32, i32, i32
  }
  func.func @transform_13(%arg0: i32, %arg1: i32) -> (i32, i32, i32) {
    %c0_i32 = arith.constant 0 : i32
    %c0_i32_0 = arith.constant 0 : i32
    %c0_i32_1 = arith.constant 0 : i32
    return %arg1, %c0_i32, %c0_i32_0 : i32, i32, i32
  }
  func.func @transform_14(%arg0: i32, %arg1: i32) -> (i32, i32, i32) {
    %c0_i32 = arith.constant 0 : i32
    %c0_i32_0 = arith.constant 0 : i32
    %c0_i32_1 = arith.constant 0 : i32
    return %arg1, %c0_i32, %c0_i32_0 : i32, i32, i32
  }
  func.func @transform_15(%arg0: i32, %arg1: i32) -> (i32, i32, i32) {
    %c0_i32 = arith.constant 0 : i32
    %c0_i32_0 = arith.constant 0 : i32
    %c0_i32_1 = arith.constant 0 : i32
    return %arg1, %c0_i32, %c0_i32_0 : i32, i32, i32
  }
  func.func @transform_16(%arg0: i32, %arg1: i32) -> (i32, i32, i32) {
    %c0_i32 = arith.constant 0 : i32
    %c0_i32_0 = arith.constant 0 : i32
    %c0_i32_1 = arith.constant 0 : i32
    return %arg1, %c0_i32, %c0_i32_0 : i32, i32, i32
  }
  func.func @transform_17(%arg0: i32, %arg1: i32) -> (i32, i32, i32) {
    %c0_i32 = arith.constant 0 : i32
    %c0_i32_0 = arith.constant 0 : i32
    %c0_i32_1 = arith.constant 0 : i32
    return %arg1, %c0_i32, %c0_i32_0 : i32, i32, i32
  }
  func.func @transform_18(%arg0: i32, %arg1: i32) -> (i32, i32, i32) {
    %c0_i32 = arith.constant 0 : i32
    %c0_i32_0 = arith.constant 0 : i32
    %c0_i32_1 = arith.constant 0 : i32
    return %arg1, %c0_i32, %c0_i32_0 : i32, i32, i32
  }
  func.func @transform_19(%arg0: i32, %arg1: i32) -> (i32, i32, i32) {
    %c0_i32 = arith.constant 0 : i32
    %c0_i32_0 = arith.constant 0 : i32
    %c0_i32_1 = arith.constant 0 : i32
    return %arg1, %c0_i32, %c0_i32_0 : i32, i32, i32
  }
  func.func @transform_20(%arg0: i32, %arg1: i32) -> (i32, i32, i32) {
    %c0_i32 = arith.constant 0 : i32
    %c0_i32_0 = arith.constant 0 : i32
    %c0_i32_1 = arith.constant 0 : i32
    return %arg1, %c0_i32, %c0_i32_0 : i32, i32, i32
  }
  func.func @transform_21(%arg0: i32, %arg1: i32) -> (i32, i32) {
    %c0_i32 = arith.constant 0 : i32
    %c0_i32_0 = arith.constant 0 : i32
    %c0_i32_1 = arith.constant 0 : i32
    return %c0_i32, %c0_i32_0 : i32, i32
  }
  func.func @transform_22(%arg0: i32, %arg1: i32) -> (i32, i32) {
    %c0_i32 = arith.constant 0 : i32
    %c0_i32_0 = arith.constant 0 : i32
    %c0_i32_1 = arith.constant 0 : i32
    return %c0_i32, %c0_i32_0 : i32, i32
  }
  func.func @transform_23(%arg0: i32, %arg1: i32) -> (i32, i32) {
    %c0_i32 = arith.constant 0 : i32
    %c0_i32_0 = arith.constant 0 : i32
    return %arg0, %c0_i32 : i32, i32
  }
}

</mosaic_0001>

<llo_original>
// kernel: tvtsbert_prediction_forward.1
$region0: #{tvtsbert_prediction_forward.1}
  #allocation0 [shape = 'u32[]', space=smem, size = 0x4, offset = 0x4, fixed_abs, tag = 'smem constant byte address 0x4 - core index']
  #allocation1 [shape = 'u32[144,128]{1,0:T(1,128)}', space=vmem, size = 0x12000, scoped, tag = 'internal scratch']
  #allocation2 [shape = 'f32[8,32]{1,0:T(8,128)}', space=vmem, size = 0x1000, scoped, tag = 'scratch operand']
  #allocation3 [shape = 'f32[8,32]{1,0:T(8,128)}', space=vmem, size = 0x1000, scoped, tag = 'scratch operand']
  %s0 = inlined_call_operand.hbm [shape: f32[16,4], index: 0, kind: input, shape index: {}]
  %s1 = inlined_call_operand.hbm [shape: f32[2,1,8], index: 1, kind: input, shape index: {}]
  %s2 = inlined_call_operand.hbm [shape: bf16[4,32], index: 2, kind: input, shape index: {}]
  %s3 = inlined_call_operand.hbm [shape: f32[1,32], index: 3, kind: input, shape index: {}]
  %s4 = inlined_call_operand.hbm [shape: f32[8,32], index: 4, kind: input, shape index: {}]
  %s5 = inlined_call_operand.hbm [shape: f32[2,1,32], index: 5, kind: input, shape index: {}]
  %s6 = inlined_call_operand.hbm [shape: f32[2,1,32], index: 6, kind: input, shape index: {}]
  %s7 = inlined_call_operand.hbm [shape: bf16[2,32,32], index: 7, kind: input, shape index: {}]
  %s8 = inlined_call_operand.hbm [shape: f32[2,1,32], index: 8, kind: input, shape index: {}]
  %s9 = inlined_call_operand.hbm [shape: bf16[2,32,32], index: 9, kind: input, shape index: {}]
  %s10 = inlined_call_operand.hbm [shape: f32[2,1,32], index: 10, kind: input, shape index: {}]
  %s11 = inlined_call_operand.hbm [shape: bf16[2,32,32], index: 11, kind: input, shape index: {}]
  %s12 = inlined_call_operand.hbm [shape: f32[2,1,32], index: 12, kind: input, shape index: {}]
  %s13 = inlined_call_operand.hbm [shape: bf16[2,32,32], index: 13, kind: input, shape index: {}]
  %s14 = inlined_call_operand.hbm [shape: f32[2,1,32], index: 14, kind: input, shape index: {}]
  %s15 = inlined_call_operand.hbm [shape: f32[2,1,32], index: 15, kind: input, shape index: {}]
  %s16 = inlined_call_operand.hbm [shape: f32[2,1,32], index: 16, kind: input, shape index: {}]
  %s17 = inlined_call_operand.hbm [shape: bf16[2,32,128], index: 17, kind: input, shape index: {}]
  %s18 = inlined_call_operand.hbm [shape: f32[2,1,128], index: 18, kind: input, shape index: {}]
  %s19 = inlined_call_operand.hbm [shape: bf16[2,128,32], index: 19, kind: input, shape index: {}]
  %s20 = inlined_call_operand.hbm [shape: f32[2,1,32], index: 20, kind: input, shape index: {}]
  %s21 = inlined_call_operand.hbm [shape: bf16[32,4], index: 21, kind: input, shape index: {}]
  %s22 = inlined_call_operand.hbm [shape: f32[1,4], index: 22, kind: input, shape index: {}]
  %s23 = inlined_call_operand.hbm [shape: f32[16,4], index: 23, kind: output, shape index: {}]
  %s24 = sld [smem:[#allocation0]]
  $region225: #{tvtsbert_prediction_forward.1} parent=0
    _
  %s26 = ssub.s32 1, %s24
  %s27 = scalar_select 0, %s26, %s24
  $region1: #{tvtsbert_prediction_forward.1} parent=0
    #allocation4 [shape = 'u8[8192]{0}', space=vmem, size = 0x2000, scoped, tag = 'input window, operand 0']
    #allocation5 [shape = 's32[2]{0}', space=sflag, size = 0x8, scoped, tag = 'scoped memory for tvtsbert_prediction_forward.1']
    #allocation6 [shape = 's32[2]{0}', space=sflag, size = 0x8, scoped, tag = 'scoped memory for tvtsbert_prediction_forward.1']
    #allocation7 [shape = 'u8[1024]{0}', space=vmem, size = 0x400, scoped, tag = 'input window, operand 1']
    #allocation8 [shape = 's32[2]{0}', space=sflag, size = 0x8, scoped, tag = 'scoped memory for tvtsbert_prediction_forward.1']
    #allocation9 [shape = 'u8[1024]{0}', space=vmem, size = 0x400, scoped, tag = 'input window, operand 2, single buffered']
    #allocation10 [shape = 'u8[512]{0}', space=vmem, size = 0x400, scoped, tag = 'input window, operand 3, single buffered']
    #allocation11 [shape = 's32[1]{0}', space=sflag, size = 0x4, scoped, tag = 'scoped memory for tvtsbert_prediction_forward.1']
    #allocation12 [shape = 'u8[4096]{0}', space=vmem, size = 0x1000, scoped, tag = 'input window, operand 4, single buffered']
    #allocation13 [shape = 'u8[1024]{0}', space=vmem, size = 0x400, scoped, tag = 'input window, operand 5']
    #allocation14 [shape = 's32[2]{0}', space=sflag, size = 0x8, scoped, tag = 'scoped memory for tvtsbert_prediction_forward.1']
    #allocation15 [shape = 'u8[1024]{0}', space=vmem, size = 0x400, scoped, tag = 'input window, operand 6']
    #allocation16 [shape = 'u8[16384]{0}', space=vmem, size = 0x4000, scoped, tag = 'input window, operand 7']
    #allocation17 [shape = 's32[2]{0}', space=sflag, size = 0x8, scoped, tag = 'scoped memory for tvtsbert_prediction_forward.1']
    #allocation18 [shape = 'u8[1024]{0}', space=vmem, size = 0x400, scoped, tag = 'input window, operand 8']
    #allocation19 [shape = 'u8[16384]{0}', space=vmem, size = 0x4000, scoped, tag = 'input window, operand 9']
    #allocation20 [shape = 's32[2]{0}', space=sflag, size = 0x8, scoped, tag = 'scoped memory for tvtsbert_prediction_forward.1']
    #allocation21 [shape = 'u8[1024]{0}', space=vmem, size = 0x400, scoped, tag = 'input window, operand 10']
    #allocation22 [shape = 'u8[16384]{0}', space=vmem, size = 0x4000, scoped, tag = 'input window, operand 11']
    #allocation23 [shape = 's32[2]{0}', space=sflag, size = 0x8, scoped, tag = 'scoped memory for tvtsbert_prediction_forward.1']
    #allocation24 [shape = 'u8[1024]{0}', space=vmem, size = 0x400, scoped, tag = 'input window, operand 12']
    #allocation25 [shape = 'u8[16384]{0}', space=vmem, size = 0x4000, scoped, tag = 'input window, operand 13']
    #allocation26 [shape = 's32[2]{0}', space=sflag, size = 0x8, scoped, tag = 'scoped memory for tvtsbert_prediction_forward.1']
    #allocation27 [shape = 'u8[1024]{0}', space=vmem, size = 0x400, scoped, tag = 'input window, operand 14']
    #allocation28 [shape = 'u8[1024]{0}', space=vmem, size = 0x400, scoped, tag = 'input window, operand 15']
    #allocation29 [shape = 's32[2]{0}', space=sflag, size = 0x8, scoped, tag = 'scoped memory for tvtsbert_prediction_forward.1']
    #allocation30 [shape = 'u8[1024]{0}', space=vmem, size = 0x400, scoped, tag = 'input window, operand 16']
    #allocation31 [shape = 'u8[16384]{0}', space=vmem, size = 0x4000, scoped, tag = 'input window, operand 17']
    #allocation32 [shape = 's32[2]{0}', space=sflag, size = 0x8, scoped, tag = 'scoped memory for tvtsbert_prediction_forward.1']
    #allocation33 [shape = 'u8[1024]{0}', space=vmem, size = 0x400, scoped, tag = 'input window, operand 18']
    #allocation34 [shape = 'u8[65536]{0}', space=vmem, size = 0x10000, scoped, tag = 'input window, operand 19']
    #allocation35 [shape = 's32[2]{0}', space=sflag, size = 0x8, scoped, tag = 'scoped memory for tvtsbert_prediction_forward.1']
    #allocation36 [shape = 'u8[1024]{0}', space=vmem, size = 0x400, scoped, tag = 'input window, operand 20']
    #allocation37 [shape = 'u8[8192]{0}', space=vmem, size = 0x2000, scoped, tag = 'input window, operand 21, single buffered']
    #allocation38 [shape = 's32[1]{0}', space=sflag, size = 0x4, scoped, tag = 'scoped memory for tvtsbert_prediction_forward.1']
    #allocation39 [shape = 'u8[512]{0}', space=vmem, size = 0x400, scoped, tag = 'input window, operand 22, single buffered']
    #allocation40 [shape = 'u8[8192]{0}', space=vmem, size = 0x2000, scoped, tag = 'output window, operand 0']
    %28 = vsyncpa [#allocation5], 0
    %s29 = scalar_lea.sflag [#allocation5], 1
    %30 = vsyncpa %s29, 0
    %31 = vsyncpa [#allocation8], 0
    %s32 = scalar_lea.sflag [#allocation8], 1
    %33 = vsyncpa %s32, 0
    %34 = vsyncpa [#allocation11], 0
    %35 = vsyncpa [#allocation14], 0
    %s36 = scalar_lea.sflag [#allocation14], 1
    %37 = vsyncpa %s36, 0
    %38 = vsyncpa [#allocation17], 0
    %s39 = scalar_lea.sflag [#allocation17], 1
    %40 = vsyncpa %s39, 0
    %41 = vsyncpa [#allocation20], 0
    %s42 = scalar_lea.sflag [#allocation20], 1
    %43 = vsyncpa %s42, 0
    %44 = vsyncpa [#allocation23], 0
    %s45 = scalar_lea.sflag [#allocation23], 1
    %46 = vsyncpa %s45, 0
    %47 = vsyncpa [#allocation26], 0
    %s48 = scalar_lea.sflag [#allocation26], 1
    %49 = vsyncpa %s48, 0
    %50 = vsyncpa [#allocation29], 0
    %s51 = scalar_lea.sflag [#allocation29], 1
    %52 = vsyncpa %s51, 0
    %53 = vsyncpa [#allocation32], 0
    %s54 = scalar_lea.sflag [#allocation32], 1
    %55 = vsyncpa %s54, 0
    %56 = vsyncpa [#allocation35], 0
    %s57 = scalar_lea.sflag [#allocation35], 1
    %58 = vsyncpa %s57, 0
    %59 = vsyncpa [#allocation38], 0
    %60 = vsyncpa [#allocation6], 0
    %s61 = scalar_lea.sflag [#allocation6], 1
    %62 = vsyncpa %s61, 0
    loop: start=0, step=1, limit=6
    $region2: #{tvtsbert_prediction_forward.1} parent=1 // loop_pre_header
      _
    $region3: #{tvtsbert_prediction_forward.1} parent=1 // loop_header
      %s64 = sphi 0, %s68
      %p65 = scmp.ge.s32.totalorder %s64, 6
      %s71 = sphi 0, %s83
      %s72 = sphi 0, %s79
      %s73 = sphi 0, %s71
      %s74 = sphi 0, %s72
      %s75 = sphi 0, %s73
      %s76 = sphi 0, %s74
      %s86 = sphi 0, %s88
      %s89 = sphi 0, %s86
      %s90 = sphi 0, %s89
      %s106 = sphi 0, %s90
      %s112 = sphi 0, %s114
      %s115 = sphi 0, %s112
      %s116 = sphi 0, %s115
      %s132 = sphi 0, %s116
      %s136 = sphi 0, %s136
      %s138 = sphi 0, %s136
      %s139 = sphi 0, %s138
      %s153 = sphi 0, %s139
      %s157 = sphi 0, %s157
      %s159 = sphi 0, %s157
      %s160 = sphi 0, %s159
      %s174 = sphi 0, %s160
      %s178 = sphi 0, %s178
      %s180 = sphi 0, %s178
      %s181 = sphi 0, %s180
      %s195 = sphi 0, %s181
      %s201 = sphi 0, %s203
      %s204 = sphi 0, %s201
      %s205 = sphi 0, %s204
      %s221 = sphi 0, %s205
      %s227 = sphi 0, %s229
      %s230 = sphi 0, %s227
      %s231 = sphi 0, %s230
      %s247 = sphi 0, %s231
      %s253 = sphi 0, %s255
      %s256 = sphi 0, %s253
      %s257 = sphi 0, %s256
      %s273 = sphi 0, %s257
      %s279 = sphi 0, %s281
      %s282 = sphi 0, %s279
      %s283 = sphi 0, %s282
      %s299 = sphi 0, %s283
      %s305 = sphi 0, %s307
      %s308 = sphi 0, %s305
      %s309 = sphi 0, %s308
      %s325 = sphi 0, %s309
      %s331 = sphi 0, %s333
      %s334 = sphi 0, %s331
      %s335 = sphi 0, %s334
      %s351 = sphi 0, %s335
      %s357 = sphi 0, %s359
      %s360 = sphi 0, %s357
      %s361 = sphi 0, %s360
      %s377 = sphi 0, %s361
      %s383 = sphi 0, %s385
      %s386 = sphi 0, %s383
      %s387 = sphi 0, %s386
      %s403 = sphi 0, %s387
      %s409 = sphi 0, %s411
      %s412 = sphi 0, %s409
      %s413 = sphi 0, %s412
      %s429 = sphi 0, %s413
      %s435 = sphi 0, %s437
      %s438 = sphi 0, %s435
      %s439 = sphi 0, %s438
      %s455 = sphi 0, %s439
      %s461 = sphi 0, %s463
      %s464 = sphi 0, %s461
      %s465 = sphi 0, %s464
      %s481 = sphi 0, %s465
      %s487 = sphi 0, %s489
      %s490 = sphi 0, %s487
      %s491 = sphi 0, %s490
      %s507 = sphi 0, %s491
      %s513 = sphi 0, %s515
      %s516 = sphi 0, %s513
      %s517 = sphi 0, %s516
      %s533 = sphi 0, %s517
      %s539 = sphi 0, %s541
      %s542 = sphi 0, %s539
      %s543 = sphi 0, %s542
      %s559 = sphi 0, %s543
      %s565 = sphi 0, %s567
      %s568 = sphi 0, %s565
      %s569 = sphi 0, %s568
      %s585 = sphi 0, %s569
      %s591 = sphi 0, %s593
      %s594 = sphi 0, %s591
      %s595 = sphi 0, %s594
      %s611 = sphi 0, %s595
      %s615 = sphi 0, %s615
      %s617 = sphi 0, %s615
      %s618 = sphi 0, %s617
      %s632 = sphi 0, %s618
      %s636 = sphi 0, %s636
      %s638 = sphi 0, %s636
      %s639 = sphi 0, %s638
      %s653 = sphi 0, %s639
      %s659 = sphi 0, %s661
      %s662 = sphi 0, %s659
      %s663 = sphi 0, %s662
      %s679 = sphi 0, %s663
    $region4: #{tvtsbert_prediction_forward.1} parent=1 // loop_header_branch
      %67 = sbr.rel (%p65) target = $region8
    $region5: #{tvtsbert_prediction_forward.1} parent=1 // loop_body
      %s69 = ssub.s32 %s64, 1
      %s70 = ssub.s32 %s64, 2
      %s77 = sadd.s32 1, %s72
      %p78 = scmp.ge.s32.totalorder %s77, 2
      %s79 = scalar_select %p78, 0, %s77
      %s80 = sadd.s32 1, %s71
      %s81 = scalar_select %p78, %s80, %s71
      %p82 = scmp.ge.s32.totalorder %s81, 2
      %s83 = scalar_select %p82, 0, %s81
      %s84 = ssub.s32 %s71, %s83
      %p85 = scmp.eq.s32.totalorder %s84, 0
      %s87 = sadd.s32 %s86, 1
      %s88 = scalar_select %p85, %s86, %s87
      %p91 = pneg %p85
      %p92 = scmp.eq.s32.totalorder %s64, 3
      %p93 = por %p91, %p92
      %p94 = scmp.ne.s32.totalorder %s86, %s89
      %p95 = scmp.eq.s32.totalorder %s64, 0
      %p96 = por %p94, %p95
      %p97 = scmp.ne.s32.totalorder %s86, %s89
      %p98 = scmp.eq.s32.totalorder %s69, 3
      %p99 = por %p97, %p98
      %p100 = scmp.ne.s32.totalorder %s89, %s90
      %p101 = scmp.eq.s32.totalorder %s69, 0
      %p102 = por %p100, %p101
      %p103 = scmp.ne.s32.totalorder %s89, %s90
      %p104 = scmp.eq.s32.totalorder %s70, 3
      %p105 = por %p103, %p104
      %p107 = scmp.ne.s32.totalorder %s90, %s106
      %p108 = scmp.eq.s32.totalorder %s70, 0
      %p109 = por %p107, %p108
      %s110 = ssub.s32 %s71, %s83
      %p111 = scmp.eq.s32.totalorder %s110, 0
      %s113 = sadd.s32 %s112, 1
      %s114 = scalar_select %p111, %s112, %s113
      %p117 = pneg %p111
      %p118 = scmp.eq.s32.totalorder %s64, 3
      %p119 = por %p117, %p118
      %p120 = scmp.ne.s32.totalorder %s112, %s115
      %p121 = scmp.eq.s32.totalorder %s64, 0
      %p122 = por %p120, %p121
      %p123 = scmp.ne.s32.totalorder %s112, %s115
      %p124 = scmp.eq.s32.totalorder %s69, 3
      %p125 = por %p123, %p124
      %p126 = scmp.ne.s32.totalorder %s115, %s116
      %p127 = scmp.eq.s32.totalorder %s69, 0
      %p128 = por %p126, %p127
      %p129 = scmp.ne.s32.totalorder %s115, %s116
      %p130 = scmp.eq.s32.totalorder %s70, 3
      %p131 = por %p129, %p130
      %p133 = scmp.ne.s32.totalorder %s116, %s132
      %p134 = scmp.eq.s32.totalorder %s70, 0
      %p135 = por %p133, %p134
      %s137 = sadd.s32 %s136, 1
      %p140 = scmp.eq.s32.totalorder %s64, 3
      %p141 = scmp.ne.s32.totalorder %s136, %s138
      %p142 = scmp.eq.s32.totalorder %s64, 0
      %p143 = por %p141, %p142
      %p144 = scmp.ne.s32.totalorder %s136, %s138
      %p145 = scmp.eq.s32.totalorder %s69, 3
      %p146 = por %p144, %p145
      %p147 = scmp.ne.s32.totalorder %s138, %s139
      %p148 = scmp.eq.s32.totalorder %s69, 0
      %p149 = por %p147, %p148
      %p150 = scmp.ne.s32.totalorder %s138, %s139
      %p151 = scmp.eq.s32.totalorder %s70, 3
      %p152 = por %p150, %p151
      %p154 = scmp.ne.s32.totalorder %s139, %s153
      %p155 = scmp.eq.s32.totalorder %s70, 0
      %p156 = por %p154, %p155
      %s158 = sadd.s32 %s157, 1
      %p161 = scmp.eq.s32.totalorder %s64, 3
      %p162 = scmp.ne.s32.totalorder %s157, %s159
      %p163 = scmp.eq.s32.totalorder %s64, 0
      %p164 = por %p162, %p163
      %p165 = scmp.ne.s32.totalorder %s157, %s159
      %p166 = scmp.eq.s32.totalorder %s69, 3
      %p167 = por %p165, %p166
      %p168 = scmp.ne.s32.totalorder %s159, %s160
      %p169 = scmp.eq.s32.totalorder %s69, 0
      %p170 = por %p168, %p169
      %p171 = scmp.ne.s32.totalorder %s159, %s160
      %p172 = scmp.eq.s32.totalorder %s70, 3
      %p173 = por %p171, %p172
      %p175 = scmp.ne.s32.totalorder %s160, %s174
      %p176 = scmp.eq.s32.totalorder %s70, 0
      %p177 = por %p175, %p176
      %s179 = sadd.s32 %s178, 1
      %p182 = scmp.eq.s32.totalorder %s64, 3
      %p183 = scmp.ne.s32.totalorder %s178, %s180
      %p184 = scmp.eq.s32.totalorder %s64, 0
      %p185 = por %p183, %p184
      %p186 = scmp.ne.s32.totalorder %s178, %s180
      %p187 = scmp.eq.s32.totalorder %s69, 3
      %p188 = por %p186, %p187
      %p189 = scmp.ne.s32.totalorder %s180, %s181
      %p190 = scmp.eq.s32.totalorder %s69, 0
      %p191 = por %p189, %p190
      %p192 = scmp.ne.s32.totalorder %s180, %s181
      %p193 = scmp.eq.s32.totalorder %s70, 3
      %p194 = por %p192, %p193
      %p196 = scmp.ne.s32.totalorder %s181, %s195
      %p197 = scmp.eq.s32.totalorder %s70, 0
      %p198 = por %p196, %p197
      %s199 = ssub.s32 %s72, %s79
      %p200 = scmp.eq.s32.totalorder %s199, 0
      %s202 = sadd.s32 %s201, 1
      %s203 = scalar_select %p200, %s201, %s202
      %p206 = pneg %p200
      %p207 = scmp.eq.s32.totalorder %s64, 3
      %p208 = por %p206, %p207
      %p209 = scmp.ne.s32.totalorder %s201, %s204
      %p210 = scmp.eq.s32.totalorder %s64, 0
      %p211 = por %p209, %p210
      %p212 = scmp.ne.s32.totalorder %s201, %s204
      %p213 = scmp.eq.s32.totalorder %s69, 3
      %p214 = por %p212, %p213
      %p215 = scmp.ne.s32.totalorder %s204, %s205
      %p216 = scmp.eq.s32.totalorder %s69, 0
      %p217 = por %p215, %p216
      %p218 = scmp.ne.s32.totalorder %s204, %s205
      %p219 = scmp.eq.s32.totalorder %s70, 3
      %p220 = por %p218, %p219
      %p222 = scmp.ne.s32.totalorder %s205, %s221
      %p223 = scmp.eq.s32.totalorder %s70, 0
      %p224 = por %p222, %p223
      %s225 = ssub.s32 %s72, %s79
      %p226 = scmp.eq.s32.totalorder %s225, 0
      %s228 = sadd.s32 %s227, 1
      %s229 = scalar_select %p226, %s227, %s228
      %p232 = pneg %p226
      %p233 = scmp.eq.s32.totalorder %s64, 3
      %p234 = por %p232, %p233
      %p235 = scmp.ne.s32.totalorder %s227, %s230
      %p236 = scmp.eq.s32.totalorder %s64, 0
      %p237 = por %p235, %p236
      %p238 = scmp.ne.s32.totalorder %s227, %s230
      %p239 = scmp.eq.s32.totalorder %s69, 3
      %p240 = por %p238, %p239
      %p241 = scmp.ne.s32.totalorder %s230, %s231
      %p242 = scmp.eq.s32.totalorder %s69, 0
      %p243 = por %p241, %p242
      %p244 = scmp.ne.s32.totalorder %s230, %s231
      %p245 = scmp.eq.s32.totalorder %s70, 3
      %p246 = por %p244, %p245
      %p248 = scmp.ne.s32.totalorder %s231, %s247
      %p249 = scmp.eq.s32.totalorder %s70, 0
      %p250 = por %p248, %p249
      %s251 = ssub.s32 %s72, %s79
      %p252 = scmp.eq.s32.totalorder %s251, 0
      %s254 = sadd.s32 %s253, 1
      %s255 = scalar_select %p252, %s253, %s254
      %p258 = pneg %p252
      %p259 = scmp.eq.s32.totalorder %s64, 3
      %p260 = por %p258, %p259
      %p261 = scmp.ne.s32.totalorder %s253, %s256
      %p262 = scmp.eq.s32.totalorder %s64, 0
      %p263 = por %p261, %p262
      %p264 = scmp.ne.s32.totalorder %s253, %s256
      %p265 = scmp.eq.s32.totalorder %s69, 3
      %p266 = por %p264, %p265
      %p267 = scmp.ne.s32.totalorder %s256, %s257
      %p268 = scmp.eq.s32.totalorder %s69, 0
      %p269 = por %p267, %p268
      %p270 = scmp.ne.s32.totalorder %s256, %s257
      %p271 = scmp.eq.s32.totalorder %s70, 3
      %p272 = por %p270, %p271
      %p274 = scmp.ne.s32.totalorder %s257, %s273
      %p275 = scmp.eq.s32.totalorder %s70, 0
      %p276 = por %p274, %p275
      %s277 = ssub.s32 %s72, %s79
      %p278 = scmp.eq.s32.totalorder %s277, 0
      %s280 = sadd.s32 %s279, 1
      %s281 = scalar_select %p278, %s279, %s280
      %p284 = pneg %p278
      %p285 = scmp.eq.s32.totalorder %s64, 3
      %p286 = por %p284, %p285
      %p287 = scmp.ne.s32.totalorder %s279, %s282
      %p288 = scmp.eq.s32.totalorder %s64, 0
      %p289 = por %p287, %p288
      %p290 = scmp.ne.s32.totalorder %s279, %s282
      %p291 = scmp.eq.s32.totalorder %s69, 3
      %p292 = por %p290, %p291
      %p293 = scmp.ne.s32.totalorder %s282, %s283
      %p294 = scmp.eq.s32.totalorder %s69, 0
      %p295 = por %p293, %p294
      %p296 = scmp.ne.s32.totalorder %s282, %s283
      %p297 = scmp.eq.s32.totalorder %s70, 3
      %p298 = por %p296, %p297
      %p300 = scmp.ne.s32.totalorder %s283, %s299
      %p301 = scmp.eq.s32.totalorder %s70, 0
      %p302 = por %p300, %p301
      %s303 = ssub.s32 %s72, %s79
      %p304 = scmp.eq.s32.totalorder %s303, 0
      %s306 = sadd.s32 %s305, 1
      %s307 = scalar_select %p304, %s305, %s306
      %p310 = pneg %p304
      %p311 = scmp.eq.s32.totalorder %s64, 3
      %p312 = por %p310, %p311
      %p313 = scmp.ne.s32.totalorder %s305, %s308
      %p314 = scmp.eq.s32.totalorder %s64, 0
      %p315 = por %p313, %p314
      %p316 = scmp.ne.s32.totalorder %s305, %s308
      %p317 = scmp.eq.s32.totalorder %s69, 3
      %p318 = por %p316, %p317
      %p319 = scmp.ne.s32.totalorder %s308, %s309
      %p320 = scmp.eq.s32.totalorder %s69, 0
      %p321 = por %p319, %p320
      %p322 = scmp.ne.s32.totalorder %s308, %s309
      %p323 = scmp.eq.s32.totalorder %s70, 3
      %p324 = por %p322, %p323
      %p326 = scmp.ne.s32.totalorder %s309, %s325
      %p327 = scmp.eq.s32.totalorder %s70, 0
      %p328 = por %p326, %p327
      %s329 = ssub.s32 %s72, %s79
      %p330 = scmp.eq.s32.totalorder %s329, 0
      %s332 = sadd.s32 %s331, 1
      %s333 = scalar_select %p330, %s331, %s332
      %p336 = pneg %p330
      %p337 = scmp.eq.s32.totalorder %s64, 3
      %p338 = por %p336, %p337
      %p339 = scmp.ne.s32.totalorder %s331, %s334
      %p340 = scmp.eq.s32.totalorder %s64, 0
      %p341 = por %p339, %p340
      %p342 = scmp.ne.s32.totalorder %s331, %s334
      %p343 = scmp.eq.s32.totalorder %s69, 3
      %p344 = por %p342, %p343
      %p345 = scmp.ne.s32.totalorder %s334, %s335
      %p346 = scmp.eq.s32.totalorder %s69, 0
      %p347 = por %p345, %p346
      %p348 = scmp.ne.s32.totalorder %s334, %s335
      %p349 = scmp.eq.s32.totalorder %s70, 3
      %p350 = por %p348, %p349
      %p352 = scmp.ne.s32.totalorder %s335, %s351
      %p353 = scmp.eq.s32.totalorder %s70, 0
      %p354 = por %p352, %p353
      %s355 = ssub.s32 %s72, %s79
      %p356 = scmp.eq.s32.totalorder %s355, 0
      %s358 = sadd.s32 %s357, 1
      %s359 = scalar_select %p356, %s357, %s358
      %p362 = pneg %p356
      %p363 = scmp.eq.s32.totalorder %s64, 3
      %p364 = por %p362, %p363
      %p365 = scmp.ne.s32.totalorder %s357, %s360
      %p366 = scmp.eq.s32.totalorder %s64, 0
      %p367 = por %p365, %p366
      %p368 = scmp.ne.s32.totalorder %s357, %s360
      %p369 = scmp.eq.s32.totalorder %s69, 3
      %p370 = por %p368, %p369
      %p371 = scmp.ne.s32.totalorder %s360, %s361
      %p372 = scmp.eq.s32.totalorder %s69, 0
      %p373 = por %p371, %p372
      %p374 = scmp.ne.s32.totalorder %s360, %s361
      %p375 = scmp.eq.s32.totalorder %s70, 3
      %p376 = por %p374, %p375
      %p378 = scmp.ne.s32.totalorder %s361, %s377
      %p379 = scmp.eq.s32.totalorder %s70, 0
      %p380 = por %p378, %p379
      %s381 = ssub.s32 %s72, %s79
      %p382 = scmp.eq.s32.totalorder %s381, 0
      %s384 = sadd.s32 %s383, 1
      %s385 = scalar_select %p382, %s383, %s384
      %p388 = pneg %p382
      %p389 = scmp.eq.s32.totalorder %s64, 3
      %p390 = por %p388, %p389
      %p391 = scmp.ne.s32.totalorder %s383, %s386
      %p392 = scmp.eq.s32.totalorder %s64, 0
      %p393 = por %p391, %p392
      %p394 = scmp.ne.s32.totalorder %s383, %s386
      %p395 = scmp.eq.s32.totalorder %s69, 3
      %p396 = por %p394, %p395
      %p397 = scmp.ne.s32.totalorder %s386, %s387
      %p398 = scmp.eq.s32.totalorder %s69, 0
      %p399 = por %p397, %p398
      %p400 = scmp.ne.s32.totalorder %s386, %s387
      %p401 = scmp.eq.s32.totalorder %s70, 3
      %p402 = por %p400, %p401
      %p404 = scmp.ne.s32.totalorder %s387, %s403
      %p405 = scmp.eq.s32.totalorder %s70, 0
      %p406 = por %p404, %p405
      %s407 = ssub.s32 %s72, %s79
      %p408 = scmp.eq.s32.totalorder %s407, 0
      %s410 = sadd.s32 %s409, 1
      %s411 = scalar_select %p408, %s409, %s410
      %p414 = pneg %p408
      %p415 = scmp.eq.s32.totalorder %s64, 3
      %p416 = por %p414, %p415
      %p417 = scmp.ne.s32.totalorder %s409, %s412
      %p418 = scmp.eq.s32.totalorder %s64, 0
      %p419 = por %p417, %p418
      %p420 = scmp.ne.s32.totalorder %s409, %s412
      %p421 = scmp.eq.s32.totalorder %s69, 3
      %p422 = por %p420, %p421
      %p423 = scmp.ne.s32.totalorder %s412, %s413
      %p424 = scmp.eq.s32.totalorder %s69, 0
      %p425 = por %p423, %p424
      %p426 = scmp.ne.s32.totalorder %s412, %s413
      %p427 = scmp.eq.s32.totalorder %s70, 3
      %p428 = por %p426, %p427
      %p430 = scmp.ne.s32.totalorder %s413, %s429
      %p431 = scmp.eq.s32.totalorder %s70, 0
      %p432 = por %p430, %p431
      %s433 = ssub.s32 %s72, %s79
      %p434 = scmp.eq.s32.totalorder %s433, 0
      %s436 = sadd.s32 %s435, 1
      %s437 = scalar_select %p434, %s435, %s436
      %p440 = pneg %p434
      %p441 = scmp.eq.s32.totalorder %s64, 3
      %p442 = por %p440, %p441
      %p443 = scmp.ne.s32.totalorder %s435, %s438
      %p444 = scmp.eq.s32.totalorder %s64, 0
      %p445 = por %p443, %p444
      %p446 = scmp.ne.s32.totalorder %s435, %s438
      %p447 = scmp.eq.s32.totalorder %s69, 3
      %p448 = por %p446, %p447
      %p449 = scmp.ne.s32.totalorder %s438, %s439
      %p450 = scmp.eq.s32.totalorder %s69, 0
      %p451 = por %p449, %p450
      %p452 = scmp.ne.s32.totalorder %s438, %s439
      %p453 = scmp.eq.s32.totalorder %s70, 3
      %p454 = por %p452, %p453
      %p456 = scmp.ne.s32.totalorder %s439, %s455
      %p457 = scmp.eq.s32.totalorder %s70, 0
      %p458 = por %p456, %p457
      %s459 = ssub.s32 %s72, %s79
      %p460 = scmp.eq.s32.totalorder %s459, 0
      %s462 = sadd.s32 %s461, 1
      %s463 = scalar_select %p460, %s461, %s462
      %p466 = pneg %p460
      %p467 = scmp.eq.s32.totalorder %s64, 3
      %p468 = por %p466, %p467
      %p469 = scmp.ne.s32.totalorder %s461, %s464
      %p470 = scmp.eq.s32.totalorder %s64, 0
      %p471 = por %p469, %p470
      %p472 = scmp.ne.s32.totalorder %s461, %s464
      %p473 = scmp.eq.s32.totalorder %s69, 3
      %p474 = por %p472, %p473
      %p475 = scmp.ne.s32.totalorder %s464, %s465
      %p476 = scmp.eq.s32.totalorder %s69, 0
      %p477 = por %p475, %p476
      %p478 = scmp.ne.s32.totalorder %s464, %s465
      %p479 = scmp.eq.s32.totalorder %s70, 3
      %p480 = por %p478, %p479
      %p482 = scmp.ne.s32.totalorder %s465, %s481
      %p483 = scmp.eq.s32.totalorder %s70, 0
      %p484 = por %p482, %p483
      %s485 = ssub.s32 %s72, %s79
      %p486 = scmp.eq.s32.totalorder %s485, 0
      %s488 = sadd.s32 %s487, 1
      %s489 = scalar_select %p486, %s487, %s488
      %p492 = pneg %p486
      %p493 = scmp.eq.s32.totalorder %s64, 3
      %p494 = por %p492, %p493
      %p495 = scmp.ne.s32.totalorder %s487, %s490
      %p496 = scmp.eq.s32.totalorder %s64, 0
      %p497 = por %p495, %p496
      %p498 = scmp.ne.s32.totalorder %s487, %s490
      %p499 = scmp.eq.s32.totalorder %s69, 3
      %p500 = por %p498, %p499
      %p501 = scmp.ne.s32.totalorder %s490, %s491
      %p502 = scmp.eq.s32.totalorder %s69, 0
      %p503 = por %p501, %p502
      %p504 = scmp.ne.s32.totalorder %s490, %s491
      %p505 = scmp.eq.s32.totalorder %s70, 3
      %p506 = por %p504, %p505
      %p508 = scmp.ne.s32.totalorder %s491, %s507
      %p509 = scmp.eq.s32.totalorder %s70, 0
      %p510 = por %p508, %p509
      %s511 = ssub.s32 %s72, %s79
      %p512 = scmp.eq.s32.totalorder %s511, 0
      %s514 = sadd.s32 %s513, 1
      %s515 = scalar_select %p512, %s513, %s514
      %p518 = pneg %p512
      %p519 = scmp.eq.s32.totalorder %s64, 3
      %p520 = por %p518, %p519
      %p521 = scmp.ne.s32.totalorder %s513, %s516
      %p522 = scmp.eq.s32.totalorder %s64, 0
      %p523 = por %p521, %p522
      %p524 = scmp.ne.s32.totalorder %s513, %s516
      %p525 = scmp.eq.s32.totalorder %s69, 3
      %p526 = por %p524, %p525
      %p527 = scmp.ne.s32.totalorder %s516, %s517
      %p528 = scmp.eq.s32.totalorder %s69, 0
      %p529 = por %p527, %p528
      %p530 = scmp.ne.s32.totalorder %s516, %s517
      %p531 = scmp.eq.s32.totalorder %s70, 3
      %p532 = por %p530, %p531
      %p534 = scmp.ne.s32.totalorder %s517, %s533
      %p535 = scmp.eq.s32.totalorder %s70, 0
      %p536 = por %p534, %p535
      %s537 = ssub.s32 %s72, %s79
      %p538 = scmp.eq.s32.totalorder %s537, 0
      %s540 = sadd.s32 %s539, 1
      %s541 = scalar_select %p538, %s539, %s540
      %p544 = pneg %p538
      %p545 = scmp.eq.s32.totalorder %s64, 3
      %p546 = por %p544, %p545
      %p547 = scmp.ne.s32.totalorder %s539, %s542
      %p548 = scmp.eq.s32.totalorder %s64, 0
      %p549 = por %p547, %p548
      %p550 = scmp.ne.s32.totalorder %s539, %s542
      %p551 = scmp.eq.s32.totalorder %s69, 3
      %p552 = por %p550, %p551
      %p553 = scmp.ne.s32.totalorder %s542, %s543
      %p554 = scmp.eq.s32.totalorder %s69, 0
      %p555 = por %p553, %p554
      %p556 = scmp.ne.s32.totalorder %s542, %s543
      %p557 = scmp.eq.s32.totalorder %s70, 3
      %p558 = por %p556, %p557
      %p560 = scmp.ne.s32.totalorder %s543, %s559
      %p561 = scmp.eq.s32.totalorder %s70, 0
      %p562 = por %p560, %p561
      %s563 = ssub.s32 %s72, %s79
      %p564 = scmp.eq.s32.totalorder %s563, 0
      %s566 = sadd.s32 %s565, 1
      %s567 = scalar_select %p564, %s565, %s566
      %p570 = pneg %p564
      %p571 = scmp.eq.s32.totalorder %s64, 3
      %p572 = por %p570, %p571
      %p573 = scmp.ne.s32.totalorder %s565, %s568
      %p574 = scmp.eq.s32.totalorder %s64, 0
      %p575 = por %p573, %p574
      %p576 = scmp.ne.s32.totalorder %s565, %s568
      %p577 = scmp.eq.s32.totalorder %s69, 3
      %p578 = por %p576, %p577
      %p579 = scmp.ne.s32.totalorder %s568, %s569
      %p580 = scmp.eq.s32.totalorder %s69, 0
      %p581 = por %p579, %p580
      %p582 = scmp.ne.s32.totalorder %s568, %s569
      %p583 = scmp.eq.s32.totalorder %s70, 3
      %p584 = por %p582, %p583
      %p586 = scmp.ne.s32.totalorder %s569, %s585
      %p587 = scmp.eq.s32.totalorder %s70, 0
      %p588 = por %p586, %p587
      %s589 = ssub.s32 %s72, %s79
      %p590 = scmp.eq.s32.totalorder %s589, 0
      %s592 = sadd.s32 %s591, 1
      %s593 = scalar_select %p590, %s591, %s592
      %p596 = pneg %p590
      %p597 = scmp.eq.s32.totalorder %s64, 3
      %p598 = por %p596, %p597
      %p599 = scmp.ne.s32.totalorder %s591, %s594
      %p600 = scmp.eq.s32.totalorder %s64, 0
      %p601 = por %p599, %p600
      %p602 = scmp.ne.s32.totalorder %s591, %s594
      %p603 = scmp.eq.s32.totalorder %s69, 3
      %p604 = por %p602, %p603
      %p605 = scmp.ne.s32.totalorder %s594, %s595
      %p606 = scmp.eq.s32.totalorder %s69, 0
      %p607 = por %p605, %p606
      %p608 = scmp.ne.s32.totalorder %s594, %s595
      %p609 = scmp.eq.s32.totalorder %s70, 3
      %p610 = por %p608, %p609
      %p612 = scmp.ne.s32.totalorder %s595, %s611
      %p613 = scmp.eq.s32.totalorder %s70, 0
      %p614 = por %p612, %p613
      %s616 = sadd.s32 %s615, 1
      %p619 = scmp.eq.s32.totalorder %s64, 3
      %p620 = scmp.ne.s32.totalorder %s615, %s617
      %p621 = scmp.eq.s32.totalorder %s64, 0
      %p622 = por %p620, %p621
      %p623 = scmp.ne.s32.totalorder %s615, %s617
      %p624 = scmp.eq.s32.totalorder %s69, 3
      %p625 = por %p623, %p624
      %p626 = scmp.ne.s32.totalorder %s617, %s618
      %p627 = scmp.eq.s32.totalorder %s69, 0
      %p628 = por %p626, %p627
      %p629 = scmp.ne.s32.totalorder %s617, %s618
      %p630 = scmp.eq.s32.totalorder %s70, 3
      %p631 = por %p629, %p630
      %p633 = scmp.ne.s32.totalorder %s618, %s632
      %p634 = scmp.eq.s32.totalorder %s70, 0
      %p635 = por %p633, %p634
      %s637 = sadd.s32 %s636, 1
      %p640 = scmp.eq.s32.totalorder %s64, 3
      %p641 = scmp.ne.s32.totalorder %s636, %s638
      %p642 = scmp.eq.s32.totalorder %s64, 0
      %p643 = por %p641, %p642
      %p644 = scmp.ne.s32.totalorder %s636, %s638
      %p645 = scmp.eq.s32.totalorder %s69, 3
      %p646 = por %p644, %p645
      %p647 = scmp.ne.s32.totalorder %s638, %s639
      %p648 = scmp.eq.s32.totalorder %s69, 0
      %p649 = por %p647, %p648
      %p650 = scmp.ne.s32.totalorder %s638, %s639
      %p651 = scmp.eq.s32.totalorder %s70, 3
      %p652 = por %p650, %p651
      %p654 = scmp.ne.s32.totalorder %s639, %s653
      %p655 = scmp.eq.s32.totalorder %s70, 0
      %p656 = por %p654, %p655
      %s657 = ssub.s32 %s71, %s83
      %p658 = scmp.eq.s32.totalorder %s657, 0
      %s660 = sadd.s32 %s659, 1
      %s661 = scalar_select %p658, %s659, %s660
      %p664 = pneg %p658
      %p665 = scmp.eq.s32.totalorder %s64, 3
      %p666 = por %p664, %p665
      %p667 = scmp.ne.s32.totalorder %s659, %s662
      %p668 = scmp.eq.s32.totalorder %s64, 0
      %p669 = por %p667, %p668
      %p670 = scmp.ne.s32.totalorder %s659, %s662
      %p671 = scmp.eq.s32.totalorder %s69, 3
      %p672 = por %p670, %p671
      %p673 = scmp.ne.s32.totalorder %s662, %s663
      %p674 = scmp.eq.s32.totalorder %s69, 0
      %p675 = por %p673, %p674
      %p676 = scmp.ne.s32.totalorder %s662, %s663
      %p677 = scmp.eq.s32.totalorder %s70, 3
      %p678 = por %p676, %p677
      %p680 = scmp.ne.s32.totalorder %s663, %s679
      %p681 = scmp.eq.s32.totalorder %s70, 0
      %p682 = por %p680, %p681
      %p683 = scmp.le.s32.totalorder 1, %s64
      %p684 = scmp.lt.s32.totalorder %s64, 5
      %p685 = pnand %p683, %p684
      %p686 = pneg %p685
      // Predicated region
      $region9: #{tvtsbert_prediction_forward.1} parent=5 // pred_check
        _
      $region10: #{tvtsbert_prediction_forward.1} parent=5 // pred_check_branch
        %688 = sbr.rel (%p685) target = $region12
      $region11: #{tvtsbert_prediction_forward.1} parent=5 // pred_region
        %s689 = ssub.s32 %s64, 1
        // Predicated region
        $region13: #{tvtsbert_prediction_forward.1} parent=11 // pred_check
          %p690 = pneg %p149
        $region14: #{tvtsbert_prediction_forward.1} parent=11 // pred_check_branch
          %692 = sbr.rel (%p690) target = $region16
        $region15: #{tvtsbert_prediction_forward.1} parent=11 // pred_region
          %s694 = ssub.s32 32, 32
          %695 = vsyncadd [#allocation8], %s694
          %s697 = sshll.u32 [#allocation9], 4
          %s698 = int_to_ptr.vmem [resolvable:$true] %s697
          %700 = dma.hbm_to_vmem [thread:$0]  %s2, 32, %s698, [#allocation8]
        $region16: #{tvtsbert_prediction_forward.1} parent=11 // pred_fallthru
          _
        // Predicated region
        $region17: #{tvtsbert_prediction_forward.1} parent=11 // pred_check
          %p701 = pneg %p170
        $region18: #{tvtsbert_prediction_forward.1} parent=11 // pred_check_branch
          %703 = sbr.rel (%p701) target = $region20
        $region19: #{tvtsbert_prediction_forward.1} parent=11 // pred_region
          %s705 = ssub.s32 16, 16
          %706 = vsyncadd [#allocation11], %s705
          %s708 = sshll.u32 [#allocation10], 4
          %s709 = int_to_ptr.vmem [resolvable:$true] %s708
          %711 = dma.hbm_to_vmem [thread:$0]  %s3, 16, %s709, [#allocation11]
        $region20: #{tvtsbert_prediction_forward.1} parent=11 // pred_fallthru
          _
        // Predicated region
        $region21: #{tvtsbert_prediction_forward.1} parent=11 // pred_check
          %p712 = pneg %p191
        $region22: #{tvtsbert_prediction_forward.1} parent=11 // pred_check_branch
          %714 = sbr.rel (%p712) target = $region24
        $region23: #{tvtsbert_prediction_forward.1} parent=11 // pred_region
          %s716 = ssub.s32 128, 128
          %717 = vsyncadd [#allocation11], %s716
          %s719 = sshll.u32 [#allocation12], 4
          %s720 = int_to_ptr.vmem [resolvable:$true] %s719
          %722 = dma.hbm_to_vmem [thread:$0]  %s4, 128, %s720, [#allocation11]
        $region24: #{tvtsbert_prediction_forward.1} parent=11 // pred_fallthru
          _
        // Predicated region
        $region25: #{tvtsbert_prediction_forward.1} parent=11 // pred_check
          %p723 = pneg %p628
        $region26: #{tvtsbert_prediction_forward.1} parent=11 // pred_check_branch
          %725 = sbr.rel (%p723) target = $region28
        $region27: #{tvtsbert_prediction_forward.1} parent=11 // pred_region
          %s727 = ssub.s32 256, 256
          %728 = vsyncadd [#allocation38], %s727
          %s729 = sshll.u32 [#allocation37], 4
          %s730 = int_to_ptr.vmem [resolvable:$true] %s729
          %735 = dma.hbm_to_vmem [thread:$0]  %s21, 256, %s730, [#allocation38], 64, 64, 4
        $region28: #{tvtsbert_prediction_forward.1} parent=11 // pred_fallthru
          _
        // Predicated region
        $region29: #{tvtsbert_prediction_forward.1} parent=11 // pred_check
          %p736 = pneg %p649
        $region30: #{tvtsbert_prediction_forward.1} parent=11 // pred_check_branch
          %738 = sbr.rel (%p736) target = $region32
        $region31: #{tvtsbert_prediction_forward.1} parent=11 // pred_region
          %s740 = ssub.s32 16, 16
          %741 = vsyncadd [#allocation38], %s740
          %s743 = sshll.u32 [#allocation39], 4
          %s744 = int_to_ptr.vmem [resolvable:$true] %s743
          %746 = dma.hbm_to_vmem [thread:$0]  %s22, 16, %s744, [#allocation38]
        $region32: #{tvtsbert_prediction_forward.1} parent=11 // pred_fallthru
          _
      $region12: #{tvtsbert_prediction_forward.1} parent=5 // pred_fallthru
        _
      %p747 = scmp.lt.s32.totalorder %s64, 4
      // Predicated region
      $region33: #{tvtsbert_prediction_forward.1} parent=5 // pred_check
        %p748 = pneg %p747
      $region34: #{tvtsbert_prediction_forward.1} parent=5 // pred_check_branch
        %750 = sbr.rel (%p748) target = $region36
      $region35: #{tvtsbert_prediction_forward.1} parent=5 // pred_region
        // Predicated region
        $region37: #{tvtsbert_prediction_forward.1} parent=35 // pred_check
          %p751 = pneg %p96
        $region38: #{tvtsbert_prediction_forward.1} parent=35 // pred_check_branch
          %753 = sbr.rel (%p751) target = $region40
        $region39: #{tvtsbert_prediction_forward.1} parent=35 // pred_region
          %s754 = sand.u32 %s86, 1
          %s755 = scalar_lea.sflag [#allocation5], %s754
          %s756 = sand.u32 %s86, 1
          %s757 = smul.addr %s756, 8
          %s758 = scalar_lea.vmem [#allocation4], %s757
          %s760 = ssub.s32 128, 128
          %761 = vsyncadd %s755, %s760
          %s762 = smul.addr %s71, 128
          %s763 = scalar_lea.hbm %s0, %s762
          %s765 = sshll.u32 %s758, 4
          %s766 = int_to_ptr.vmem [resolvable:$true] %s765
          %768 = dma.hbm_to_vmem [thread:$0]  %s763, 128, %s766, %s755
        $region40: #{tvtsbert_prediction_forward.1} parent=35 // pred_fallthru
          _
        // Predicated region
        $region41: #{tvtsbert_prediction_forward.1} parent=35 // pred_check
          %p769 = pneg %p122
        $region42: #{tvtsbert_prediction_forward.1} parent=35 // pred_check_branch
          %771 = sbr.rel (%p769) target = $region44
        $region43: #{tvtsbert_prediction_forward.1} parent=35 // pred_region
          %s772 = sand.u32 %s64, 1
          %s773 = scalar_lea.sflag [#allocation8], %s772
          %s774 = sand.u32 %s112, 1
          %s775 = scalar_lea.vmem [#allocation7], %s774
          %s777 = ssub.s32 16, 16
          %778 = vsyncadd %s773, %s777
          %s779 = smul.addr %s71, 16
          %s780 = scalar_lea.hbm %s1, %s779
          %s782 = sshll.u32 %s775, 4
          %s783 = int_to_ptr.vmem [resolvable:$true] %s782
          %785 = dma.hbm_to_vmem [thread:$0]  %s780, 16, %s783, %s773
        $region44: #{tvtsbert_prediction_forward.1} parent=35 // pred_fallthru
          _
        // Predicated region
        $region45: #{tvtsbert_prediction_forward.1} parent=35 // pred_check
          %p786 = pneg %p211
        $region46: #{tvtsbert_prediction_forward.1} parent=35 // pred_check_branch
          %788 = sbr.rel (%p786) target = $region48
        $region47: #{tvtsbert_prediction_forward.1} parent=35 // pred_region
          %s789 = sand.u32 %s64, 1
          %s790 = scalar_lea.sflag [#allocation14], %s789
          %s791 = sand.u32 %s201, 1
          %s792 = scalar_lea.vmem [#allocation13], %s791
          %s794 = ssub.s32 16, 16
          %795 = vsyncadd %s790, %s794
          %s796 = smul.addr %s72, 16
          %s797 = scalar_lea.hbm %s5, %s796
          %s799 = sshll.u32 %s792, 4
          %s800 = int_to_ptr.vmem [resolvable:$true] %s799
          %802 = dma.hbm_to_vmem [thread:$0]  %s797, 16, %s800, %s790
        $region48: #{tvtsbert_prediction_forward.1} parent=35 // pred_fallthru
          _
        // Predicated region
        $region49: #{tvtsbert_prediction_forward.1} parent=35 // pred_check
          %p803 = pneg %p237
        $region50: #{tvtsbert_prediction_forward.1} parent=35 // pred_check_branch
          %805 = sbr.rel (%p803) target = $region52
        $region51: #{tvtsbert_prediction_forward.1} parent=35 // pred_region
          %s806 = sand.u32 %s64, 1
          %s807 = scalar_lea.sflag [#allocation14], %s806
          %s808 = sand.u32 %s227, 1
          %s809 = scalar_lea.vmem [#allocation15], %s808
          %s811 = ssub.s32 16, 16
          %812 = vsyncadd %s807, %s811
          %s813 = smul.addr %s72, 16
          %s814 = scalar_lea.hbm %s6, %s813
          %s816 = sshll.u32 %s809, 4
          %s817 = int_to_ptr.vmem [resolvable:$true] %s816
          %819 = dma.hbm_to_vmem [thread:$0]  %s814, 16, %s817, %s807
        $region52: #{tvtsbert_prediction_forward.1} parent=35 // pred_fallthru
          _
        // Predicated region
        $region53: #{tvtsbert_prediction_forward.1} parent=35 // pred_check
          %p820 = pneg %p263
        $region54: #{tvtsbert_prediction_forward.1} parent=35 // pred_check_branch
          %822 = sbr.rel (%p820) target = $region56
        $region55: #{tvtsbert_prediction_forward.1} parent=35 // pred_region
          %s823 = sand.u32 %s64, 1
          %s824 = scalar_lea.sflag [#allocation17], %s823
          %s825 = sand.u32 %s253, 1
          %s826 = smul.addr %s825, 16
          %s827 = scalar_lea.vmem [#allocation16], %s826
          %s829 = ssub.s32 256, 256
          %830 = vsyncadd %s824, %s829
          %s831 = smul.addr %s72, 4
          %s832 = smul.addr %s831, 64
          %s833 = scalar_lea.hbm %s7, %s832
          %s834 = sshll.u32 %s827, 4
          %s835 = int_to_ptr.vmem [resolvable:$true] %s834
          %840 = dma.hbm_to_vmem [thread:$0]  %s833, 256, %s835, %s824, 64, 64, 4
        $region56: #{tvtsbert_prediction_forward.1} parent=35 // pred_fallthru
          _
        // Predicated region
        $region57: #{tvtsbert_prediction_forward.1} parent=35 // pred_check
          %p841 = pneg %p289
        $region58: #{tvtsbert_prediction_forward.1} parent=35 // pred_check_branch
          %843 = sbr.rel (%p841) target = $region60
        $region59: #{tvtsbert_prediction_forward.1} parent=35 // pred_region
          %s844 = sand.u32 %s64, 1
          %s845 = scalar_lea.sflag [#allocation17], %s844
          %s846 = sand.u32 %s279, 1
          %s847 = scalar_lea.vmem [#allocation18], %s846
          %s849 = ssub.s32 16, 16
          %850 = vsyncadd %s845, %s849
          %s851 = smul.addr %s72, 16
          %s852 = scalar_lea.hbm %s8, %s851
          %s854 = sshll.u32 %s847, 4
          %s855 = int_to_ptr.vmem [resolvable:$true] %s854
          %857 = dma.hbm_to_vmem [thread:$0]  %s852, 16, %s855, %s845
        $region60: #{tvtsbert_prediction_forward.1} parent=35 // pred_fallthru
          _
        // Predicated region
        $region61: #{tvtsbert_prediction_forward.1} parent=35 // pred_check
          %p858 = pneg %p315
        $region62: #{tvtsbert_prediction_forward.1} parent=35 // pred_check_branch
          %860 = sbr.rel (%p858) target = $region64
        $region63: #{tvtsbert_prediction_forward.1} parent=35 // pred_region
          %s861 = sand.u32 %s64, 1
          %s862 = scalar_lea.sflag [#allocation20], %s861
          %s863 = sand.u32 %s305, 1
          %s864 = smul.addr %s863, 16
          %s865 = scalar_lea.vmem [#allocation19], %s864
          %s867 = ssub.s32 256, 256
          %868 = vsyncadd %s862, %s867
          %s869 = smul.addr %s72, 4
          %s870 = smul.addr %s869, 64
          %s871 = scalar_lea.hbm %s9, %s870
          %s872 = sshll.u32 %s865, 4
          %s873 = int_to_ptr.vmem [resolvable:$true] %s872
          %878 = dma.hbm_to_vmem [thread:$0]  %s871, 256, %s873, %s862, 64, 64, 4
        $region64: #{tvtsbert_prediction_forward.1} parent=35 // pred_fallthru
          _
        // Predicated region
        $region65: #{tvtsbert_prediction_forward.1} parent=35 // pred_check
          %p879 = pneg %p341
        $region66: #{tvtsbert_prediction_forward.1} parent=35 // pred_check_branch
          %881 = sbr.rel (%p879) target = $region68
        $region67: #{tvtsbert_prediction_forward.1} parent=35 // pred_region
          %s882 = sand.u32 %s64, 1
          %s883 = scalar_lea.sflag [#allocation20], %s882
          %s884 = sand.u32 %s331, 1
          %s885 = scalar_lea.vmem [#allocation21], %s884
          %s887 = ssub.s32 16, 16
          %888 = vsyncadd %s883, %s887
          %s889 = smul.addr %s72, 16
          %s890 = scalar_lea.hbm %s10, %s889
          %s892 = sshll.u32 %s885, 4
          %s893 = int_to_ptr.vmem [resolvable:$true] %s892
          %895 = dma.hbm_to_vmem [thread:$0]  %s890, 16, %s893, %s883
        $region68: #{tvtsbert_prediction_forward.1} parent=35 // pred_fallthru
          _
        // Predicated region
        $region69: #{tvtsbert_prediction_forward.1} parent=35 // pred_check
          %p896 = pneg %p367
        $region70: #{tvtsbert_prediction_forward.1} parent=35 // pred_check_branch
          %898 = sbr.rel (%p896) target = $region72
        $region71: #{tvtsbert_prediction_forward.1} parent=35 // pred_region
          %s899 = sand.u32 %s64, 1
          %s900 = scalar_lea.sflag [#allocation23], %s899
          %s901 = sand.u32 %s357, 1
          %s902 = smul.addr %s901, 16
          %s903 = scalar_lea.vmem [#allocation22], %s902
          %s905 = ssub.s32 256, 256
          %906 = vsyncadd %s900, %s905
          %s907 = smul.addr %s72, 4
          %s908 = smul.addr %s907, 64
          %s909 = scalar_lea.hbm %s11, %s908
          %s910 = sshll.u32 %s903, 4
          %s911 = int_to_ptr.vmem [resolvable:$true] %s910
          %916 = dma.hbm_to_vmem [thread:$0]  %s909, 256, %s911, %s900, 64, 64, 4
        $region72: #{tvtsbert_prediction_forward.1} parent=35 // pred_fallthru
          _
        // Predicated region
        $region73: #{tvtsbert_prediction_forward.1} parent=35 // pred_check
          %p917 = pneg %p393
        $region74: #{tvtsbert_prediction_forward.1} parent=35 // pred_check_branch
          %919 = sbr.rel (%p917) target = $region76
        $region75: #{tvtsbert_prediction_forward.1} parent=35 // pred_region
          %s920 = sand.u32 %s64, 1
          %s921 = scalar_lea.sflag [#allocation23], %s920
          %s922 = sand.u32 %s383, 1
          %s923 = scalar_lea.vmem [#allocation24], %s922
          %s925 = ssub.s32 16, 16
          %926 = vsyncadd %s921, %s925
          %s927 = smul.addr %s72, 16
          %s928 = scalar_lea.hbm %s12, %s927
          %s930 = sshll.u32 %s923, 4
          %s931 = int_to_ptr.vmem [resolvable:$true] %s930
          %933 = dma.hbm_to_vmem [thread:$0]  %s928, 16, %s931, %s921
        $region76: #{tvtsbert_prediction_forward.1} parent=35 // pred_fallthru
          _
        // Predicated region
        $region77: #{tvtsbert_prediction_forward.1} parent=35 // pred_check
          %p934 = pneg %p419
        $region78: #{tvtsbert_prediction_forward.1} parent=35 // pred_check_branch
          %936 = sbr.rel (%p934) target = $region80
        $region79: #{tvtsbert_prediction_forward.1} parent=35 // pred_region
          %s937 = sand.u32 %s64, 1
          %s938 = scalar_lea.sflag [#allocation26], %s937
          %s939 = sand.u32 %s409, 1
          %s940 = smul.addr %s939, 16
          %s941 = scalar_lea.vmem [#allocation25], %s940
          %s943 = ssub.s32 256, 256
          %944 = vsyncadd %s938, %s943
          %s945 = smul.addr %s72, 4
          %s946 = smul.addr %s945, 64
          %s947 = scalar_lea.hbm %s13, %s946
          %s948 = sshll.u32 %s941, 4
          %s949 = int_to_ptr.vmem [resolvable:$true] %s948
          %954 = dma.hbm_to_vmem [thread:$0]  %s947, 256, %s949, %s938, 64, 64, 4
        $region80: #{tvtsbert_prediction_forward.1} parent=35 // pred_fallthru
          _
        // Predicated region
        $region81: #{tvtsbert_prediction_forward.1} parent=35 // pred_check
          %p955 = pneg %p445
        $region82: #{tvtsbert_prediction_forward.1} parent=35 // pred_check_branch
          %957 = sbr.rel (%p955) target = $region84
        $region83: #{tvtsbert_prediction_forward.1} parent=35 // pred_region
          %s958 = sand.u32 %s64, 1
          %s959 = scalar_lea.sflag [#allocation26], %s958
          %s960 = sand.u32 %s435, 1
          %s961 = scalar_lea.vmem [#allocation27], %s960
          %s963 = ssub.s32 16, 16
          %964 = vsyncadd %s959, %s963
          %s965 = smul.addr %s72, 16
          %s966 = scalar_lea.hbm %s14, %s965
          %s968 = sshll.u32 %s961, 4
          %s969 = int_to_ptr.vmem [resolvable:$true] %s968
          %971 = dma.hbm_to_vmem [thread:$0]  %s966, 16, %s969, %s959
        $region84: #{tvtsbert_prediction_forward.1} parent=35 // pred_fallthru
          _
        // Predicated region
        $region85: #{tvtsbert_prediction_forward.1} parent=35 // pred_check
          %p972 = pneg %p471
        $region86: #{tvtsbert_prediction_forward.1} parent=35 // pred_check_branch
          %974 = sbr.rel (%p972) target = $region88
        $region87: #{tvtsbert_prediction_forward.1} parent=35 // pred_region
          %s975 = sand.u32 %s64, 1
          %s976 = scalar_lea.sflag [#allocation29], %s975
          %s977 = sand.u32 %s461, 1
          %s978 = scalar_lea.vmem [#allocation28], %s977
          %s980 = ssub.s32 16, 16
          %981 = vsyncadd %s976, %s980
          %s982 = smul.addr %s72, 16
          %s983 = scalar_lea.hbm %s15, %s982
          %s985 = sshll.u32 %s978, 4
          %s986 = int_to_ptr.vmem [resolvable:$true] %s985
          %988 = dma.hbm_to_vmem [thread:$0]  %s983, 16, %s986, %s976
        $region88: #{tvtsbert_prediction_forward.1} parent=35 // pred_fallthru
          _
        // Predicated region
        $region89: #{tvtsbert_prediction_forward.1} parent=35 // pred_check
          %p989 = pneg %p497
        $region90: #{tvtsbert_prediction_forward.1} parent=35 // pred_check_branch
          %991 = sbr.rel (%p989) target = $region92
        $region91: #{tvtsbert_prediction_forward.1} parent=35 // pred_region
          %s992 = sand.u32 %s64, 1
          %s993 = scalar_lea.sflag [#allocation29], %s992
          %s994 = sand.u32 %s487, 1
          %s995 = scalar_lea.vmem [#allocation30], %s994
          %s997 = ssub.s32 16, 16
          %998 = vsyncadd %s993, %s997
          %s999 = smul.addr %s72, 16
          %s1000 = scalar_lea.hbm %s16, %s999
          %s1002 = sshll.u32 %s995, 4
          %s1003 = int_to_ptr.vmem [resolvable:$true] %s1002
          %1005 = dma.hbm_to_vmem [thread:$0]  %s1000, 16, %s1003, %s993
        $region92: #{tvtsbert_prediction_forward.1} parent=35 // pred_fallthru
          _
        // Predicated region
        $region93: #{tvtsbert_prediction_forward.1} parent=35 // pred_check
          %p1006 = pneg %p523
        $region94: #{tvtsbert_prediction_forward.1} parent=35 // pred_check_branch
          %1008 = sbr.rel (%p1006) target = $region96
        $region95: #{tvtsbert_prediction_forward.1} parent=35 // pred_region
          %s1009 = sand.u32 %s64, 1
          %s1010 = scalar_lea.sflag [#allocation32], %s1009
          %s1011 = sand.u32 %s513, 1
          %s1012 = smul.addr %s1011, 16
          %s1013 = scalar_lea.vmem [#allocation31], %s1012
          %s1015 = ssub.s32 256, 256
          %1016 = vsyncadd %s1010, %s1015
          %s1017 = smul.addr %s72, 4
          %s1018 = smul.addr %s1017, 64
          %s1019 = scalar_lea.hbm %s17, %s1018
          %s1020 = sshll.u32 %s1013, 4
          %s1021 = int_to_ptr.vmem [resolvable:$true] %s1020
          %1026 = dma.hbm_to_vmem [thread:$0]  %s1019, 256, %s1021, %s1010, 64, 64, 4
        $region96: #{tvtsbert_prediction_forward.1} parent=35 // pred_fallthru
          _
        // Predicated region
        $region97: #{tvtsbert_prediction_forward.1} parent=35 // pred_check
          %p1027 = pneg %p549
        $region98: #{tvtsbert_prediction_forward.1} parent=35 // pred_check_branch
          %1029 = sbr.rel (%p1027) target = $region100
        $region99: #{tvtsbert_prediction_forward.1} parent=35 // pred_region
          %s1030 = sand.u32 %s64, 1
          %s1031 = scalar_lea.sflag [#allocation32], %s1030
          %s1032 = sand.u32 %s539, 1
          %s1033 = scalar_lea.vmem [#allocation33], %s1032
          %s1035 = ssub.s32 16, 16
          %1036 = vsyncadd %s1031, %s1035
          %s1037 = smul.addr %s72, 16
          %s1038 = scalar_lea.hbm %s18, %s1037
          %s1040 = sshll.u32 %s1033, 4
          %s1041 = int_to_ptr.vmem [resolvable:$true] %s1040
          %1043 = dma.hbm_to_vmem [thread:$0]  %s1038, 16, %s1041, %s1031
        $region100: #{tvtsbert_prediction_forward.1} parent=35 // pred_fallthru
          _
        // Predicated region
        $region101: #{tvtsbert_prediction_forward.1} parent=35 // pred_check
          %p1044 = pneg %p575
        $region102: #{tvtsbert_prediction_forward.1} parent=35 // pred_check_branch
          %1046 = sbr.rel (%p1044) target = $region104
        $region103: #{tvtsbert_prediction_forward.1} parent=35 // pred_region
          %s1047 = sand.u32 %s64, 1
          %s1048 = scalar_lea.sflag [#allocation35], %s1047
          %s1049 = sand.u32 %s565, 1
          %s1050 = smul.addr %s1049, 64
          %s1051 = scalar_lea.vmem [#allocation34], %s1050
          %s1053 = ssub.s32 1024, 1024
          %1054 = vsyncadd %s1048, %s1053
          %s1055 = smul.addr %s72, 16
          %s1056 = smul.addr %s1055, 64
          %s1057 = scalar_lea.hbm %s19, %s1056
          %s1058 = sshll.u32 %s1051, 4
          %s1059 = int_to_ptr.vmem [resolvable:$true] %s1058
          %1064 = dma.hbm_to_vmem [thread:$0]  %s1057, 1024, %s1059, %s1048, 64, 64, 4
        $region104: #{tvtsbert_prediction_forward.1} parent=35 // pred_fallthru
          _
        // Predicated region
        $region105: #{tvtsbert_prediction_forward.1} parent=35 // pred_check
          %p1065 = pneg %p601
        $region106: #{tvtsbert_prediction_forward.1} parent=35 // pred_check_branch
          %1067 = sbr.rel (%p1065) target = $region108
        $region107: #{tvtsbert_prediction_forward.1} parent=35 // pred_region
          %s1068 = sand.u32 %s64, 1
          %s1069 = scalar_lea.sflag [#allocation35], %s1068
          %s1070 = sand.u32 %s591, 1
          %s1071 = scalar_lea.vmem [#allocation36], %s1070
          %s1073 = ssub.s32 16, 16
          %1074 = vsyncadd %s1069, %s1073
          %s1075 = smul.addr %s72, 16
          %s1076 = scalar_lea.hbm %s20, %s1075
          %s1078 = sshll.u32 %s1071, 4
          %s1079 = int_to_ptr.vmem [resolvable:$true] %s1078
          %1081 = dma.hbm_to_vmem [thread:$0]  %s1076, 16, %s1079, %s1069
        $region108: #{tvtsbert_prediction_forward.1} parent=35 // pred_fallthru
          _
      $region36: #{tvtsbert_prediction_forward.1} parent=5 // pred_fallthru
        _
      %p1082 = scmp.le.s32.totalorder 1, %s64
      %p1083 = scmp.lt.s32.totalorder %s64, 5
      %p1084 = pnand %p1082, %p1083
      %p1085 = pneg %p1084
      // Predicated region
      $region109: #{tvtsbert_prediction_forward.1} parent=5 // pred_check
        _
      $region110: #{tvtsbert_prediction_forward.1} parent=5 // pred_check_branch
        %1087 = sbr.rel (%p1084) target = $region112
      $region111: #{tvtsbert_prediction_forward.1} parent=5 // pred_region
        %s1088 = ssub.s32 %s64, 1
        %s1089 = sand.u32 %s89, 1
        %s1090 = scalar_lea.sflag [#allocation5], %s1089
        %s1091 = sand.u32 %s89, 1
        %s1092 = smul.addr %s1091, 8
        %s1093 = scalar_lea.vmem [#allocation4], %s1092
        // Predicated region
        $region113: #{tvtsbert_prediction_forward.1} parent=111 // pred_check
          %p1094 = pneg %p102
        $region114: #{tvtsbert_prediction_forward.1} parent=111 // pred_check_branch
          %1096 = sbr.rel (%p1094) target = $region116
        $region115: #{tvtsbert_prediction_forward.1} parent=111 // pred_region
          %1097 = dma.done %s1090, 128
        $region116: #{tvtsbert_prediction_forward.1} parent=111 // pred_fallthru
          _
        %s1098 = sand.u32 %s69, 1
        %s1099 = scalar_lea.sflag [#allocation8], %s1098
        %s1100 = sand.u32 %s115, 1
        %s1101 = scalar_lea.vmem [#allocation7], %s1100
        // Predicated region
        $region117: #{tvtsbert_prediction_forward.1} parent=111 // pred_check
          %p1102 = pneg %p128
        $region118: #{tvtsbert_prediction_forward.1} parent=111 // pred_check_branch
          %1104 = sbr.rel (%p1102) target = $region120
        $region119: #{tvtsbert_prediction_forward.1} parent=111 // pred_region
          %1105 = dma.done %s1099, 16
        $region120: #{tvtsbert_prediction_forward.1} parent=111 // pred_fallthru
          _
        // Predicated region
        $region121: #{tvtsbert_prediction_forward.1} parent=111 // pred_check
          %p1106 = pneg %p149
        $region122: #{tvtsbert_prediction_forward.1} parent=111 // pred_check_branch
          %1108 = sbr.rel (%p1106) target = $region124
        $region123: #{tvtsbert_prediction_forward.1} parent=111 // pred_region
          %1109 = dma.done [#allocation8], 32
        $region124: #{tvtsbert_prediction_forward.1} parent=111 // pred_fallthru
          _
        // Predicated region
        $region125: #{tvtsbert_prediction_forward.1} parent=111 // pred_check
          %p1110 = pneg %p170
        $region126: #{tvtsbert_prediction_forward.1} parent=111 // pred_check_branch
          %1112 = sbr.rel (%p1110) target = $region128
        $region127: #{tvtsbert_prediction_forward.1} parent=111 // pred_region
          %1113 = dma.done [#allocation11], 16
        $region128: #{tvtsbert_prediction_forward.1} parent=111 // pred_fallthru
          _
        // Predicated region
        $region129: #{tvtsbert_prediction_forward.1} parent=111 // pred_check
          %p1114 = pneg %p191
        $region130: #{tvtsbert_prediction_forward.1} parent=111 // pred_check_branch
          %1116 = sbr.rel (%p1114) target = $region132
        $region131: #{tvtsbert_prediction_forward.1} parent=111 // pred_region
          %1117 = dma.done [#allocation11], 128
        $region132: #{tvtsbert_prediction_forward.1} parent=111 // pred_fallthru
          _
        %s1118 = sand.u32 %s69, 1
        %s1119 = scalar_lea.sflag [#allocation14], %s1118
        %s1120 = sand.u32 %s204, 1
        %s1121 = scalar_lea.vmem [#allocation13], %s1120
        // Predicated region
        $region133: #{tvtsbert_prediction_forward.1} parent=111 // pred_check
          %p1122 = pneg %p217
        $region134: #{tvtsbert_prediction_forward.1} parent=111 // pred_check_branch
          %1124 = sbr.rel (%p1122) target = $region136
        $region135: #{tvtsbert_prediction_forward.1} parent=111 // pred_region
          %1125 = dma.done %s1119, 16
        $region136: #{tvtsbert_prediction_forward.1} parent=111 // pred_fallthru
          _
        %s1126 = sand.u32 %s69, 1
        %s1127 = scalar_lea.sflag [#allocation14], %s1126
        %s1128 = sand.u32 %s230, 1
        %s1129 = scalar_lea.vmem [#allocation15], %s1128
        // Predicated region
        $region137: #{tvtsbert_prediction_forward.1} parent=111 // pred_check
          %p1130 = pneg %p243
        $region138: #{tvtsbert_prediction_forward.1} parent=111 // pred_check_branch
          %1132 = sbr.rel (%p1130) target = $region140
        $region139: #{tvtsbert_prediction_forward.1} parent=111 // pred_region
          %1133 = dma.done %s1127, 16
        $region140: #{tvtsbert_prediction_forward.1} parent=111 // pred_fallthru
          _
        %s1134 = sand.u32 %s69, 1
        %s1135 = scalar_lea.sflag [#allocation17], %s1134
        %s1136 = sand.u32 %s256, 1
        %s1137 = smul.addr %s1136, 16
        %s1138 = scalar_lea.vmem [#allocation16], %s1137
        // Predicated region
        $region141: #{tvtsbert_prediction_forward.1} parent=111 // pred_check
          %p1139 = pneg %p269
        $region142: #{tvtsbert_prediction_forward.1} parent=111 // pred_check_branch
          %1141 = sbr.rel (%p1139) target = $region144
        $region143: #{tvtsbert_prediction_forward.1} parent=111 // pred_region
          %1142 = dma.done %s1135, 256
        $region144: #{tvtsbert_prediction_forward.1} parent=111 // pred_fallthru
          _
        %s1143 = sand.u32 %s69, 1
        %s1144 = scalar_lea.sflag [#allocation17], %s1143
        %s1145 = sand.u32 %s282, 1
        %s1146 = scalar_lea.vmem [#allocation18], %s1145
        // Predicated region
        $region145: #{tvtsbert_prediction_forward.1} parent=111 // pred_check
          %p1147 = pneg %p295
        $region146: #{tvtsbert_prediction_forward.1} parent=111 // pred_check_branch
          %1149 = sbr.rel (%p1147) target = $region148
        $region147: #{tvtsbert_prediction_forward.1} parent=111 // pred_region
          %1150 = dma.done %s1144, 16
        $region148: #{tvtsbert_prediction_forward.1} parent=111 // pred_fallthru
          _
        %s1151 = sand.u32 %s69, 1
        %s1152 = scalar_lea.sflag [#allocation20], %s1151
        %s1153 = sand.u32 %s308, 1
        %s1154 = smul.addr %s1153, 16
        %s1155 = scalar_lea.vmem [#allocation19], %s1154
        // Predicated region
        $region149: #{tvtsbert_prediction_forward.1} parent=111 // pred_check
          %p1156 = pneg %p321
        $region150: #{tvtsbert_prediction_forward.1} parent=111 // pred_check_branch
          %1158 = sbr.rel (%p1156) target = $region152
        $region151: #{tvtsbert_prediction_forward.1} parent=111 // pred_region
          %1159 = dma.done %s1152, 256
        $region152: #{tvtsbert_prediction_forward.1} parent=111 // pred_fallthru
          _
        %s1160 = sand.u32 %s69, 1
        %s1161 = scalar_lea.sflag [#allocation20], %s1160
        %s1162 = sand.u32 %s334, 1
        %s1163 = scalar_lea.vmem [#allocation21], %s1162
        // Predicated region
        $region153: #{tvtsbert_prediction_forward.1} parent=111 // pred_check
          %p1164 = pneg %p347
        $region154: #{tvtsbert_prediction_forward.1} parent=111 // pred_check_branch
          %1166 = sbr.rel (%p1164) target = $region156
        $region155: #{tvtsbert_prediction_forward.1} parent=111 // pred_region
          %1167 = dma.done %s1161, 16
        $region156: #{tvtsbert_prediction_forward.1} parent=111 // pred_fallthru
          _
        %s1168 = sand.u32 %s69, 1
        %s1169 = scalar_lea.sflag [#allocation23], %s1168
        %s1170 = sand.u32 %s360, 1
        %s1171 = smul.addr %s1170, 16
        %s1172 = scalar_lea.vmem [#allocation22], %s1171
        // Predicated region
        $region157: #{tvtsbert_prediction_forward.1} parent=111 // pred_check
          %p1173 = pneg %p373
        $region158: #{tvtsbert_prediction_forward.1} parent=111 // pred_check_branch
          %1175 = sbr.rel (%p1173) target = $region160
        $region159: #{tvtsbert_prediction_forward.1} parent=111 // pred_region
          %1176 = dma.done %s1169, 256
        $region160: #{tvtsbert_prediction_forward.1} parent=111 // pred_fallthru
          _
        %s1177 = sand.u32 %s69, 1
        %s1178 = scalar_lea.sflag [#allocation23], %s1177
        %s1179 = sand.u32 %s386, 1
        %s1180 = scalar_lea.vmem [#allocation24], %s1179
        // Predicated region
        $region161: #{tvtsbert_prediction_forward.1} parent=111 // pred_check
          %p1181 = pneg %p399
        $region162: #{tvtsbert_prediction_forward.1} parent=111 // pred_check_branch
          %1183 = sbr.rel (%p1181) target = $region164
        $region163: #{tvtsbert_prediction_forward.1} parent=111 // pred_region
          %1184 = dma.done %s1178, 16
        $region164: #{tvtsbert_prediction_forward.1} parent=111 // pred_fallthru
          _
        %s1185 = sand.u32 %s69, 1
        %s1186 = scalar_lea.sflag [#allocation26], %s1185
        %s1187 = sand.u32 %s412, 1
        %s1188 = smul.addr %s1187, 16
        %s1189 = scalar_lea.vmem [#allocation25], %s1188
        // Predicated region
        $region165: #{tvtsbert_prediction_forward.1} parent=111 // pred_check
          %p1190 = pneg %p425
        $region166: #{tvtsbert_prediction_forward.1} parent=111 // pred_check_branch
          %1192 = sbr.rel (%p1190) target = $region168
        $region167: #{tvtsbert_prediction_forward.1} parent=111 // pred_region
          %1193 = dma.done %s1186, 256
        $region168: #{tvtsbert_prediction_forward.1} parent=111 // pred_fallthru
          _
        %s1194 = sand.u32 %s69, 1
        %s1195 = scalar_lea.sflag [#allocation26], %s1194
        %s1196 = sand.u32 %s438, 1
        %s1197 = scalar_lea.vmem [#allocation27], %s1196
        // Predicated region
        $region169: #{tvtsbert_prediction_forward.1} parent=111 // pred_check
          %p1198 = pneg %p451
        $region170: #{tvtsbert_prediction_forward.1} parent=111 // pred_check_branch
          %1200 = sbr.rel (%p1198) target = $region172
        $region171: #{tvtsbert_prediction_forward.1} parent=111 // pred_region
          %1201 = dma.done %s1195, 16
        $region172: #{tvtsbert_prediction_forward.1} parent=111 // pred_fallthru
          _
        %s1202 = sand.u32 %s69, 1
        %s1203 = scalar_lea.sflag [#allocation29], %s1202
        %s1204 = sand.u32 %s464, 1
        %s1205 = scalar_lea.vmem [#allocation28], %s1204
        // Predicated region
        $region173: #{tvtsbert_prediction_forward.1} parent=111 // pred_check
          %p1206 = pneg %p477
        $region174: #{tvtsbert_prediction_forward.1} parent=111 // pred_check_branch
          %1208 = sbr.rel (%p1206) target = $region176
        $region175: #{tvtsbert_prediction_forward.1} parent=111 // pred_region
          %1209 = dma.done %s1203, 16
        $region176: #{tvtsbert_prediction_forward.1} parent=111 // pred_fallthru
          _
        %s1210 = sand.u32 %s69, 1
        %s1211 = scalar_lea.sflag [#allocation29], %s1210
        %s1212 = sand.u32 %s490, 1
        %s1213 = scalar_lea.vmem [#allocation30], %s1212
        // Predicated region
        $region177: #{tvtsbert_prediction_forward.1} parent=111 // pred_check
          %p1214 = pneg %p503
        $region178: #{tvtsbert_prediction_forward.1} parent=111 // pred_check_branch
          %1216 = sbr.rel (%p1214) target = $region180
        $region179: #{tvtsbert_prediction_forward.1} parent=111 // pred_region
          %1217 = dma.done %s1211, 16
        $region180: #{tvtsbert_prediction_forward.1} parent=111 // pred_fallthru
          _
        %s1218 = sand.u32 %s69, 1
        %s1219 = scalar_lea.sflag [#allocation32], %s1218
        %s1220 = sand.u32 %s516, 1
        %s1221 = smul.addr %s1220, 16
        %s1222 = scalar_lea.vmem [#allocation31], %s1221
        // Predicated region
        $region181: #{tvtsbert_prediction_forward.1} parent=111 // pred_check
          %p1223 = pneg %p529
        $region182: #{tvtsbert_prediction_forward.1} parent=111 // pred_check_branch
          %1225 = sbr.rel (%p1223) target = $region184
        $region183: #{tvtsbert_prediction_forward.1} parent=111 // pred_region
          %1226 = dma.done %s1219, 256
        $region184: #{tvtsbert_prediction_forward.1} parent=111 // pred_fallthru
          _
        %s1227 = sand.u32 %s69, 1
        %s1228 = scalar_lea.sflag [#allocation32], %s1227
        %s1229 = sand.u32 %s542, 1
        %s1230 = scalar_lea.vmem [#allocation33], %s1229
        // Predicated region
        $region185: #{tvtsbert_prediction_forward.1} parent=111 // pred_check
          %p1231 = pneg %p555
        $region186: #{tvtsbert_prediction_forward.1} parent=111 // pred_check_branch
          %1233 = sbr.rel (%p1231) target = $region188
        $region187: #{tvtsbert_prediction_forward.1} parent=111 // pred_region
          %1234 = dma.done %s1228, 16
        $region188: #{tvtsbert_prediction_forward.1} parent=111 // pred_fallthru
          _
        %s1235 = sand.u32 %s69, 1
        %s1236 = scalar_lea.sflag [#allocation35], %s1235
        %s1237 = sand.u32 %s568, 1
        %s1238 = smul.addr %s1237, 64
        %s1239 = scalar_lea.vmem [#allocation34], %s1238
        // Predicated region
        $region189: #{tvtsbert_prediction_forward.1} parent=111 // pred_check
          %p1240 = pneg %p581
        $region190: #{tvtsbert_prediction_forward.1} parent=111 // pred_check_branch
          %1242 = sbr.rel (%p1240) target = $region192
        $region191: #{tvtsbert_prediction_forward.1} parent=111 // pred_region
          %1243 = dma.done %s1236, 1024
        $region192: #{tvtsbert_prediction_forward.1} parent=111 // pred_fallthru
          _
        %s1244 = sand.u32 %s69, 1
        %s1245 = scalar_lea.sflag [#allocation35], %s1244
        %s1246 = sand.u32 %s594, 1
        %s1247 = scalar_lea.vmem [#allocation36], %s1246
        // Predicated region
        $region193: #{tvtsbert_prediction_forward.1} parent=111 // pred_check
          %p1248 = pneg %p607
        $region194: #{tvtsbert_prediction_forward.1} parent=111 // pred_check_branch
          %1250 = sbr.rel (%p1248) target = $region196
        $region195: #{tvtsbert_prediction_forward.1} parent=111 // pred_region
          %1251 = dma.done %s1245, 16
        $region196: #{tvtsbert_prediction_forward.1} parent=111 // pred_fallthru
          _
        // Predicated region
        $region197: #{tvtsbert_prediction_forward.1} parent=111 // pred_check
          %p1252 = pneg %p628
        $region198: #{tvtsbert_prediction_forward.1} parent=111 // pred_check_branch
          %1254 = sbr.rel (%p1252) target = $region200
        $region199: #{tvtsbert_prediction_forward.1} parent=111 // pred_region
          %1255 = dma.done [#allocation38], 256
        $region200: #{tvtsbert_prediction_forward.1} parent=111 // pred_fallthru
          _
        // Predicated region
        $region201: #{tvtsbert_prediction_forward.1} parent=111 // pred_check
          %p1256 = pneg %p649
        $region202: #{tvtsbert_prediction_forward.1} parent=111 // pred_check_branch
          %1258 = sbr.rel (%p1256) target = $region204
        $region203: #{tvtsbert_prediction_forward.1} parent=111 // pred_region
          %1259 = dma.done [#allocation38], 16
        $region204: #{tvtsbert_prediction_forward.1} parent=111 // pred_fallthru
          _
        %s1260 = sand.u32 %s89, 1
        %s1261 = scalar_lea.sflag [#allocation5], %s1260
        %s1262 = sand.u32 %s89, 1
        %s1263 = smul.addr %s1262, 8
        %s1264 = scalar_lea.vmem [#allocation4], %s1263
        %p1265 = pneg %p102
        %p1266 = pneg %p99
        %s1267 = sand.u32 %s69, 1
        %s1268 = scalar_lea.sflag [#allocation8], %s1267
        %s1269 = sand.u32 %s115, 1
        %s1270 = scalar_lea.vmem [#allocation7], %s1269
        %p1271 = pneg %p128
        %p1272 = pneg %p125
        %p1273 = pneg %p149
        %p1274 = pneg %p146
        %p1275 = pneg %p170
        %p1276 = pneg %p167
        %p1277 = pneg %p191
        %p1278 = pneg %p188
        %s1279 = sand.u32 %s69, 1
        %s1280 = scalar_lea.sflag [#allocation14], %s1279
        %s1281 = sand.u32 %s204, 1
        %s1282 = scalar_lea.vmem [#allocation13], %s1281
        %p1283 = pneg %p217
        %p1284 = pneg %p214
        %s1285 = sand.u32 %s69, 1
        %s1286 = scalar_lea.sflag [#allocation14], %s1285
        %s1287 = sand.u32 %s230, 1
        %s1288 = scalar_lea.vmem [#allocation15], %s1287
        %p1289 = pneg %p243
        %p1290 = pneg %p240
        %s1291 = sand.u32 %s69, 1
        %s1292 = scalar_lea.sflag [#allocation17], %s1291
        %s1293 = sand.u32 %s256, 1
        %s1294 = smul.addr %s1293, 16
        %s1295 = scalar_lea.vmem [#allocation16], %s1294
        %p1296 = pneg %p269
        %p1297 = pneg %p266
        %s1298 = sand.u32 %s69, 1
        %s1299 = scalar_lea.sflag [#allocation17], %s1298
        %s1300 = sand.u32 %s282, 1
        %s1301 = scalar_lea.vmem [#allocation18], %s1300
        %p1302 = pneg %p295
        %p1303 = pneg %p292
        %s1304 = sand.u32 %s69, 1
        %s1305 = scalar_lea.sflag [#allocation20], %s1304
        %s1306 = sand.u32 %s308, 1
        %s1307 = smul.addr %s1306, 16
        %s1308 = scalar_lea.vmem [#allocation19], %s1307
        %p1309 = pneg %p321
        %p1310 = pneg %p318
        %s1311 = sand.u32 %s69, 1
        %s1312 = scalar_lea.sflag [#allocation20], %s1311
        %s1313 = sand.u32 %s334, 1
        %s1314 = scalar_lea.vmem [#allocation21], %s1313
        %p1315 = pneg %p347
        %p1316 = pneg %p344
        %s1317 = sand.u32 %s69, 1
        %s1318 = scalar_lea.sflag [#allocation23], %s1317
        %s1319 = sand.u32 %s360, 1
        %s1320 = smul.addr %s1319, 16
        %s1321 = scalar_lea.vmem [#allocation22], %s1320
        %p1322 = pneg %p373
        %p1323 = pneg %p370
        %s1324 = sand.u32 %s69, 1
        %s1325 = scalar_lea.sflag [#allocation23], %s1324
        %s1326 = sand.u32 %s386, 1
        %s1327 = scalar_lea.vmem [#allocation24], %s1326
        %p1328 = pneg %p399
        %p1329 = pneg %p396
        %s1330 = sand.u32 %s69, 1
        %s1331 = scalar_lea.sflag [#allocation26], %s1330
        %s1332 = sand.u32 %s412, 1
        %s1333 = smul.addr %s1332, 16
        %s1334 = scalar_lea.vmem [#allocation25], %s1333
        %p1335 = pneg %p425
        %p1336 = pneg %p422
        %s1337 = sand.u32 %s69, 1
        %s1338 = scalar_lea.sflag [#allocation26], %s1337
        %s1339 = sand.u32 %s438, 1
        %s1340 = scalar_lea.vmem [#allocation27], %s1339
        %p1341 = pneg %p451
        %p1342 = pneg %p448
        %s1343 = sand.u32 %s69, 1
        %s1344 = scalar_lea.sflag [#allocation29], %s1343
        %s1345 = sand.u32 %s464, 1
        %s1346 = scalar_lea.vmem [#allocation28], %s1345
        %p1347 = pneg %p477
        %p1348 = pneg %p474
        %s1349 = sand.u32 %s69, 1
        %s1350 = scalar_lea.sflag [#allocation29], %s1349
        %s1351 = sand.u32 %s490, 1
        %s1352 = scalar_lea.vmem [#allocation30], %s1351
        %p1353 = pneg %p503
        %p1354 = pneg %p500
        %s1355 = sand.u32 %s69, 1
        %s1356 = scalar_lea.sflag [#allocation32], %s1355
        %s1357 = sand.u32 %s516, 1
        %s1358 = smul.addr %s1357, 16
        %s1359 = scalar_lea.vmem [#allocation31], %s1358
        %p1360 = pneg %p529
        %p1361 = pneg %p526
        %s1362 = sand.u32 %s69, 1
        %s1363 = scalar_lea.sflag [#allocation32], %s1362
        %s1364 = sand.u32 %s542, 1
        %s1365 = scalar_lea.vmem [#allocation33], %s1364
        %p1366 = pneg %p555
        %p1367 = pneg %p552
        %s1368 = sand.u32 %s69, 1
        %s1369 = scalar_lea.sflag [#allocation35], %s1368
        %s1370 = sand.u32 %s568, 1
        %s1371 = smul.addr %s1370, 64
        %s1372 = scalar_lea.vmem [#allocation34], %s1371
        %p1373 = pneg %p581
        %p1374 = pneg %p578
        %s1375 = sand.u32 %s69, 1
        %s1376 = scalar_lea.sflag [#allocation35], %s1375
        %s1377 = sand.u32 %s594, 1
        %s1378 = scalar_lea.vmem [#allocation36], %s1377
        %p1379 = pneg %p607
        %p1380 = pneg %p604
        %p1381 = pneg %p628
        %p1382 = pneg %p625
        %p1383 = pneg %p649
        %p1384 = pneg %p646
        %p1385 = pneg %p675
        %p1386 = pneg %p672
        %s1387 = sand.u32 %s662, 1
        %s1388 = scalar_lea.sflag [#allocation6], %s1387
        %s1389 = sand.u32 %s662, 1
        %s1390 = smul.addr %s1389, 8
        %s1391 = scalar_lea.vmem [#allocation40], %s1390
        %p1393 = scmp.eq.s32.totalorder %s74, 0
        // Predicated region
        $region205: #{tvtsbert_prediction_forward.1} parent=111 // pred_check
          %p1394 = pneg %p1393
        $region206: #{tvtsbert_prediction_forward.1} parent=111 // pred_check_branch
          %1396 = sbr.rel (%p1394) target = $region208
        $region207: #{tvtsbert_prediction_forward.1} parent=111 // pred_region
          %v1397 = vld [vmem:[%s1093] sm:$0xff]
          %v1398 = vpack.c.bf16 %v1397, %v1397
          %v1399 = vld [vmem:[#allocation9] sm:$0x3]
          %v1400 = vld [vmem:[#allocation10] sm:$0x1]
          %v1402 = vlaneseq
          %v1403 = vshrl.u32 %v1402, 7
          %v1404 = vsub.s32 0, %v1403
          %v1405 = vrot.slane %v1400, %v1404
          %vm1407 = vcmask 31744
          %v1409 = vsel %vm1407, %v1398, 0
          %vm1411 = vcmask 1041408
          %v1413 = vsel %vm1411, %v1399, 0
          %1415 = vmatprep.subr.bf16.mxu0 0
          %1416 = vmatpush1.bf16.msra.mxu0 %v1413
          %1417 = vmatprep.subr.bf16.mxu0 0
          %1418 = vmatpush1.bf16.msra.mxu0 0
          %1419 = vmatprep.subr.bf16.mxu0 0
          %1420 = vmatpush1.bf16.msra.mxu0 0
          %1421 = vmatprep.subr.bf16.mxu0 0
          %1422 = vmatpush1.bf16.msra.mxu0 0
          %1423 = vmatprep.subr.bf16.mxu0 0
          %1424 = vmatpush1.bf16.msra.mxu0 0
          %1425 = vmatprep.subr.bf16.mxu0 0
          %1426 = vmatpush1.bf16.msra.mxu0 0
          %1427 = vmatprep.subr.bf16.mxu0 0
          %1428 = vmatpush1.bf16.msra.mxu0 0
          %1429 = vmatprep.subr.bf16.mxu0 0
          %1430 = vmatpush1.bf16.msra.mxu0 0
          %1431 = vmatprep.subr.bf16.mxu0 0
          %1432 = vmatpush1.bf16.msra.mxu0 0
          %1433 = vmatprep.subr.bf16.mxu0 0
          %1434 = vmatpush1.bf16.msra.mxu0 0
          %1435 = vmatprep.subr.bf16.mxu0 0
          %1436 = vmatpush1.bf16.msra.mxu0 0
          %1437 = vmatprep.subr.bf16.mxu0 0
          %1438 = vmatpush1.bf16.msra.mxu0 0
          %1439 = vmatprep.subr.bf16.mxu0 0
          %1440 = vmatpush1.bf16.msra.mxu0 0
          %1441 = vmatprep.subr.bf16.mxu0 0
          %1442 = vmatpush1.bf16.msra.mxu0 0
          %1443 = vmatprep.subr.bf16.mxu0 0
          %1444 = vmatpush1.bf16.msra.mxu0 0
          %1445 = vmatprep.subr.bf16.mxu0 0
          %1446 = vmatpush1.bf16.msra.mxu0 0
          %1447 = vmatprep.mubr.bf16.mxu0 0
          %1448 = vmatmul.mubr.bf16.gmra.mrb[0].mxu0 %v1409
          %v1449 = vpop.f32.mrb[0].mxu0
          %v1450 = vadd.f32 %v1405, %v1449
          %v1451 = vpop.f32.mrb[0].mxu0
          %v1452 = vpop.f32.mrb[0].mxu0
          %v1453 = vpop.f32.mrb[0].mxu0
          %1454 = vdwg.mxu0
          %v1455 = vld [vmem:[#allocation12] sm:$0xff]
          %v1456 = vadd.f32 %v1450, %v1455
          %vm1457 = vcmask 261120
          %1458 = vst.msk [vmem:[#allocation2] sm:$0xff] %vm1457, %v1456
        $region208: #{tvtsbert_prediction_forward.1} parent=111 // pred_fallthru
          _
        %v1459 = vld [vmem:[#allocation2] sm:$0xff]
        %v1460 = vld [vmem:[%s1121] sm:$0x1]
        %v1461 = vld [vmem:[%s1129] sm:$0x1]
        %vm1462 = vcmask 261120
        %v1463 = vsel %vm1462, %v1459, 0.0
        %1464 = vadd.xlane.f32.xlu0 %v1463
        %v1465 = vpop.xlane.xlu0 %1464
        %v1466 = vrcp.pop 32.0
        %v1467 = vmul.f32 %v1465, %v1466
        %v1468 = vsub.f32 %v1459, %v1467
        %v1469 = vmul.f32 %v1468, %v1468
        %v1470 = vsel %vm1462, %v1469, 0.0
        %1471 = vadd.xlane.f32.xlu0 %v1470
        %v1472 = vpop.xlane.xlu0 %1471
        %v1473 = vrcp.pop 31.0
        %v1474 = vmul.f32 %v1472, %v1473
        %v1475 = vrsqrt.pop %v1474
        %v1476 = vmul.f32 %v1474, %v1475
        %vm1477 = vcmp.eq.f32.partialorder %v1474, inf
        %v1478 = vsel %vm1477, %v1474, %v1476
        %vm1479 = vcmp.eq.f32.partialorder %v1474, 0.0
        %v1480 = vand.u32 %v1474, 2147483648
        %v1481 = vsel %vm1479, %v1480, %v1478
        %v1483 = vlaneseq
        %v1484 = vshrl.u32 %v1483, 7
        %v1485 = vsub.s32 0, %v1484
        %v1486 = vrot.slane %v1460, %v1485
        %v1488 = vmul.f32 %v1486, %v1468
        %v1489 = vadd.f32 %v1481, 1e-06
        %v1490 = vrcp.pop %v1489
        %v1491 = vmul.f32 %v1488, %v1490
        %v1493 = vlaneseq
        %v1494 = vshrl.u32 %v1493, 7
        %v1495 = vsub.s32 0, %v1494
        %v1496 = vrot.slane %v1461, %v1495
        %v1498 = vadd.f32 %v1491, %v1496
        %v1499 = vpack.c.bf16 %v1498, %v1498
        %v1500 = vld [vmem:[%s1138] sm:$0xf]
        %v1501 = vld [vmem:[%s1138 + $0x4] sm:$0xf]
        %v1502 = vld [vmem:[%s1138 + $0x8] sm:$0xf]
        %v1503 = vld [vmem:[%s1138 + $0xc] sm:$0xf]
        %v1504 = vld [vmem:[%s1146] sm:$0x1]
        %v1506 = vlaneseq
        %v1507 = vshrl.u32 %v1506, 7
        %v1508 = vsub.s32 0, %v1507
        %v1509 = vrot.slane %v1504, %v1508
        %v1515 = vunpack.c.l.b16 %v1500
        %v1516 = vunpack.c.l.b16 %v1501
        %v1517 = vunpack.c.l.b16 %v1502
        %v1518 = vunpack.c.l.b16 %v1503
        %v1519 = vpack.c.b16 %v1516, %v1515
        %v1520 = vpack.c.b16 %v1518, %v1517
        %v1524 = vsel %vm1462, %v1499, 0
        %1526 = vmatprep.subr.bf16.mxu0 0
        %1527 = vmatpush1.bf16.msra.mxu0 %v1519
        %1528 = vmatprep.subr.bf16.mxu0 0
        %1529 = vmatpush1.bf16.msra.mxu0 %v1520
        %1530 = vmatprep.subr.bf16.mxu0 0
        %1531 = vmatpush1.bf16.msra.mxu0 0
        %1532 = vmatprep.subr.bf16.mxu0 0
        %1533 = vmatpush1.bf16.msra.mxu0 0
        %1534 = vmatprep.subr.bf16.mxu0 0
        %1535 = vmatpush1.bf16.msra.mxu0 0
        %1536 = vmatprep.subr.bf16.mxu0 0
        %1537 = vmatpush1.bf16.msra.mxu0 0
        %1538 = vmatprep.subr.bf16.mxu0 0
        %1539 = vmatpush1.bf16.msra.mxu0 0
        %1540 = vmatprep.subr.bf16.mxu0 0
        %1541 = vmatpush1.bf16.msra.mxu0 0
        %1542 = vmatprep.subr.bf16.mxu0 0
        %1543 = vmatpush1.bf16.msra.mxu0 0
        %1544 = vmatprep.subr.bf16.mxu0 0
        %1545 = vmatpush1.bf16.msra.mxu0 0
        %1546 = vmatprep.subr.bf16.mxu0 0
        %1547 = vmatpush1.bf16.msra.mxu0 0
        %1548 = vmatprep.subr.bf16.mxu0 0
        %1549 = vmatpush1.bf16.msra.mxu0 0
        %1550 = vmatprep.subr.bf16.mxu0 0
        %1551 = vmatpush1.bf16.msra.mxu0 0
        %1552 = vmatprep.subr.bf16.mxu0 0
        %1553 = vmatpush1.bf16.msra.mxu0 0
        %1554 = vmatprep.subr.bf16.mxu0 0
        %1555 = vmatpush1.bf16.msra.mxu0 0
        %1556 = vmatprep.subr.bf16.mxu0 0
        %1557 = vmatpush1.bf16.msra.mxu0 0
        %1558 = vmatprep.mubr.bf16.mxu0 0
        %1559 = vmatmul.mubr.bf16.gmra.mrb[0].mxu0 %v1524
        %v1560 = vpop.f32.mrb[0].mxu0
        %v1561 = vadd.f32 %v1509, %v1560
        %v1562 = vpop.f32.mrb[0].mxu0
        %v1563 = vpop.f32.mrb[0].mxu0
        %v1564 = vpop.f32.mrb[0].mxu0
        %1565 = vdwg.mxu0
        %v1566 = vld [vmem:[%s1155] sm:$0xf]
        %v1567 = vld [vmem:[%s1155 + $0x4] sm:$0xf]
        %v1568 = vld [vmem:[%s1155 + $0x8] sm:$0xf]
        %v1569 = vld [vmem:[%s1155 + $0xc] sm:$0xf]
        %v1570 = vld [vmem:[%s1163] sm:$0x1]
        %v1572 = vlaneseq
        %v1573 = vshrl.u32 %v1572, 7
        %v1574 = vsub.s32 0, %v1573
        %v1575 = vrot.slane %v1570, %v1574
        %v1581 = vunpack.c.l.b16 %v1566
        %v1582 = vunpack.c.l.b16 %v1567
        %v1583 = vunpack.c.l.b16 %v1568
        %v1584 = vunpack.c.l.b16 %v1569
        %v1585 = vpack.c.b16 %v1582, %v1581
        %v1586 = vpack.c.b16 %v1584, %v1583
        %1589 = vmatprep.subr.bf16.mxu0 0
        %1590 = vmatpush1.bf16.msra.mxu0 %v1585
        %1591 = vmatprep.subr.bf16.mxu0 0
        %1592 = vmatpush1.bf16.msra.mxu0 %v1586
        %1593 = vmatprep.subr.bf16.mxu0 0
        %1594 = vmatpush1.bf16.msra.mxu0 0
        %1595 = vmatprep.subr.bf16.mxu0 0
        %1596 = vmatpush1.bf16.msra.mxu0 0
        %1597 = vmatprep.subr.bf16.mxu0 0
        %1598 = vmatpush1.bf16.msra.mxu0 0
        %1599 = vmatprep.subr.bf16.mxu0 0
        %1600 = vmatpush1.bf16.msra.mxu0 0
        %1601 = vmatprep.subr.bf16.mxu0 0
        %1602 = vmatpush1.bf16.msra.mxu0 0
        %1603 = vmatprep.subr.bf16.mxu0 0
        %1604 = vmatpush1.bf16.msra.mxu0 0
        %1605 = vmatprep.subr.bf16.mxu0 0
        %1606 = vmatpush1.bf16.msra.mxu0 0
        %1607 = vmatprep.subr.bf16.mxu0 0
        %1608 = vmatpush1.bf16.msra.mxu0 0
        %1609 = vmatprep.subr.bf16.mxu0 0
        %1610 = vmatpush1.bf16.msra.mxu0 0
        %1611 = vmatprep.subr.bf16.mxu0 0
        %1612 = vmatpush1.bf16.msra.mxu0 0
        %1613 = vmatprep.subr.bf16.mxu0 0
        %1614 = vmatpush1.bf16.msra.mxu0 0
        %1615 = vmatprep.subr.bf16.mxu0 0
        %1616 = vmatpush1.bf16.msra.mxu0 0
        %1617 = vmatprep.subr.bf16.mxu0 0
        %1618 = vmatpush1.bf16.msra.mxu0 0
        %1619 = vmatprep.subr.bf16.mxu0 0
        %1620 = vmatpush1.bf16.msra.mxu0 0
        %1621 = vmatprep.mubr.bf16.mxu0 0
        %1622 = vmatmul.mubr.bf16.gmra.mrb[0].mxu0 %v1524
        %v1623 = vpop.f32.mrb[0].mxu0
        %v1624 = vadd.f32 %v1575, %v1623
        %v1625 = vpop.f32.mrb[0].mxu0
        %v1626 = vpop.f32.mrb[0].mxu0
        %v1627 = vpop.f32.mrb[0].mxu0
        %1628 = vdwg.mxu0
        %v1629 = vld [vmem:[%s1172] sm:$0xf]
        %v1630 = vld [vmem:[%s1172 + $0x4] sm:$0xf]
        %v1631 = vld [vmem:[%s1172 + $0x8] sm:$0xf]
        %v1632 = vld [vmem:[%s1172 + $0xc] sm:$0xf]
        %v1633 = vld [vmem:[%s1180] sm:$0x1]
        %v1635 = vlaneseq
        %v1636 = vshrl.u32 %v1635, 7
        %v1637 = vsub.s32 0, %v1636
        %v1638 = vrot.slane %v1633, %v1637
        %v1644 = vunpack.c.l.b16 %v1629
        %v1645 = vunpack.c.l.b16 %v1630
        %v1646 = vunpack.c.l.b16 %v1631
        %v1647 = vunpack.c.l.b16 %v1632
        %v1648 = vpack.c.b16 %v1645, %v1644
        %v1649 = vpack.c.b16 %v1647, %v1646
        %1652 = vmatprep.subr.bf16.mxu0 0
        %1653 = vmatpush1.bf16.msra.mxu0 %v1648
        %1654 = vmatprep.subr.bf16.mxu0 0
        %1655 = vmatpush1.bf16.msra.mxu0 %v1649
        %1656 = vmatprep.subr.bf16.mxu0 0
        %1657 = vmatpush1.bf16.msra.mxu0 0
        %1658 = vmatprep.subr.bf16.mxu0 0
        %1659 = vmatpush1.bf16.msra.mxu0 0
        %1660 = vmatprep.subr.bf16.mxu0 0
        %1661 = vmatpush1.bf16.msra.mxu0 0
        %1662 = vmatprep.subr.bf16.mxu0 0
        %1663 = vmatpush1.bf16.msra.mxu0 0
        %1664 = vmatprep.subr.bf16.mxu0 0
        %1665 = vmatpush1.bf16.msra.mxu0 0
        %1666 = vmatprep.subr.bf16.mxu0 0
        %1667 = vmatpush1.bf16.msra.mxu0 0
        %1668 = vmatprep.subr.bf16.mxu0 0
        %1669 = vmatpush1.bf16.msra.mxu0 0
        %1670 = vmatprep.subr.bf16.mxu0 0
        %1671 = vmatpush1.bf16.msra.mxu0 0
        %1672 = vmatprep.subr.bf16.mxu0 0
        %1673 = vmatpush1.bf16.msra.mxu0 0
        %1674 = vmatprep.subr.bf16.mxu0 0
        %1675 = vmatpush1.bf16.msra.mxu0 0
        %1676 = vmatprep.subr.bf16.mxu0 0
        %1677 = vmatpush1.bf16.msra.mxu0 0
        %1678 = vmatprep.subr.bf16.mxu0 0
        %1679 = vmatpush1.bf16.msra.mxu0 0
        %1680 = vmatprep.subr.bf16.mxu0 0
        %1681 = vmatpush1.bf16.msra.mxu0 0
        %1682 = vmatprep.subr.bf16.mxu0 0
        %1683 = vmatpush1.bf16.msra.mxu0 0
        %1684 = vmatprep.mubr.bf16.mxu0 0
        %1685 = vmatmul.mubr.bf16.gmra.mrb[0].mxu0 %v1524
        %v1686 = vpop.f32.mrb[0].mxu0
        %v1687 = vadd.f32 %v1638, %v1686
        %v1688 = vpop.f32.mrb[0].mxu0
        %v1689 = vpop.f32.mrb[0].mxu0
        %v1690 = vpop.f32.mrb[0].mxu0
        %1691 = vdwg.mxu0
        %1692 = vxpose.xlu0.b32.start [1/16] %v1624, 128
        %1693 = vxpose.xlu0.b32.cont [2/16] 0.0, 128
        %1694 = vxpose.xlu0.b32.cont [3/16] 0.0, 128
        %1695 = vxpose.xlu0.b32.cont [4/16] 0.0, 128
        %1696 = vxpose.xlu0.b32.cont [5/16] 0.0, 128
        %1697 = vxpose.xlu0.b32.cont [6/16] 0.0, 128
        %1698 = vxpose.xlu0.b32.cont [7/16] 0.0, 128
        %1699 = vxpose.xlu0.b32.cont [8/16] 0.0, 128
        %1700 = vxpose.xlu0.b32.cont [9/16] 0.0, 128
        %1701 = vxpose.xlu0.b32.cont [10/16] 0.0, 128
        %1702 = vxpose.xlu0.b32.cont [11/16] 0.0, 128
        %1703 = vxpose.xlu0.b32.cont [12/16] 0.0, 128
        %1704 = vxpose.xlu0.b32.cont [13/16] 0.0, 128
        %1705 = vxpose.xlu0.b32.cont [14/16] 0.0, 128
        %1706 = vxpose.xlu0.b32.cont [15/16] 0.0, 128
        %1707 = vxpose.xlu0.b32.end [16/16] 0.0, 128
        %v1708 = vpop.trf.xlu0
        %v1709 = vpop.trf.xlu0
        %v1710 = vpop.trf.xlu0
        %v1711 = vpop.trf.xlu0
        %v1712 = vpop.trf.xlu0
        %v1713 = vpop.trf.xlu0
        %v1714 = vpop.trf.xlu0
        %v1715 = vpop.trf.xlu0
        %v1716 = vpop.trf.xlu0
        %v1717 = vpop.trf.xlu0
        %v1718 = vpop.trf.xlu0
        %v1719 = vpop.trf.xlu0
        %v1720 = vpop.trf.xlu0
        %v1721 = vpop.trf.xlu0
        %v1722 = vpop.trf.xlu0
        %v1723 = vpop.trf.xlu0
        %v1724 = vld [vmem:[%s1101] sm:$0x1]
        %v1725 = vpack.c.bf16 %v1561, %v1561
        %v1726 = vpack.c.bf16 %v1709, %v1708
        %v1727 = vpack.c.bf16 %v1687, %v1687
        %vm1728 = vcmask 130048
        %v1730 = vsel %vm1728, %v1725, 0
        %1732 = vmatprep.subr.bf16.mxu0 0
        %1733 = vmatpush1.bf16.msra.mxu0 %v1726
        %1734 = vmatprep.subr.bf16.mxu0 0
        %1735 = vmatpush1.bf16.msra.mxu0 0
        %1736 = vmatprep.subr.bf16.mxu0 0
        %1737 = vmatpush1.bf16.msra.mxu0 0
        %1738 = vmatprep.subr.bf16.mxu0 0
        %1739 = vmatpush1.bf16.msra.mxu0 0
        %1740 = vmatprep.subr.bf16.mxu0 0
        %1741 = vmatpush1.bf16.msra.mxu0 0
        %1742 = vmatprep.subr.bf16.mxu0 0
        %1743 = vmatpush1.bf16.msra.mxu0 0
        %1744 = vmatprep.subr.bf16.mxu0 0
        %1745 = vmatpush1.bf16.msra.mxu0 0
        %1746 = vmatprep.subr.bf16.mxu0 0
        %1747 = vmatpush1.bf16.msra.mxu0 0
        %1748 = vmatprep.subr.bf16.mxu0 0
        %1749 = vmatpush1.bf16.msra.mxu0 0
        %1750 = vmatprep.subr.bf16.mxu0 0
        %1751 = vmatpush1.bf16.msra.mxu0 0
        %1752 = vmatprep.subr.bf16.mxu0 0
        %1753 = vmatpush1.bf16.msra.mxu0 0
        %1754 = vmatprep.subr.bf16.mxu0 0
        %1755 = vmatpush1.bf16.msra.mxu0 0
        %1756 = vmatprep.subr.bf16.mxu0 0
        %1757 = vmatpush1.bf16.msra.mxu0 0
        %1758 = vmatprep.subr.bf16.mxu0 0
        %1759 = vmatpush1.bf16.msra.mxu0 0
        %1760 = vmatprep.subr.bf16.mxu0 0
        %1761 = vmatpush1.bf16.msra.mxu0 0
        %1762 = vmatprep.subr.bf16.mxu0 0
        %1763 = vmatpush1.bf16.msra.mxu0 0
        %1764 = vmatprep.mubr.bf16.mxu0 0
        %1765 = vmatmul.mubr.bf16.gmra.mrb[0].mxu0 %v1730
        %v1766 = vpop.f32.mrb[0].mxu0
        %v1767 = vadd.f32 0.0, %v1766
        %v1768 = vpop.f32.mrb[0].mxu0
        %v1769 = vpop.f32.mrb[0].mxu0
        %v1770 = vpop.f32.mrb[0].mxu0
        %1771 = vdwg.mxu0
        %v1772 = vmul.f32 %v1767, 0.25
        %v1774 = vlaneseq
        %v1775 = vshrl.u32 %v1774, 7
        %v1776 = vsub.s32 0, %v1775
        %v1777 = vrot.slane %v1724, %v1776
        %v1779 = vadd.f32 %v1772, %v1777
        %vm1780 = vcmask 64512
        %v1781 = vsel %vm1780, %v1779, -inf
        %1782 = vmax.xlane.f32.xlu0 %v1781
        %v1783 = vpop.xlane.xlu0 %1782
        %v1784 = vsub.f32 %v1779, %v1783
        %v1785 = vmul.f32 %v1784, 1.442695
        %v1786 = vpow.pop %v1785
        %v1787 = vsel %vm1780, %v1786, 0.0
        %1788 = vadd.xlane.f32.xlu0 %v1787
        %v1789 = vpop.xlane.xlu0 %1788
        %v1790 = vrcp.pop %v1789
        %v1791 = vmul.f32 %v1786, %v1790
        %v1792 = vpack.c.bf16 %v1791, %v1791
        %v1794 = vsel %vm1780, %v1792, 0
        %vm1796 = vcmask 1043456
        %v1798 = vsel %vm1796, %v1727, 0
        %1800 = vmatprep.subr.bf16.mxu0 0
        %1801 = vmatpush1.bf16.msra.mxu0 %v1798
        %1802 = vmatprep.subr.bf16.mxu0 0
        %1803 = vmatpush1.bf16.msra.mxu0 0
        %1804 = vmatprep.subr.bf16.mxu0 0
        %1805 = vmatpush1.bf16.msra.mxu0 0
        %1806 = vmatprep.subr.bf16.mxu0 0
        %1807 = vmatpush1.bf16.msra.mxu0 0
        %1808 = vmatprep.subr.bf16.mxu0 0
        %1809 = vmatpush1.bf16.msra.mxu0 0
        %1810 = vmatprep.subr.bf16.mxu0 0
        %1811 = vmatpush1.bf16.msra.mxu0 0
        %1812 = vmatprep.subr.bf16.mxu0 0
        %1813 = vmatpush1.bf16.msra.mxu0 0
        %1814 = vmatprep.subr.bf16.mxu0 0
        %1815 = vmatpush1.bf16.msra.mxu0 0
        %1816 = vmatprep.subr.bf16.mxu0 0
        %1817 = vmatpush1.bf16.msra.mxu0 0
        %1818 = vmatprep.subr.bf16.mxu0 0
        %1819 = vmatpush1.bf16.msra.mxu0 0
        %1820 = vmatprep.subr.bf16.mxu0 0
        %1821 = vmatpush1.bf16.msra.mxu0 0
        %1822 = vmatprep.subr.bf16.mxu0 0
        %1823 = vmatpush1.bf16.msra.mxu0 0
        %1824 = vmatprep.subr.bf16.mxu0 0
        %1825 = vmatpush1.bf16.msra.mxu0 0
        %1826 = vmatprep.subr.bf16.mxu0 0
        %1827 = vmatpush1.bf16.msra.mxu0 0
        %1828 = vmatprep.subr.bf16.mxu0 0
        %1829 = vmatpush1.bf16.msra.mxu0 0
        %1830 = vmatprep.subr.bf16.mxu0 0
        %1831 = vmatpush1.bf16.msra.mxu0 0
        %1832 = vmatprep.mubr.bf16.mxu0 0
        %1833 = vmatmul.mubr.bf16.gmra.mrb[0].mxu0 %v1794
        %v1834 = vpop.f32.mrb[0].mxu0
        %v1835 = vadd.f32 0.0, %v1834
        %v1836 = vpop.f32.mrb[0].mxu0
        %v1837 = vpop.f32.mrb[0].mxu0
        %v1838 = vpop.f32.mrb[0].mxu0
        %1839 = vdwg.mxu0
        %1840 = vst.msk [vmem:[#allocation3] sm:$0xff] %vm1728, %v1835
        %v1841 = vpack.c.bf16 %v1711, %v1710
        %1843 = vrot.lane.b32.xlu0 %v1725, 112
        %v1844 = vpop.permute.xlu0 %1843
        %v1846 = vsel %vm1728, %v1844, 0
        %1848 = vmatprep.subr.bf16.mxu0 0
        %1849 = vmatpush1.bf16.msra.mxu0 %v1841
        %1850 = vmatprep.subr.bf16.mxu0 0
        %1851 = vmatpush1.bf16.msra.mxu0 0
        %1852 = vmatprep.subr.bf16.mxu0 0
        %1853 = vmatpush1.bf16.msra.mxu0 0
        %1854 = vmatprep.subr.bf16.mxu0 0
        %1855 = vmatpush1.bf16.msra.mxu0 0
        %1856 = vmatprep.subr.bf16.mxu0 0
        %1857 = vmatpush1.bf16.msra.mxu0 0
        %1858 = vmatprep.subr.bf16.mxu0 0
        %1859 = vmatpush1.bf16.msra.mxu0 0
        %1860 = vmatprep.subr.bf16.mxu0 0
        %1861 = vmatpush1.bf16.msra.mxu0 0
        %1862 = vmatprep.subr.bf16.mxu0 0
        %1863 = vmatpush1.bf16.msra.mxu0 0
        %1864 = vmatprep.subr.bf16.mxu0 0
        %1865 = vmatpush1.bf16.msra.mxu0 0
        %1866 = vmatprep.subr.bf16.mxu0 0
        %1867 = vmatpush1.bf16.msra.mxu0 0
        %1868 = vmatprep.subr.bf16.mxu0 0
        %1869 = vmatpush1.bf16.msra.mxu0 0
        %1870 = vmatprep.subr.bf16.mxu0 0
        %1871 = vmatpush1.bf16.msra.mxu0 0
        %1872 = vmatprep.subr.bf16.mxu0 0
        %1873 = vmatpush1.bf16.msra.mxu0 0
        %1874 = vmatprep.subr.bf16.mxu0 0
        %1875 = vmatpush1.bf16.msra.mxu0 0
        %1876 = vmatprep.subr.bf16.mxu0 0
        %1877 = vmatpush1.bf16.msra.mxu0 0
        %1878 = vmatprep.subr.bf16.mxu0 0
        %1879 = vmatpush1.bf16.msra.mxu0 0
        %1880 = vmatprep.mubr.bf16.mxu0 0
        %1881 = vmatmul.mubr.bf16.gmra.mrb[0].mxu0 %v1846
        %v1882 = vpop.f32.mrb[0].mxu0
        %v1883 = vadd.f32 0.0, %v1882
        %v1884 = vpop.f32.mrb[0].mxu0
        %v1885 = vpop.f32.mrb[0].mxu0
        %v1886 = vpop.f32.mrb[0].mxu0
        %1887 = vdwg.mxu0
        %v1888 = vmul.f32 %v1883, 0.25
        %v1889 = vadd.f32 %v1888, %v1777
        %v1890 = vsel %vm1780, %v1889, -inf
        %1891 = vmax.xlane.f32.xlu0 %v1890
        %v1892 = vpop.xlane.xlu0 %1891
        %v1893 = vsub.f32 %v1889, %v1892
        %v1894 = vmul.f32 %v1893, 1.442695
        %v1895 = vpow.pop %v1894
        %v1896 = vsel %vm1780, %v1895, 0.0
        %1897 = vadd.xlane.f32.xlu0 %v1896
        %v1898 = vpop.xlane.xlu0 %1897
        %v1899 = vrcp.pop %v1898
        %v1900 = vmul.f32 %v1895, %v1899
        %v1901 = vpack.c.bf16 %v1900, %v1900
        %1903 = vrot.lane.b32.xlu0 %v1727, 112
        %v1904 = vpop.permute.xlu0 %1903
        %v1906 = vsel %vm1780, %v1901, 0
        %v1909 = vsel %vm1796, %v1904, 0
        %1911 = vmatprep.subr.bf16.mxu0 0
        %1912 = vmatpush1.bf16.msra.mxu0 %v1909
        %1913 = vmatprep.subr.bf16.mxu0 0
        %1914 = vmatpush1.bf16.msra.mxu0 0
        %1915 = vmatprep.subr.bf16.mxu0 0
        %1916 = vmatpush1.bf16.msra.mxu0 0
        %1917 = vmatprep.subr.bf16.mxu0 0
        %1918 = vmatpush1.bf16.msra.mxu0 0
        %1919 = vmatprep.subr.bf16.mxu0 0
        %1920 = vmatpush1.bf16.msra.mxu0 0
        %1921 = vmatprep.subr.bf16.mxu0 0
        %1922 = vmatpush1.bf16.msra.mxu0 0
        %1923 = vmatprep.subr.bf16.mxu0 0
        %1924 = vmatpush1.bf16.msra.mxu0 0
        %1925 = vmatprep.subr.bf16.mxu0 0
        %1926 = vmatpush1.bf16.msra.mxu0 0
        %1927 = vmatprep.subr.bf16.mxu0 0
        %1928 = vmatpush1.bf16.msra.mxu0 0
        %1929 = vmatprep.subr.bf16.mxu0 0
        %1930 = vmatpush1.bf16.msra.mxu0 0
        %1931 = vmatprep.subr.bf16.mxu0 0
        %1932 = vmatpush1.bf16.msra.mxu0 0
        %1933 = vmatprep.subr.bf16.mxu0 0
        %1934 = vmatpush1.bf16.msra.mxu0 0
        %1935 = vmatprep.subr.bf16.mxu0 0
        %1936 = vmatpush1.bf16.msra.mxu0 0
        %1937 = vmatprep.subr.bf16.mxu0 0
        %1938 = vmatpush1.bf16.msra.mxu0 0
        %1939 = vmatprep.subr.bf16.mxu0 0
        %1940 = vmatpush1.bf16.msra.mxu0 0
        %1941 = vmatprep.subr.bf16.mxu0 0
        %1942 = vmatpush1.bf16.msra.mxu0 0
        %1943 = vmatprep.mubr.bf16.mxu0 0
        %1944 = vmatmul.mubr.bf16.gmra.mrb[0].mxu0 %v1906
        %v1945 = vpop.f32.mrb[0].mxu0
        %v1946 = vadd.f32 0.0, %v1945
        %v1947 = vpop.f32.mrb[0].mxu0
        %v1948 = vpop.f32.mrb[0].mxu0
        %v1949 = vpop.f32.mrb[0].mxu0
        %1950 = vdwg.mxu0
        %1952 = vrot.lane.b32.xlu0 %v1946, 16
        %v1953 = vpop.permute.xlu0 %1952
        %vm1955 = vcmask 261248
        %1956 = vst.msk [vmem:[#allocation3] sm:$0xff] %vm1955, %v1953
        %v1957 = vld [vmem:[#allocation3] sm:$0xff]
        %v1958 = vpack.c.bf16 %v1957, %v1957
        %v1959 = vld [vmem:[%s1189] sm:$0xf]
        %v1960 = vld [vmem:[%s1189 + $0x4] sm:$0xf]
        %v1961 = vld [vmem:[%s1189 + $0x8] sm:$0xf]
        %v1962 = vld [vmem:[%s1189 + $0xc] sm:$0xf]
        %v1963 = vld [vmem:[%s1197] sm:$0x1]
        %v1965 = vlaneseq
        %v1966 = vshrl.u32 %v1965, 7
        %v1967 = vsub.s32 0, %v1966
        %v1968 = vrot.slane %v1963, %v1967
        %v1974 = vunpack.c.l.b16 %v1959
        %v1975 = vunpack.c.l.b16 %v1960
        %v1976 = vunpack.c.l.b16 %v1961
        %v1977 = vunpack.c.l.b16 %v1962
        %v1978 = vpack.c.b16 %v1975, %v1974
        %v1979 = vpack.c.b16 %v1977, %v1976
        %v1983 = vsel %vm1462, %v1958, 0
        %1985 = vmatprep.subr.bf16.mxu0 0
        %1986 = vmatpush1.bf16.msra.mxu0 %v1978
        %1987 = vmatprep.subr.bf16.mxu0 0
        %1988 = vmatpush1.bf16.msra.mxu0 %v1979
        %1989 = vmatprep.subr.bf16.mxu0 0
        %1990 = vmatpush1.bf16.msra.mxu0 0
        %1991 = vmatprep.subr.bf16.mxu0 0
        %1992 = vmatpush1.bf16.msra.mxu0 0
        %1993 = vmatprep.subr.bf16.mxu0 0
        %1994 = vmatpush1.bf16.msra.mxu0 0
        %1995 = vmatprep.subr.bf16.mxu0 0
        %1996 = vmatpush1.bf16.msra.mxu0 0
        %1997 = vmatprep.subr.bf16.mxu0 0
        %1998 = vmatpush1.bf16.msra.mxu0 0
        %1999 = vmatprep.subr.bf16.mxu0 0
        %2000 = vmatpush1.bf16.msra.mxu0 0
        %2001 = vmatprep.subr.bf16.mxu0 0
        %2002 = vmatpush1.bf16.msra.mxu0 0
        %2003 = vmatprep.subr.bf16.mxu0 0
        %2004 = vmatpush1.bf16.msra.mxu0 0
        %2005 = vmatprep.subr.bf16.mxu0 0
        %2006 = vmatpush1.bf16.msra.mxu0 0
        %2007 = vmatprep.subr.bf16.mxu0 0
        %2008 = vmatpush1.bf16.msra.mxu0 0
        %2009 = vmatprep.subr.bf16.mxu0 0
        %2010 = vmatpush1.bf16.msra.mxu0 0
        %2011 = vmatprep.subr.bf16.mxu0 0
        %2012 = vmatpush1.bf16.msra.mxu0 0
        %2013 = vmatprep.subr.bf16.mxu0 0
        %2014 = vmatpush1.bf16.msra.mxu0 0
        %2015 = vmatprep.subr.bf16.mxu0 0
        %2016 = vmatpush1.bf16.msra.mxu0 0
        %2017 = vmatprep.mubr.bf16.mxu0 0
        %2018 = vmatmul.mubr.bf16.gmra.mrb[0].mxu0 %v1983
        %v2019 = vpop.f32.mrb[0].mxu0
        %v2020 = vadd.f32 %v1968, %v2019
        %v2021 = vpop.f32.mrb[0].mxu0
        %v2022 = vpop.f32.mrb[0].mxu0
        %v2023 = vpop.f32.mrb[0].mxu0
        %2024 = vdwg.mxu0
        %v2025 = vadd.f32 %v1459, %v2020
        %v2026 = vld [vmem:[%s1205] sm:$0x1]
        %v2027 = vld [vmem:[%s1213] sm:$0x1]
        %v2028 = vsel %vm1462, %v2025, 0.0
        %2029 = vadd.xlane.f32.xlu0 %v2028
        %v2030 = vpop.xlane.xlu0 %2029
        %v2031 = vmul.f32 %v2030, %v1466
        %v2032 = vsub.f32 %v2025, %v2031
        %v2033 = vmul.f32 %v2032, %v2032
        %v2034 = vsel %vm1462, %v2033, 0.0
        %2035 = vadd.xlane.f32.xlu0 %v2034
        %v2036 = vpop.xlane.xlu0 %2035
        %v2037 = vmul.f32 %v2036, %v1473
        %v2038 = vrsqrt.pop %v2037
        %v2039 = vmul.f32 %v2037, %v2038
        %vm2040 = vcmp.eq.f32.partialorder %v2037, inf
        %v2041 = vsel %vm2040, %v2037, %v2039
        %vm2042 = vcmp.eq.f32.partialorder %v2037, 0.0
        %v2043 = vand.u32 %v2037, 2147483648
        %v2044 = vsel %vm2042, %v2043, %v2041
        %v2046 = vlaneseq
        %v2047 = vshrl.u32 %v2046, 7
        %v2048 = vsub.s32 0, %v2047
        %v2049 = vrot.slane %v2026, %v2048
        %v2051 = vmul.f32 %v2049, %v2032
        %v2052 = vadd.f32 %v2044, 1e-06
        %v2053 = vrcp.pop %v2052
        %v2054 = vmul.f32 %v2051, %v2053
        %v2056 = vlaneseq
        %v2057 = vshrl.u32 %v2056, 7
        %v2058 = vsub.s32 0, %v2057
        %v2059 = vrot.slane %v2027, %v2058
        %v2061 = vadd.f32 %v2054, %v2059
        %v2062 = vpack.c.bf16 %v2061, %v2061
        %v2063 = vld [vmem:[%s1222] sm:$0xf]
        %v2064 = vld [vmem:[%s1222 + $0x4] sm:$0xf]
        %v2065 = vld [vmem:[%s1222 + $0x8] sm:$0xf]
        %v2066 = vld [vmem:[%s1222 + $0xc] sm:$0xf]
        %v2067 = vld [vmem:[%s1230] sm:$0x1]
        %v2069 = vlaneseq
        %v2070 = vshrl.u32 %v2069, 7
        %v2071 = vsub.s32 0, %v2070
        %v2072 = vrot.slane %v2067, %v2071
        %v2078 = vunpack.c.l.b16 %v2063
        %v2079 = vunpack.c.l.b16 %v2064
        %v2080 = vunpack.c.l.b16 %v2065
        %v2081 = vunpack.c.l.b16 %v2066
        %v2082 = vpack.c.b16 %v2079, %v2078
        %v2083 = vpack.c.b16 %v2081, %v2080
        %v2087 = vsel %vm1462, %v2062, 0
        %2089 = vmatprep.subr.bf16.mxu0 0
        %2090 = vmatpush1.bf16.msra.mxu0 %v2082
        %2091 = vmatprep.subr.bf16.mxu0 0
        %2092 = vmatpush1.bf16.msra.mxu0 %v2083
        %2093 = vmatprep.subr.bf16.mxu0 0
        %2094 = vmatpush1.bf16.msra.mxu0 0
        %2095 = vmatprep.subr.bf16.mxu0 0
        %2096 = vmatpush1.bf16.msra.mxu0 0
        %2097 = vmatprep.subr.bf16.mxu0 0
        %2098 = vmatpush1.bf16.msra.mxu0 0
        %2099 = vmatprep.subr.bf16.mxu0 0
        %2100 = vmatpush1.bf16.msra.mxu0 0
        %2101 = vmatprep.subr.bf16.mxu0 0
        %2102 = vmatpush1.bf16.msra.mxu0 0
        %2103 = vmatprep.subr.bf16.mxu0 0
        %2104 = vmatpush1.bf16.msra.mxu0 0
        %2105 = vmatprep.subr.bf16.mxu0 0
        %2106 = vmatpush1.bf16.msra.mxu0 0
        %2107 = vmatprep.subr.bf16.mxu0 0
        %2108 = vmatpush1.bf16.msra.mxu0 0
        %2109 = vmatprep.subr.bf16.mxu0 0
        %2110 = vmatpush1.bf16.msra.mxu0 0
        %2111 = vmatprep.subr.bf16.mxu0 0
        %2112 = vmatpush1.bf16.msra.mxu0 0
        %2113 = vmatprep.subr.bf16.mxu0 0
        %2114 = vmatpush1.bf16.msra.mxu0 0
        %2115 = vmatprep.subr.bf16.mxu0 0
        %2116 = vmatpush1.bf16.msra.mxu0 0
        %2117 = vmatprep.subr.bf16.mxu0 0
        %2118 = vmatpush1.bf16.msra.mxu0 0
        %2119 = vmatprep.subr.bf16.mxu0 0
        %2120 = vmatpush1.bf16.msra.mxu0 0
        %2121 = vmatprep.mubr.bf16.mxu0 0
        %2122 = vmatmul.mubr.bf16.gmra.mrb[0].mxu0 %v2087
        %v2123 = vpop.f32.mrb[0].mxu0
        %v2124 = vadd.f32 %v2072, %v2123
        %v2125 = vpop.f32.mrb[0].mxu0
        %v2126 = vpop.f32.mrb[0].mxu0
        %v2127 = vpop.f32.mrb[0].mxu0
        %2128 = vdwg.mxu0
        %v2129 = vmul.f32 %v2124, 0.5
        %v2130 = vmul.f32 %v2124, 0.044715
        %v2131 = vmul.f32 %v2130, %v2124
        %v2132 = vmul.f32 %v2131, %v2124
        %v2133 = vadd.f32 %v2124, %v2132
        %v2134 = vmul.f32 %v2133, 0.7978846
        %v2135 = vtanh.pop %v2134
        %v2136 = vadd.f32 %v2135, 1.0
        %v2137 = vmul.f32 %v2129, %v2136
        %v2138 = vpack.c.bf16 %v2137, %v2137
        %v2139 = vld [vmem:[%s1239] sm:$0xf]
        %v2140 = vld [vmem:[%s1239 + $0x4] sm:$0xf]
        %v2141 = vld [vmem:[%s1239 + $0x8] sm:$0xf]
        %v2142 = vld [vmem:[%s1239 + $0xc] sm:$0xf]
        %v2143 = vld [vmem:[%s1239 + $0x10] sm:$0xf]
        %v2144 = vld [vmem:[%s1239 + $0x14] sm:$0xf]
        %v2145 = vld [vmem:[%s1239 + $0x18] sm:$0xf]
        %v2146 = vld [vmem:[%s1239 + $0x1c] sm:$0xf]
        %v2147 = vld [vmem:[%s1239 + $0x20] sm:$0xf]
        %v2148 = vld [vmem:[%s1239 + $0x24] sm:$0xf]
        %v2149 = vld [vmem:[%s1239 + $0x28] sm:$0xf]
        %v2150 = vld [vmem:[%s1239 + $0x2c] sm:$0xf]
        %v2151 = vld [vmem:[%s1239 + $0x30] sm:$0xf]
        %v2152 = vld [vmem:[%s1239 + $0x34] sm:$0xf]
        %v2153 = vld [vmem:[%s1239 + $0x38] sm:$0xf]
        %v2154 = vld [vmem:[%s1239 + $0x3c] sm:$0xf]
        %v2155 = vld [vmem:[%s1247] sm:$0x1]
        %v2157 = vlaneseq
        %v2158 = vshrl.u32 %v2157, 7
        %v2159 = vsub.s32 0, %v2158
        %v2160 = vrot.slane %v2155, %v2159
        %v2178 = vunpack.c.l.b16 %v2139
        %v2179 = vunpack.c.l.b16 %v2140
        %v2180 = vunpack.c.l.b16 %v2141
        %v2181 = vunpack.c.l.b16 %v2142
        %v2182 = vunpack.c.l.b16 %v2143
        %v2183 = vunpack.c.l.b16 %v2144
        %v2184 = vunpack.c.l.b16 %v2145
        %v2185 = vunpack.c.l.b16 %v2146
        %v2186 = vunpack.c.l.b16 %v2147
        %v2187 = vunpack.c.l.b16 %v2148
        %v2188 = vunpack.c.l.b16 %v2149
        %v2189 = vunpack.c.l.b16 %v2150
        %v2190 = vunpack.c.l.b16 %v2151
        %v2191 = vunpack.c.l.b16 %v2152
        %v2192 = vunpack.c.l.b16 %v2153
        %v2193 = vunpack.c.l.b16 %v2154
        %v2194 = vpack.c.b16 %v2179, %v2178
        %v2195 = vpack.c.b16 %v2181, %v2180
        %v2196 = vpack.c.b16 %v2183, %v2182
        %v2197 = vpack.c.b16 %v2185, %v2184
        %v2198 = vpack.c.b16 %v2187, %v2186
        %v2199 = vpack.c.b16 %v2189, %v2188
        %v2200 = vpack.c.b16 %v2191, %v2190
        %v2201 = vpack.c.b16 %v2193, %v2192
        %2210 = vmatprep.subr.bf16.mxu0 0
        %2211 = vmatpush1.bf16.msra.mxu0 %v2194
        %2212 = vmatprep.subr.bf16.mxu0 0
        %2213 = vmatpush1.bf16.msra.mxu0 %v2195
        %2214 = vmatprep.subr.bf16.mxu0 0
        %2215 = vmatpush1.bf16.msra.mxu0 %v2196
        %2216 = vmatprep.subr.bf16.mxu0 0
        %2217 = vmatpush1.bf16.msra.mxu0 %v2197
        %2218 = vmatprep.subr.bf16.mxu0 0
        %2219 = vmatpush1.bf16.msra.mxu0 %v2198
        %2220 = vmatprep.subr.bf16.mxu0 0
        %2221 = vmatpush1.bf16.msra.mxu0 %v2199
        %2222 = vmatprep.subr.bf16.mxu0 0
        %2223 = vmatpush1.bf16.msra.mxu0 %v2200
        %2224 = vmatprep.subr.bf16.mxu0 0
        %2225 = vmatpush1.bf16.msra.mxu0 %v2201
        %2226 = vmatprep.subr.bf16.mxu0 0
        %2227 = vmatpush1.bf16.msra.mxu0 0
        %2228 = vmatprep.subr.bf16.mxu0 0
        %2229 = vmatpush1.bf16.msra.mxu0 0
        %2230 = vmatprep.subr.bf16.mxu0 0
        %2231 = vmatpush1.bf16.msra.mxu0 0
        %2232 = vmatprep.subr.bf16.mxu0 0
        %2233 = vmatpush1.bf16.msra.mxu0 0
        %2234 = vmatprep.subr.bf16.mxu0 0
        %2235 = vmatpush1.bf16.msra.mxu0 0
        %2236 = vmatprep.subr.bf16.mxu0 0
        %2237 = vmatpush1.bf16.msra.mxu0 0
        %2238 = vmatprep.subr.bf16.mxu0 0
        %2239 = vmatpush1.bf16.msra.mxu0 0
        %2240 = vmatprep.subr.bf16.mxu0 0
        %2241 = vmatpush1.bf16.msra.mxu0 0
        %2242 = vmatprep.mubr.bf16.mxu0 0
        %2243 = vmatmul.mubr.bf16.gmra.mrb[0].mxu0 %v2138
        %v2244 = vpop.f32.mrb[0].mxu0
        %v2245 = vadd.f32 %v2160, %v2244
        %v2246 = vpop.f32.mrb[0].mxu0
        %v2247 = vpop.f32.mrb[0].mxu0
        %v2248 = vpop.f32.mrb[0].mxu0
        %2249 = vdwg.mxu0
        %v2250 = vadd.f32 %v2025, %v2245
        %2251 = vst.msk [vmem:[#allocation2] sm:$0xff] %vm1462, %v2250
        %p2252 = scmp.eq.s32.totalorder %s74, 1
        // Predicated region
        $region209: #{tvtsbert_prediction_forward.1} parent=111 // pred_check
          %p2253 = pneg %p2252
        $region210: #{tvtsbert_prediction_forward.1} parent=111 // pred_check_branch
          %2255 = sbr.rel (%p2253) target = $region212
        $region211: #{tvtsbert_prediction_forward.1} parent=111 // pred_region
          %v2256 = vpack.c.bf16 %v2250, %v2250
          %v2257 = vld [vmem:[#allocation37] sm:$0xf]
          %v2258 = vld [vmem:[#allocation37 + $0x4] sm:$0xf]
          %v2259 = vld [vmem:[#allocation37 + $0x8] sm:$0xf]
          %v2260 = vld [vmem:[#allocation37 + $0xc] sm:$0xf]
          %v2261 = vld [vmem:[#allocation39] sm:$0x1]
          %v2263 = vlaneseq
          %v2264 = vshrl.u32 %v2263, 7
          %v2265 = vsub.s32 0, %v2264
          %v2266 = vrot.slane %v2261, %v2265
          %v2272 = vunpack.c.l.b16 %v2257
          %v2273 = vunpack.c.l.b16 %v2258
          %v2274 = vunpack.c.l.b16 %v2259
          %v2275 = vunpack.c.l.b16 %v2260
          %v2276 = vpack.c.b16 %v2273, %v2272
          %v2277 = vpack.c.b16 %v2275, %v2274
          %v2281 = vsel %vm1462, %v2256, 0
          %2283 = vmatprep.subr.bf16.mxu0 0
          %2284 = vmatpush1.bf16.msra.mxu0 %v2276
          %2285 = vmatprep.subr.bf16.mxu0 0
          %2286 = vmatpush1.bf16.msra.mxu0 %v2277
          %2287 = vmatprep.subr.bf16.mxu0 0
          %2288 = vmatpush1.bf16.msra.mxu0 0
          %2289 = vmatprep.subr.bf16.mxu0 0
          %2290 = vmatpush1.bf16.msra.mxu0 0
          %2291 = vmatprep.subr.bf16.mxu0 0
          %2292 = vmatpush1.bf16.msra.mxu0 0
          %2293 = vmatprep.subr.bf16.mxu0 0
          %2294 = vmatpush1.bf16.msra.mxu0 0
          %2295 = vmatprep.subr.bf16.mxu0 0
          %2296 = vmatpush1.bf16.msra.mxu0 0
          %2297 = vmatprep.subr.bf16.mxu0 0
          %2298 = vmatpush1.bf16.msra.mxu0 0
          %2299 = vmatprep.subr.bf16.mxu0 0
          %2300 = vmatpush1.bf16.msra.mxu0 0
          %2301 = vmatprep.subr.bf16.mxu0 0
          %2302 = vmatpush1.bf16.msra.mxu0 0
          %2303 = vmatprep.subr.bf16.mxu0 0
          %2304 = vmatpush1.bf16.msra.mxu0 0
          %2305 = vmatprep.subr.bf16.mxu0 0
          %2306 = vmatpush1.bf16.msra.mxu0 0
          %2307 = vmatprep.subr.bf16.mxu0 0
          %2308 = vmatpush1.bf16.msra.mxu0 0
          %2309 = vmatprep.subr.bf16.mxu0 0
          %2310 = vmatpush1.bf16.msra.mxu0 0
          %2311 = vmatprep.subr.bf16.mxu0 0
          %2312 = vmatpush1.bf16.msra.mxu0 0
          %2313 = vmatprep.subr.bf16.mxu0 0
          %2314 = vmatpush1.bf16.msra.mxu0 0
          %2315 = vmatprep.mubr.bf16.mxu0 0
          %2316 = vmatmul.mubr.bf16.gmra.mrb[0].mxu0 %v2281
          %v2317 = vpop.f32.mrb[0].mxu0
          %v2318 = vadd.f32 %v2266, %v2317
          %v2319 = vpop.f32.mrb[0].mxu0
          %v2320 = vpop.f32.mrb[0].mxu0
          %v2321 = vpop.f32.mrb[0].mxu0
          %2322 = vdwg.mxu0
          %vm2323 = vcmask 31744
          %2324 = vst.msk [vmem:[%s1391] sm:$0xff] %vm2323, %v2318
        $region212: #{tvtsbert_prediction_forward.1} parent=111 // pred_fallthru
          _
        %s2325 = sand.u32 %s662, 1
        %s2326 = scalar_lea.sflag [#allocation6], %s2325
        %s2327 = sand.u32 %s662, 1
        %s2328 = smul.addr %s2327, 8
        %s2329 = scalar_lea.vmem [#allocation40], %s2328
        // Predicated region
        $region213: #{tvtsbert_prediction_forward.1} parent=111 // pred_check
          %p2330 = pneg %p672
        $region214: #{tvtsbert_prediction_forward.1} parent=111 // pred_check_branch
          %2332 = sbr.rel (%p2330) target = $region216
        $region215: #{tvtsbert_prediction_forward.1} parent=111 // pred_region
          %s2334 = ssub.s32 128, 128
          %2335 = vsyncadd %s2326, %s2334
          %s2336 = smul.addr %s73, 128
          %s2337 = scalar_lea.hbm %s23, %s2336
          %s2339 = sshll.u32 %s2329, 4
          %s2340 = int_to_ptr.vmem [resolvable:$true] %s2339
          %2342 = dma.vmem_to_hbm [thread:$0]  %s2340, 128, %s2337, %s2326
        $region216: #{tvtsbert_prediction_forward.1} parent=111 // pred_fallthru
          _
      $region112: #{tvtsbert_prediction_forward.1} parent=5 // pred_fallthru
        _
      %p2343 = scmp.le.s32.totalorder 2, %s64
      // Predicated region
      $region217: #{tvtsbert_prediction_forward.1} parent=5 // pred_check
        %p2344 = pneg %p2343
      $region218: #{tvtsbert_prediction_forward.1} parent=5 // pred_check_branch
        %2346 = sbr.rel (%p2344) target = $region220
      $region219: #{tvtsbert_prediction_forward.1} parent=5 // pred_region
        %s2347 = ssub.s32 %s64, 2
        // Predicated region
        $region221: #{tvtsbert_prediction_forward.1} parent=219 // pred_check
          %p2348 = pneg %p678
        $region222: #{tvtsbert_prediction_forward.1} parent=219 // pred_check_branch
          %2350 = sbr.rel (%p2348) target = $region224
        $region223: #{tvtsbert_prediction_forward.1} parent=219 // pred_region
          %s2351 = sand.u32 %s663, 1
          %s2352 = scalar_lea.sflag [#allocation6], %s2351
          %s2353 = sand.u32 %s663, 1
          %s2354 = smul.addr %s2353, 8
          %s2355 = scalar_lea.vmem [#allocation40], %s2354
          %2356 = dma.done %s2352, 128
        $region224: #{tvtsbert_prediction_forward.1} parent=219 // pred_fallthru
          _
      $region220: #{tvtsbert_prediction_forward.1} parent=5 // pred_fallthru
        _
    $region6: #{tvtsbert_prediction_forward.1} parent=1 // loop_footer
      %s68 = sadd.s32 1, %s64
    $region7: #{tvtsbert_prediction_forward.1} parent=1 // loop_footer_branch
      %63 = sbr.rel target = $region3
    $region8: #{tvtsbert_prediction_forward.1} parent=1 // loop_exit
      _
    %2357 = vsyncpa [#allocation5], 1
    %s2358 = scalar_lea.sflag [#allocation5], 1
    %2359 = vsyncpa %s2358, 1
    %2360 = vsyncpa [#allocation8], 1
    %s2361 = scalar_lea.sflag [#allocation8], 1
    %2362 = vsyncpa %s2361, 1
    %2363 = vsyncpa [#allocation11], 1
    %2364 = vsyncpa [#allocation14], 1
    %s2365 = scalar_lea.sflag [#allocation14], 1
    %2366 = vsyncpa %s2365, 1
    %2367 = vsyncpa [#allocation17], 1
    %s2368 = scalar_lea.sflag [#allocation17], 1
    %2369 = vsyncpa %s2368, 1
    %2370 = vsyncpa [#allocation20], 1
    %s2371 = scalar_lea.sflag [#allocation20], 1
    %2372 = vsyncpa %s2371, 1
    %2373 = vsyncpa [#allocation23], 1
    %s2374 = scalar_lea.sflag [#allocation23], 1
    %2375 = vsyncpa %s2374, 1
    %2376 = vsyncpa [#allocation26], 1
    %s2377 = scalar_lea.sflag [#allocation26], 1
    %2378 = vsyncpa %s2377, 1
    %2379 = vsyncpa [#allocation29], 1
    %s2380 = scalar_lea.sflag [#allocation29], 1
    %2381 = vsyncpa %s2380, 1
    %2382 = vsyncpa [#allocation32], 1
    %s2383 = scalar_lea.sflag [#allocation32], 1
    %2384 = vsyncpa %s2383, 1
    %2385 = vsyncpa [#allocation35], 1
    %s2386 = scalar_lea.sflag [#allocation35], 1
    %2387 = vsyncpa %s2386, 1
    %2388 = vsyncpa [#allocation38], 1
    %2389 = vsyncpa [#allocation6], 1
    %s2390 = scalar_lea.sflag [#allocation6], 1
    %2391 = vsyncpa %s2390, 1

</llo_original>
